<compile_context>
chip_gen: v7x
topology: tpu7x:2x2x1
jax: 0.10.0
libtpu: 0.0.40
codegen_flags: <defaults>
</compile_context>

<pallas_src>
import numpy as np
import jax
import jax.numpy as jnp
from jax.experimental import pallas as pl
from jax.experimental.pallas import tpu as pltpu

LEAKY_SLOPE = 0.01   # nn.LeakyReLU() default
BN_EPS = 1e-5        # nn.BatchNorm1d default
L_IN = 100           # required input length so the conv output has 64 features

# (in_ch, out_ch, kernel_size, has_batchnorm)
CONV_CFG = [
    (2, 8, 13, True),
    (8, 16, 9, True),
    (16, 32, 5, True),
    (32, 64, 5, True),
    (64, 32, 5, True),
    (32, 32, 5, True),
    (32, 1, 1, False),
]
N_CONV = len(CONV_CFG)

# im2col contraction width per layer (real channels only; no zero padding).
KC = [k * cin for (cin, _cout, k, _bn) in CONV_CFG]        # [26,72,80,160,320,160,32]

# Per-layer row offset inside the packed weight buffer (Cout padded to x8 so
# every in-kernel sublane slice starts on an 8-aligned row).
ROW_OFF = []
_off = 0
for (_, _cout, _, _) in CONV_CFG:
    ROW_OFF.append(_off)
    _off += max(8, ((_cout + 7) // 8) * 8)
N_ROWS = _off                                              # 192
MAX_KC = max(KC)                                           # 320


# -------------------------------- the kernel --------------------------------

def mfe_prior_kernel(m_ref, w_ref, p_ref, h_ref, out_ref):
    """Whole forward pass, single invocation (grid=()), everything in VMEM.

    m_ref  : (2, B*100)  input `m` with the batch folded into lanes
    w_ref  : (192, 320)  packed im2col conv weights; layer li lives at rows
                         ROW_OFF[li]:ROW_OFF[li]+Cout, cols 0:K*Cin
    p_ref  : (192, 4)    per-channel params, lane-0 aligned:
                         col 0 = BN gamma, col 1 = BN beta, col 2 = conv bias
                         (bias only used by the final, non-BN layer)
    h_ref  : (72, 2z)    rows 0..63 = [mu_w | sigma_w], row 64 = [mu_b | sigma_b]
    out_ref: (B, 2z)     [mu | softplus(sigma_pre)]
    """
    B = out_ref.shape[0]

    # Activations stay (C, B*L): channels on sublanes, batch*length on lanes.
    h = m_ref[...].astype(jnp.float32)
    L = h.shape[1] // B

    for li in range(N_CONV):
        cin, cout, K, has_bn = CONV_CFG[li]
        kc = KC[li]
        r0 = ROW_OFF[li]
        lout = L - K + 1

        # Lane-folded im2col panel: (K*Cin, B*Lout)
        #   row  k*Cin + c , column  b*Lout + j   <-   h[c, b*L + k + j]
        if K == 1:
            xcol = h                                   # Lout == L, identity
        else:
            xcol = jnp.concatenate(
                [jnp.concatenate(
                    [h[:, b * L + k: b * L + k + lout] for k in range(K)],
                    axis=0)
                 for b in range(B)],
                axis=1)

        w2t = w_ref[r0:r0 + cout, 0:kc]                # (Cout, K*Cin)
        # ONE MXU matmul per layer; output layout (Cout, B*Lout) feeds the
        # next layer directly (no transposes, no per-batch stack).
        y = jnp.dot(w2t, xcol, preferred_element_type=jnp.float32)

        if has_bn:
            # Training-mode BatchNorm1d: single-pass stats over (batch, length)
            # == the lane axis.  Conv bias intentionally skipped: mean
            # subtraction cancels it exactly (restore it for eval-mode BN).
            gamma = p_ref[r0:r0 + cout, 0:1]           # (Cout, 1)
            beta = p_ref[r0:r0 + cout, 1:2]            # (Cout, 1)
            inv_n = 1.0 / float(B * lout)
            mean = jnp.sum(y, axis=1, keepdims=True) * inv_n
            ex2 = jnp.sum(y * y, axis=1, keepdims=True) * inv_n
            var = jnp.maximum(ex2 - mean * mean, 0.0)
            scale = gamma * jax.lax.rsqrt(var + BN_EPS)
            y = y * scale + (beta - mean * scale)
        else:
            bias = p_ref[r0:r0 + cout, 2:3]            # (Cout, 1)
            y = y + bias

        h = jnp.where(y > 0, y, LEAKY_SLOPE * y)       # LeakyReLU
        L = lout

    # h: (1, B*64)  ==  conv(m)[:, 0] with batch in lanes  ->  (B, 64)
    hf = jnp.concatenate([h[:, b * L:(b + 1) * L] for b in range(B)], axis=0)

    wh = h_ref[0:64, :]                                # (64, 2z)  [mu_w|sigma_w]
    bh = h_ref[64:65, :]                               # (1, 2z)
    o = jnp.dot(hf, wh, preferred_element_type=jnp.float32) + bh   # (B, 2z)

    z = o.shape[1] // 2
    lane = jax.lax.broadcasted_iota(jnp.int32, o.shape, 1)
    sp = jnp.maximum(o, 0.0) + jnp.log(1.0 + jnp.exp(-jnp.abs(o)))  # softplus
    out_ref[...] = jnp.where(lane < z, o, sp)


# ---------------------------- parameter packing ------------------------------

def pack_params(params):
    """Pack all module parameters into three flat fp32 buffers (host, once)."""
    z_dim = int(np.asarray(params["mu_b"]).shape[0])

    wbuf = np.zeros((N_ROWS, MAX_KC), np.float32)
    pbuf = np.zeros((N_ROWS, 4), np.float32)
    bn_idx = 0
    for li, (cin, cout, K, has_bn) in enumerate(CONV_CFG):
        w = np.asarray(params["conv_w"][li], np.float32)       # (Cout, Cin, K)
        # (Cout, K, Cin) -> (Cout, K*Cin): column index = k*Cin + c, matching
        # the in-kernel im2col row ordering.  No channel zero-padding.
        w2t = np.transpose(w, (0, 2, 1)).reshape(cout, K * cin)
        r0 = ROW_OFF[li]
        wbuf[r0:r0 + cout, :K * cin] = w2t
        if has_bn:
            pbuf[r0:r0 + cout, 0] = np.asarray(params["bn_gamma"][bn_idx], np.float32)
            pbuf[r0:r0 + cout, 1] = np.asarray(params["bn_beta"][bn_idx], np.float32)
            bn_idx += 1
            # conv bias dropped on purpose: cancelled by BN mean subtraction.
        else:
            pbuf[r0:r0 + cout, 2] = np.asarray(params["conv_b"][li], np.float32)

    hbuf = np.zeros((72, 2 * z_dim), np.float32)
    hbuf[0:64, :z_dim] = np.asarray(params["mu_w"], np.float32)
    hbuf[0:64, z_dim:] = np.asarray(params["sigma_w"], np.float32)
    hbuf[64, :z_dim] = np.asarray(params["mu_b"], np.float32)
    hbuf[64, z_dim:] = np.asarray(params["sigma_b"], np.float32)

    return {"wbuf": jnp.asarray(wbuf), "pbuf": jnp.asarray(pbuf),
            "hbuf": jnp.asarray(hbuf), "z_dim": z_dim}


# ------------------------------- the wrapper --------------------------------

def _cost_estimate(B, z_dim):
    flops = 0
    L = L_IN
    for (cin, cout, K, _bn) in CONV_CFG:
        lout = L - K + 1
        flops += 2 * cout * K * cin * B * lout
        L = lout
    flops += 2 * B * 64 * 2 * z_dim
    transcendentals = B * 2 * z_dim + sum(c for (_, c, _, bn) in CONV_CFG if bn)
    bytes_accessed = 4 * (2 * B * L_IN + N_ROWS * MAX_KC + N_ROWS * 4
                          + 72 * 2 * z_dim + B * 2 * z_dim)
    return pl.CostEstimate(flops=flops, transcendentals=transcendentals,
                           bytes_accessed=bytes_accessed)


def mfe_conv_prior_forward(x, y, m, packed):
    """m: (B, 2, 100) float32 in PyTorch NCW layout.  x, y are unused."""
    del x, y  # unused by the PyTorch forward as well
    assert m.ndim == 3 and m.shape[1] == 2 and m.shape[2] == L_IN, (
        "mfe_conv_prior requires m of shape (B, 2, 100) so the conv output "
        "has 64 features for the Linear heads")
    B = m.shape[0]
    z_dim = packed["z_dim"]

    # Layout plumbing only (endorsed host-side prep): fold batch into lanes so
    # the kernel can run one lane-folded matmul per conv layer.
    m2d = jnp.transpose(m.astype(jnp.float32), (1, 0, 2)).reshape(2, B * L_IN)

    vmem = pl.BlockSpec(memory_space=pltpu.MemorySpace.VMEM)
    out = pl.pallas_call(
        mfe_prior_kernel,
        out_shape=jax.ShapeDtypeStruct((B, 2 * z_dim), jnp.float32),
        in_specs=[vmem, vmem, vmem, vmem],
        out_specs=vmem,
        cost_estimate=_cost_estimate(B, z_dim),
    )(m2d, packed["wbuf"], packed["pbuf"], packed["hbuf"])

    return out[:, :z_dim], out[:, z_dim:]


# ---------------------------- parameter init --------------------------------

def init_params(key, z_dim):
    """PyTorch-style init (uniform +-1/sqrt(fan_in); BN gamma=1, beta=0).
    Conv weights stored PyTorch-style (Cout, Cin, K); Linear weights stored
    pre-transposed as (64, z)."""
    params = {"conv_w": [], "conv_b": [], "bn_gamma": [], "bn_beta": []}
    for (cin, cout, k, has_bn) in CONV_CFG:
        key, k1, k2 = jax.random.split(key, 3)
        bound = 1.0 / float(np.sqrt(cin * k))
        params["conv_w"].append(
            jax.random.uniform(k1, (cout, cin, k), jnp.float32, -bound, bound))
        params["conv_b"].append(
            jax.random.uniform(k2, (cout,), jnp.float32, -bound, bound))
        if has_bn:
            params["bn_gamma"].append(jnp.ones((cout,), jnp.float32))
            params["bn_beta"].append(jnp.zeros((cout,), jnp.float32))
    key, k1, k2, k3, k4 = jax.random.split(key, 5)
    bound = 1.0 / 8.0  # 1/sqrt(64)
    params["mu_w"] = jax.random.uniform(k1, (64, z_dim), jnp.float32, -bound, bound)
    params["mu_b"] = jax.random.uniform(k2, (z_dim,), jnp.float32, -bound, bound)
    params["sigma_w"] = jax.random.uniform(k3, (64, z_dim), jnp.float32, -bound, bound)
    params["sigma_b"] = jax.random.uniform(k4, (z_dim,), jnp.float32, -bound, bound)
    return params


# ------------------------- pure-JAX reference check --------------------------

def reference_forward(m, params):
    h = m.astype(jnp.float32)            # (B, C, L)
    bn_idx = 0
    for li, (cin, cout, K, has_bn) in enumerate(CONV_CFG):
        w = params["conv_w"][li]         # (Cout, Cin, K)
        lout = h.shape[2] - K + 1
        acc = sum(jnp.einsum("bcl,oc->bol", h[:, :, k:k + lout], w[:, :, k])
                  for k in range(K))
        h = acc + params["conv_b"][li][None, :, None]
        if has_bn:
            mean = jnp.mean(h, axis=(0, 2), keepdims=True)
            var = jnp.mean((h - mean) ** 2, axis=(0, 2), keepdims=True)
            h = (h - mean) / jnp.sqrt(var + BN_EPS)
            h = (h * params["bn_gamma"][bn_idx][None, :, None]
                 + params["bn_beta"][bn_idx][None, :, None])
            bn_idx += 1
        h = jnp.where(h > 0, h, LEAKY_SLOPE * h)
    hf = h[:, 0, :]
    mu = hf @ params["mu_w"] + params["mu_b"]
    sigma = jax.nn.softplus(hf @ params["sigma_w"] + params["sigma_b"])
    return mu, sigma


if __name__ == "__main__":
    key = jax.random.PRNGKey(0)
    z_dim = 8
    B, L = 2, 100  # L must be 100 so the conv output has 64 features

    pkey, mkey, xkey, ykey = jax.random.split(key, 4)
    params = init_params(pkey, z_dim)
    packed = pack_params(params)

    m = jax.random.normal(mkey, (B, 2, L), jnp.float32)
    x = jax.random.normal(xkey, (B, 64), jnp.float32)     # unused by forward
    y = jax.random.normal(ykey, (B, z_dim), jnp.float32)  # unused by forward

    mu, sigma = mfe_conv_prior_forward(x, y, m, packed)
    jax.block_until_ready((mu, sigma))

    mu_ref, sigma_ref = reference_forward(m, params)
    assert mu.shape == (B, z_dim) and sigma.shape == (B, z_dim)
    assert jnp.allclose(mu, mu_ref, atol=1e-3, rtol=1e-3)
    assert jnp.allclose(sigma, sigma_ref, atol=1e-3, rtol=1e-3)
    assert bool(jnp.all(sigma >= 0.0))

    print("KERNEL_OK")
</pallas_src>

<mosaic_0001>
module attributes {stable_mosaic.version = 11 : i64} {
  func.func @mfe_prior_kernel(%arg0: memref<2x200xf32, #tpu.memory_space<vmem>>, %arg1: memref<192x320xf32, #tpu.memory_space<vmem>>, %arg2: memref<192x4xf32, #tpu.memory_space<vmem>>, %arg3: memref<72x16xf32, #tpu.memory_space<vmem>>, %arg4: memref<2x16xf32, #tpu.memory_space<vmem>>) attributes {dimension_semantics = [], scalar_prefetch = 0 : i64, scratch_operands = 0 : i64, tpu.core_type = #tpu.core_type<tc>} {
    %c0 = arith.constant 0 : index
    %c0_0 = arith.constant 0 : index
    %0 = vector.load %arg0[%c0, %c0_0] : memref<2x200xf32, #tpu.memory_space<vmem>>, vector<2x200xf32>
    %1 = vector.extract_strided_slice %0 {offsets = [0, 0], sizes = [2, 88], strides = [1, 1]} : vector<2x200xf32> to vector<2x88xf32>
    %2 = vector.extract_strided_slice %0 {offsets = [0, 1], sizes = [2, 88], strides = [1, 1]} : vector<2x200xf32> to vector<2x88xf32>
    %3 = vector.extract_strided_slice %0 {offsets = [0, 2], sizes = [2, 88], strides = [1, 1]} : vector<2x200xf32> to vector<2x88xf32>
    %4 = vector.extract_strided_slice %0 {offsets = [0, 3], sizes = [2, 88], strides = [1, 1]} : vector<2x200xf32> to vector<2x88xf32>
    %5 = vector.extract_strided_slice %0 {offsets = [0, 4], sizes = [2, 88], strides = [1, 1]} : vector<2x200xf32> to vector<2x88xf32>
    %6 = vector.extract_strided_slice %0 {offsets = [0, 5], sizes = [2, 88], strides = [1, 1]} : vector<2x200xf32> to vector<2x88xf32>
    %7 = vector.extract_strided_slice %0 {offsets = [0, 6], sizes = [2, 88], strides = [1, 1]} : vector<2x200xf32> to vector<2x88xf32>
    %8 = vector.extract_strided_slice %0 {offsets = [0, 7], sizes = [2, 88], strides = [1, 1]} : vector<2x200xf32> to vector<2x88xf32>
    %9 = vector.extract_strided_slice %0 {offsets = [0, 8], sizes = [2, 88], strides = [1, 1]} : vector<2x200xf32> to vector<2x88xf32>
    %10 = vector.extract_strided_slice %0 {offsets = [0, 9], sizes = [2, 88], strides = [1, 1]} : vector<2x200xf32> to vector<2x88xf32>
    %11 = vector.extract_strided_slice %0 {offsets = [0, 10], sizes = [2, 88], strides = [1, 1]} : vector<2x200xf32> to vector<2x88xf32>
    %12 = vector.extract_strided_slice %0 {offsets = [0, 11], sizes = [2, 88], strides = [1, 1]} : vector<2x200xf32> to vector<2x88xf32>
    %13 = vector.extract_strided_slice %0 {offsets = [0, 12], sizes = [2, 88], strides = [1, 1]} : vector<2x200xf32> to vector<2x88xf32>
    %14 = tpu.concatenate %1, %2, %3, %4, %5, %6, %7, %8, %9, %10, %11, %12, %13 in 0 : vector<2x88xf32>, vector<2x88xf32>, vector<2x88xf32>, vector<2x88xf32>, vector<2x88xf32>, vector<2x88xf32>, vector<2x88xf32>, vector<2x88xf32>, vector<2x88xf32>, vector<2x88xf32>, vector<2x88xf32>, vector<2x88xf32>, vector<2x88xf32> -> vector<26x88xf32>
    %15 = vector.extract_strided_slice %0 {offsets = [0, 100], sizes = [2, 88], strides = [1, 1]} : vector<2x200xf32> to vector<2x88xf32>
    %16 = vector.extract_strided_slice %0 {offsets = [0, 101], sizes = [2, 88], strides = [1, 1]} : vector<2x200xf32> to vector<2x88xf32>
    %17 = vector.extract_strided_slice %0 {offsets = [0, 102], sizes = [2, 88], strides = [1, 1]} : vector<2x200xf32> to vector<2x88xf32>
    %18 = vector.extract_strided_slice %0 {offsets = [0, 103], sizes = [2, 88], strides = [1, 1]} : vector<2x200xf32> to vector<2x88xf32>
    %19 = vector.extract_strided_slice %0 {offsets = [0, 104], sizes = [2, 88], strides = [1, 1]} : vector<2x200xf32> to vector<2x88xf32>
    %20 = vector.extract_strided_slice %0 {offsets = [0, 105], sizes = [2, 88], strides = [1, 1]} : vector<2x200xf32> to vector<2x88xf32>
    %21 = vector.extract_strided_slice %0 {offsets = [0, 106], sizes = [2, 88], strides = [1, 1]} : vector<2x200xf32> to vector<2x88xf32>
    %22 = vector.extract_strided_slice %0 {offsets = [0, 107], sizes = [2, 88], strides = [1, 1]} : vector<2x200xf32> to vector<2x88xf32>
    %23 = vector.extract_strided_slice %0 {offsets = [0, 108], sizes = [2, 88], strides = [1, 1]} : vector<2x200xf32> to vector<2x88xf32>
    %24 = vector.extract_strided_slice %0 {offsets = [0, 109], sizes = [2, 88], strides = [1, 1]} : vector<2x200xf32> to vector<2x88xf32>
    %25 = vector.extract_strided_slice %0 {offsets = [0, 110], sizes = [2, 88], strides = [1, 1]} : vector<2x200xf32> to vector<2x88xf32>
    %26 = vector.extract_strided_slice %0 {offsets = [0, 111], sizes = [2, 88], strides = [1, 1]} : vector<2x200xf32> to vector<2x88xf32>
    %27 = vector.extract_strided_slice %0 {offsets = [0, 112], sizes = [2, 88], strides = [1, 1]} : vector<2x200xf32> to vector<2x88xf32>
    %28 = tpu.concatenate %15, %16, %17, %18, %19, %20, %21, %22, %23, %24, %25, %26, %27 in 0 : vector<2x88xf32>, vector<2x88xf32>, vector<2x88xf32>, vector<2x88xf32>, vector<2x88xf32>, vector<2x88xf32>, vector<2x88xf32>, vector<2x88xf32>, vector<2x88xf32>, vector<2x88xf32>, vector<2x88xf32>, vector<2x88xf32>, vector<2x88xf32> -> vector<26x88xf32>
    %29 = tpu.concatenate %14, %28 in 1 : vector<26x88xf32>, vector<26x88xf32> -> vector<26x176xf32>
    %c0_1 = arith.constant 0 : index
    %c0_2 = arith.constant 0 : index
    %30 = vector.load %arg1[%c0_1, %c0_2] : memref<192x320xf32, #tpu.memory_space<vmem>>, vector<8x26xf32>
    %cst = arith.constant dense<0.000000e+00> : vector<8x176xf32>
    %31 = tpu.matmul %30, %29, %cst {dimension_numbers = #tpu.dot_dimension_numbers<[1], [0], [0], [1], [0, 0, 1, 1], [], []>} : vector<8x26xf32>, vector<26x176xf32>, vector<8x176xf32> -> vector<8x176xf32>
    %c0_3 = arith.constant 0 : index
    %c0_4 = arith.constant 0 : index
    %32 = vector.load %arg2[%c0_3, %c0_4] : memref<192x4xf32, #tpu.memory_space<vmem>>, vector<8x1xf32>
    %c0_5 = arith.constant 0 : index
    %c1 = arith.constant 1 : index
    %33 = vector.load %arg2[%c0_5, %c1] : memref<192x4xf32, #tpu.memory_space<vmem>>, vector<8x1xf32>
    %cst_6 = arith.constant dense<0.000000e+00> : vector<8xf32>
    %34 = vector.multi_reduction <add>, %31, %cst_6 [1] : vector<8x176xf32> to vector<8xf32>
    %35 = vector.shape_cast %34 : vector<8xf32> to vector<8x1xf32>
    %cst_7 = arith.constant 0.00568181835 : f32
    %36 = vector.broadcast %cst_7 : f32 to vector<8x1xf32>
    %37 = arith.mulf %35, %36 : vector<8x1xf32>
    %38 = arith.mulf %31, %31 : vector<8x176xf32>
    %cst_8 = arith.constant dense<0.000000e+00> : vector<8xf32>
    %39 = vector.multi_reduction <add>, %38, %cst_8 [1] : vector<8x176xf32> to vector<8xf32>
    %40 = vector.shape_cast %39 : vector<8xf32> to vector<8x1xf32>
    %cst_9 = arith.constant 0.00568181835 : f32
    %41 = vector.broadcast %cst_9 : f32 to vector<8x1xf32>
    %42 = arith.mulf %40, %41 : vector<8x1xf32>
    %43 = arith.mulf %37, %37 : vector<8x1xf32>
    %44 = arith.subf %42, %43 : vector<8x1xf32>
    %cst_10 = arith.constant 0.000000e+00 : f32
    %45 = vector.broadcast %cst_10 : f32 to vector<8x1xf32>
    %46 = arith.maximumf %44, %45 : vector<8x1xf32>
    %cst_11 = arith.constant 9.99999974E-6 : f32
    %47 = vector.broadcast %cst_11 : f32 to vector<8x1xf32>
    %48 = arith.addf %46, %47 : vector<8x1xf32>
    %49 = math.rsqrt %48 : vector<8x1xf32>
    %50 = arith.mulf %32, %49 : vector<8x1xf32>
    %51 = vector.broadcast %50 : vector<8x1xf32> to vector<8x176xf32>
    %52 = arith.mulf %31, %51 : vector<8x176xf32>
    %53 = arith.mulf %37, %50 : vector<8x1xf32>
    %54 = arith.subf %33, %53 : vector<8x1xf32>
    %55 = vector.broadcast %54 : vector<8x1xf32> to vector<8x176xf32>
    %56 = arith.addf %52, %55 : vector<8x176xf32>
    %cst_12 = arith.constant 0.000000e+00 : f32
    %57 = vector.broadcast %cst_12 : f32 to vector<8x176xf32>
    %58 = arith.cmpf ogt, %56, %57 : vector<8x176xf32>
    %cst_13 = arith.constant 0.00999999977 : f32
    %59 = vector.broadcast %cst_13 : f32 to vector<8x176xf32>
    %60 = arith.mulf %59, %56 : vector<8x176xf32>
    %61 = arith.select %58, %56, %60 : vector<8x176xi1>, vector<8x176xf32>
    %62 = vector.extract_strided_slice %61 {offsets = [0, 0], sizes = [8, 80], strides = [1, 1]} : vector<8x176xf32> to vector<8x80xf32>
    %63 = vector.extract_strided_slice %61 {offsets = [0, 1], sizes = [8, 80], strides = [1, 1]} : vector<8x176xf32> to vector<8x80xf32>
    %64 = vector.extract_strided_slice %61 {offsets = [0, 2], sizes = [8, 80], strides = [1, 1]} : vector<8x176xf32> to vector<8x80xf32>
    %65 = vector.extract_strided_slice %61 {offsets = [0, 3], sizes = [8, 80], strides = [1, 1]} : vector<8x176xf32> to vector<8x80xf32>
    %66 = vector.extract_strided_slice %61 {offsets = [0, 4], sizes = [8, 80], strides = [1, 1]} : vector<8x176xf32> to vector<8x80xf32>
    %67 = vector.extract_strided_slice %61 {offsets = [0, 5], sizes = [8, 80], strides = [1, 1]} : vector<8x176xf32> to vector<8x80xf32>
    %68 = vector.extract_strided_slice %61 {offsets = [0, 6], sizes = [8, 80], strides = [1, 1]} : vector<8x176xf32> to vector<8x80xf32>
    %69 = vector.extract_strided_slice %61 {offsets = [0, 7], sizes = [8, 80], strides = [1, 1]} : vector<8x176xf32> to vector<8x80xf32>
    %70 = vector.extract_strided_slice %61 {offsets = [0, 8], sizes = [8, 80], strides = [1, 1]} : vector<8x176xf32> to vector<8x80xf32>
    %71 = tpu.concatenate %62, %63, %64, %65, %66, %67, %68, %69, %70 in 0 : vector<8x80xf32>, vector<8x80xf32>, vector<8x80xf32>, vector<8x80xf32>, vector<8x80xf32>, vector<8x80xf32>, vector<8x80xf32>, vector<8x80xf32>, vector<8x80xf32> -> vector<72x80xf32>
    %72 = vector.extract_strided_slice %61 {offsets = [0, 88], sizes = [8, 80], strides = [1, 1]} : vector<8x176xf32> to vector<8x80xf32>
    %73 = vector.extract_strided_slice %61 {offsets = [0, 89], sizes = [8, 80], strides = [1, 1]} : vector<8x176xf32> to vector<8x80xf32>
    %74 = vector.extract_strided_slice %61 {offsets = [0, 90], sizes = [8, 80], strides = [1, 1]} : vector<8x176xf32> to vector<8x80xf32>
    %75 = vector.extract_strided_slice %61 {offsets = [0, 91], sizes = [8, 80], strides = [1, 1]} : vector<8x176xf32> to vector<8x80xf32>
    %76 = vector.extract_strided_slice %61 {offsets = [0, 92], sizes = [8, 80], strides = [1, 1]} : vector<8x176xf32> to vector<8x80xf32>
    %77 = vector.extract_strided_slice %61 {offsets = [0, 93], sizes = [8, 80], strides = [1, 1]} : vector<8x176xf32> to vector<8x80xf32>
    %78 = vector.extract_strided_slice %61 {offsets = [0, 94], sizes = [8, 80], strides = [1, 1]} : vector<8x176xf32> to vector<8x80xf32>
    %79 = vector.extract_strided_slice %61 {offsets = [0, 95], sizes = [8, 80], strides = [1, 1]} : vector<8x176xf32> to vector<8x80xf32>
    %80 = vector.extract_strided_slice %61 {offsets = [0, 96], sizes = [8, 80], strides = [1, 1]} : vector<8x176xf32> to vector<8x80xf32>
    %81 = tpu.concatenate %72, %73, %74, %75, %76, %77, %78, %79, %80 in 0 : vector<8x80xf32>, vector<8x80xf32>, vector<8x80xf32>, vector<8x80xf32>, vector<8x80xf32>, vector<8x80xf32>, vector<8x80xf32>, vector<8x80xf32>, vector<8x80xf32> -> vector<72x80xf32>
    %82 = tpu.concatenate %71, %81 in 1 : vector<72x80xf32>, vector<72x80xf32> -> vector<72x160xf32>
    %c8 = arith.constant 8 : index
    %c0_14 = arith.constant 0 : index
    %83 = vector.load %arg1[%c8, %c0_14] : memref<192x320xf32, #tpu.memory_space<vmem>>, vector<16x72xf32>
    %cst_15 = arith.constant dense<0.000000e+00> : vector<16x160xf32>
    %84 = tpu.matmul %83, %82, %cst_15 {dimension_numbers = #tpu.dot_dimension_numbers<[1], [0], [0], [1], [0, 0, 1, 1], [], []>} : vector<16x72xf32>, vector<72x160xf32>, vector<16x160xf32> -> vector<16x160xf32>
    %c8_16 = arith.constant 8 : index
    %c0_17 = arith.constant 0 : index
    %85 = vector.load %arg2[%c8_16, %c0_17] : memref<192x4xf32, #tpu.memory_space<vmem>>, vector<16x1xf32>
    %c8_18 = arith.constant 8 : index
    %c1_19 = arith.constant 1 : index
    %86 = vector.load %arg2[%c8_18, %c1_19] : memref<192x4xf32, #tpu.memory_space<vmem>>, vector<16x1xf32>
    %cst_20 = arith.constant dense<0.000000e+00> : vector<16xf32>
    %87 = vector.multi_reduction <add>, %84, %cst_20 [1] : vector<16x160xf32> to vector<16xf32>
    %88 = vector.shape_cast %87 : vector<16xf32> to vector<16x1xf32>
    %cst_21 = arith.constant 6.250000e-03 : f32
    %89 = vector.broadcast %cst_21 : f32 to vector<16x1xf32>
    %90 = arith.mulf %88, %89 : vector<16x1xf32>
    %91 = arith.mulf %84, %84 : vector<16x160xf32>
    %cst_22 = arith.constant dense<0.000000e+00> : vector<16xf32>
    %92 = vector.multi_reduction <add>, %91, %cst_22 [1] : vector<16x160xf32> to vector<16xf32>
    %93 = vector.shape_cast %92 : vector<16xf32> to vector<16x1xf32>
    %cst_23 = arith.constant 6.250000e-03 : f32
    %94 = vector.broadcast %cst_23 : f32 to vector<16x1xf32>
    %95 = arith.mulf %93, %94 : vector<16x1xf32>
    %96 = arith.mulf %90, %90 : vector<16x1xf32>
    %97 = arith.subf %95, %96 : vector<16x1xf32>
    %cst_24 = arith.constant 0.000000e+00 : f32
    %98 = vector.broadcast %cst_24 : f32 to vector<16x1xf32>
    %99 = arith.maximumf %97, %98 : vector<16x1xf32>
    %cst_25 = arith.constant 9.99999974E-6 : f32
    %100 = vector.broadcast %cst_25 : f32 to vector<16x1xf32>
    %101 = arith.addf %99, %100 : vector<16x1xf32>
    %102 = math.rsqrt %101 : vector<16x1xf32>
    %103 = arith.mulf %85, %102 : vector<16x1xf32>
    %104 = vector.broadcast %103 : vector<16x1xf32> to vector<16x160xf32>
    %105 = arith.mulf %84, %104 : vector<16x160xf32>
    %106 = arith.mulf %90, %103 : vector<16x1xf32>
    %107 = arith.subf %86, %106 : vector<16x1xf32>
    %108 = vector.broadcast %107 : vector<16x1xf32> to vector<16x160xf32>
    %109 = arith.addf %105, %108 : vector<16x160xf32>
    %cst_26 = arith.constant 0.000000e+00 : f32
    %110 = vector.broadcast %cst_26 : f32 to vector<16x160xf32>
    %111 = arith.cmpf ogt, %109, %110 : vector<16x160xf32>
    %cst_27 = arith.constant 0.00999999977 : f32
    %112 = vector.broadcast %cst_27 : f32 to vector<16x160xf32>
    %113 = arith.mulf %112, %109 : vector<16x160xf32>
    %114 = arith.select %111, %109, %113 : vector<16x160xi1>, vector<16x160xf32>
    %115 = vector.extract_strided_slice %114 {offsets = [0, 0], sizes = [16, 76], strides = [1, 1]} : vector<16x160xf32> to vector<16x76xf32>
    %116 = vector.extract_strided_slice %114 {offsets = [0, 1], sizes = [16, 76], strides = [1, 1]} : vector<16x160xf32> to vector<16x76xf32>
    %117 = vector.extract_strided_slice %114 {offsets = [0, 2], sizes = [16, 76], strides = [1, 1]} : vector<16x160xf32> to vector<16x76xf32>
    %118 = vector.extract_strided_slice %114 {offsets = [0, 3], sizes = [16, 76], strides = [1, 1]} : vector<16x160xf32> to vector<16x76xf32>
    %119 = vector.extract_strided_slice %114 {offsets = [0, 4], sizes = [16, 76], strides = [1, 1]} : vector<16x160xf32> to vector<16x76xf32>
    %120 = tpu.concatenate %115, %116, %117, %118, %119 in 0 : vector<16x76xf32>, vector<16x76xf32>, vector<16x76xf32>, vector<16x76xf32>, vector<16x76xf32> -> vector<80x76xf32>
    %121 = vector.extract_strided_slice %114 {offsets = [0, 80], sizes = [16, 76], strides = [1, 1]} : vector<16x160xf32> to vector<16x76xf32>
    %122 = vector.extract_strided_slice %114 {offsets = [0, 81], sizes = [16, 76], strides = [1, 1]} : vector<16x160xf32> to vector<16x76xf32>
    %123 = vector.extract_strided_slice %114 {offsets = [0, 82], sizes = [16, 76], strides = [1, 1]} : vector<16x160xf32> to vector<16x76xf32>
    %124 = vector.extract_strided_slice %114 {offsets = [0, 83], sizes = [16, 76], strides = [1, 1]} : vector<16x160xf32> to vector<16x76xf32>
    %125 = vector.extract_strided_slice %114 {offsets = [0, 84], sizes = [16, 76], strides = [1, 1]} : vector<16x160xf32> to vector<16x76xf32>
    %126 = tpu.concatenate %121, %122, %123, %124, %125 in 0 : vector<16x76xf32>, vector<16x76xf32>, vector<16x76xf32>, vector<16x76xf32>, vector<16x76xf32> -> vector<80x76xf32>
    %127 = tpu.concatenate %120, %126 in 1 : vector<80x76xf32>, vector<80x76xf32> -> vector<80x152xf32>
    %c24 = arith.constant 24 : index
    %c0_28 = arith.constant 0 : index
    %128 = vector.load %arg1[%c24, %c0_28] : memref<192x320xf32, #tpu.memory_space<vmem>>, vector<32x80xf32>
    %cst_29 = arith.constant dense<0.000000e+00> : vector<32x152xf32>
    %129 = tpu.matmul %128, %127, %cst_29 {dimension_numbers = #tpu.dot_dimension_numbers<[1], [0], [0], [1], [0, 0, 1, 1], [], []>} : vector<32x80xf32>, vector<80x152xf32>, vector<32x152xf32> -> vector<32x152xf32>
    %c24_30 = arith.constant 24 : index
    %c0_31 = arith.constant 0 : index
    %130 = vector.load %arg2[%c24_30, %c0_31] : memref<192x4xf32, #tpu.memory_space<vmem>>, vector<32x1xf32>
    %c24_32 = arith.constant 24 : index
    %c1_33 = arith.constant 1 : index
    %131 = vector.load %arg2[%c24_32, %c1_33] : memref<192x4xf32, #tpu.memory_space<vmem>>, vector<32x1xf32>
    %cst_34 = arith.constant dense<0.000000e+00> : vector<32xf32>
    %132 = vector.multi_reduction <add>, %129, %cst_34 [1] : vector<32x152xf32> to vector<32xf32>
    %133 = vector.shape_cast %132 : vector<32xf32> to vector<32x1xf32>
    %cst_35 = arith.constant 0.00657894742 : f32
    %134 = vector.broadcast %cst_35 : f32 to vector<32x1xf32>
    %135 = arith.mulf %133, %134 : vector<32x1xf32>
    %136 = arith.mulf %129, %129 : vector<32x152xf32>
    %cst_36 = arith.constant dense<0.000000e+00> : vector<32xf32>
    %137 = vector.multi_reduction <add>, %136, %cst_36 [1] : vector<32x152xf32> to vector<32xf32>
    %138 = vector.shape_cast %137 : vector<32xf32> to vector<32x1xf32>
    %cst_37 = arith.constant 0.00657894742 : f32
    %139 = vector.broadcast %cst_37 : f32 to vector<32x1xf32>
    %140 = arith.mulf %138, %139 : vector<32x1xf32>
    %141 = arith.mulf %135, %135 : vector<32x1xf32>
    %142 = arith.subf %140, %141 : vector<32x1xf32>
    %cst_38 = arith.constant 0.000000e+00 : f32
    %143 = vector.broadcast %cst_38 : f32 to vector<32x1xf32>
    %144 = arith.maximumf %142, %143 : vector<32x1xf32>
    %cst_39 = arith.constant 9.99999974E-6 : f32
    %145 = vector.broadcast %cst_39 : f32 to vector<32x1xf32>
    %146 = arith.addf %144, %145 : vector<32x1xf32>
    %147 = math.rsqrt %146 : vector<32x1xf32>
    %148 = arith.mulf %130, %147 : vector<32x1xf32>
    %149 = vector.broadcast %148 : vector<32x1xf32> to vector<32x152xf32>
    %150 = arith.mulf %129, %149 : vector<32x152xf32>
    %151 = arith.mulf %135, %148 : vector<32x1xf32>
    %152 = arith.subf %131, %151 : vector<32x1xf32>
    %153 = vector.broadcast %152 : vector<32x1xf32> to vector<32x152xf32>
    %154 = arith.addf %150, %153 : vector<32x152xf32>
    %cst_40 = arith.constant 0.000000e+00 : f32
    %155 = vector.broadcast %cst_40 : f32 to vector<32x152xf32>
    %156 = arith.cmpf ogt, %154, %155 : vector<32x152xf32>
    %cst_41 = arith.constant 0.00999999977 : f32
    %157 = vector.broadcast %cst_41 : f32 to vector<32x152xf32>
    %158 = arith.mulf %157, %154 : vector<32x152xf32>
    %159 = arith.select %156, %154, %158 : vector<32x152xi1>, vector<32x152xf32>
    %160 = vector.extract_strided_slice %159 {offsets = [0, 0], sizes = [32, 72], strides = [1, 1]} : vector<32x152xf32> to vector<32x72xf32>
    %161 = vector.extract_strided_slice %159 {offsets = [0, 1], sizes = [32, 72], strides = [1, 1]} : vector<32x152xf32> to vector<32x72xf32>
    %162 = vector.extract_strided_slice %159 {offsets = [0, 2], sizes = [32, 72], strides = [1, 1]} : vector<32x152xf32> to vector<32x72xf32>
    %163 = vector.extract_strided_slice %159 {offsets = [0, 3], sizes = [32, 72], strides = [1, 1]} : vector<32x152xf32> to vector<32x72xf32>
    %164 = vector.extract_strided_slice %159 {offsets = [0, 4], sizes = [32, 72], strides = [1, 1]} : vector<32x152xf32> to vector<32x72xf32>
    %165 = tpu.concatenate %160, %161, %162, %163, %164 in 0 : vector<32x72xf32>, vector<32x72xf32>, vector<32x72xf32>, vector<32x72xf32>, vector<32x72xf32> -> vector<160x72xf32>
    %166 = vector.extract_strided_slice %159 {offsets = [0, 76], sizes = [32, 72], strides = [1, 1]} : vector<32x152xf32> to vector<32x72xf32>
    %167 = vector.extract_strided_slice %159 {offsets = [0, 77], sizes = [32, 72], strides = [1, 1]} : vector<32x152xf32> to vector<32x72xf32>
    %168 = vector.extract_strided_slice %159 {offsets = [0, 78], sizes = [32, 72], strides = [1, 1]} : vector<32x152xf32> to vector<32x72xf32>
    %169 = vector.extract_strided_slice %159 {offsets = [0, 79], sizes = [32, 72], strides = [1, 1]} : vector<32x152xf32> to vector<32x72xf32>
    %170 = vector.extract_strided_slice %159 {offsets = [0, 80], sizes = [32, 72], strides = [1, 1]} : vector<32x152xf32> to vector<32x72xf32>
    %171 = tpu.concatenate %166, %167, %168, %169, %170 in 0 : vector<32x72xf32>, vector<32x72xf32>, vector<32x72xf32>, vector<32x72xf32>, vector<32x72xf32> -> vector<160x72xf32>
    %172 = tpu.concatenate %165, %171 in 1 : vector<160x72xf32>, vector<160x72xf32> -> vector<160x144xf32>
    %c56 = arith.constant 56 : index
    %c0_42 = arith.constant 0 : index
    %173 = vector.load %arg1[%c56, %c0_42] : memref<192x320xf32, #tpu.memory_space<vmem>>, vector<64x160xf32>
    %cst_43 = arith.constant dense<0.000000e+00> : vector<64x144xf32>
    %174 = tpu.matmul %173, %172, %cst_43 {dimension_numbers = #tpu.dot_dimension_numbers<[1], [0], [0], [1], [0, 0, 1, 1], [], []>} : vector<64x160xf32>, vector<160x144xf32>, vector<64x144xf32> -> vector<64x144xf32>
    %c56_44 = arith.constant 56 : index
    %c0_45 = arith.constant 0 : index
    %175 = vector.load %arg2[%c56_44, %c0_45] : memref<192x4xf32, #tpu.memory_space<vmem>>, vector<64x1xf32>
    %c56_46 = arith.constant 56 : index
    %c1_47 = arith.constant 1 : index
    %176 = vector.load %arg2[%c56_46, %c1_47] : memref<192x4xf32, #tpu.memory_space<vmem>>, vector<64x1xf32>
    %cst_48 = arith.constant dense<0.000000e+00> : vector<64xf32>
    %177 = vector.multi_reduction <add>, %174, %cst_48 [1] : vector<64x144xf32> to vector<64xf32>
    %178 = vector.shape_cast %177 : vector<64xf32> to vector<64x1xf32>
    %cst_49 = arith.constant 0.0069444445 : f32
    %179 = vector.broadcast %cst_49 : f32 to vector<64x1xf32>
    %180 = arith.mulf %178, %179 : vector<64x1xf32>
    %181 = arith.mulf %174, %174 : vector<64x144xf32>
    %cst_50 = arith.constant dense<0.000000e+00> : vector<64xf32>
    %182 = vector.multi_reduction <add>, %181, %cst_50 [1] : vector<64x144xf32> to vector<64xf32>
    %183 = vector.shape_cast %182 : vector<64xf32> to vector<64x1xf32>
    %cst_51 = arith.constant 0.0069444445 : f32
    %184 = vector.broadcast %cst_51 : f32 to vector<64x1xf32>
    %185 = arith.mulf %183, %184 : vector<64x1xf32>
    %186 = arith.mulf %180, %180 : vector<64x1xf32>
    %187 = arith.subf %185, %186 : vector<64x1xf32>
    %cst_52 = arith.constant 0.000000e+00 : f32
    %188 = vector.broadcast %cst_52 : f32 to vector<64x1xf32>
    %189 = arith.maximumf %187, %188 : vector<64x1xf32>
    %cst_53 = arith.constant 9.99999974E-6 : f32
    %190 = vector.broadcast %cst_53 : f32 to vector<64x1xf32>
    %191 = arith.addf %189, %190 : vector<64x1xf32>
    %192 = math.rsqrt %191 : vector<64x1xf32>
    %193 = arith.mulf %175, %192 : vector<64x1xf32>
    %194 = vector.broadcast %193 : vector<64x1xf32> to vector<64x144xf32>
    %195 = arith.mulf %174, %194 : vector<64x144xf32>
    %196 = arith.mulf %180, %193 : vector<64x1xf32>
    %197 = arith.subf %176, %196 : vector<64x1xf32>
    %198 = vector.broadcast %197 : vector<64x1xf32> to vector<64x144xf32>
    %199 = arith.addf %195, %198 : vector<64x144xf32>
    %cst_54 = arith.constant 0.000000e+00 : f32
    %200 = vector.broadcast %cst_54 : f32 to vector<64x144xf32>
    %201 = arith.cmpf ogt, %199, %200 : vector<64x144xf32>
    %cst_55 = arith.constant 0.00999999977 : f32
    %202 = vector.broadcast %cst_55 : f32 to vector<64x144xf32>
    %203 = arith.mulf %202, %199 : vector<64x144xf32>
    %204 = arith.select %201, %199, %203 : vector<64x144xi1>, vector<64x144xf32>
    %205 = vector.extract_strided_slice %204 {offsets = [0, 0], sizes = [64, 68], strides = [1, 1]} : vector<64x144xf32> to vector<64x68xf32>
    %206 = vector.extract_strided_slice %204 {offsets = [0, 1], sizes = [64, 68], strides = [1, 1]} : vector<64x144xf32> to vector<64x68xf32>
    %207 = vector.extract_strided_slice %204 {offsets = [0, 2], sizes = [64, 68], strides = [1, 1]} : vector<64x144xf32> to vector<64x68xf32>
    %208 = vector.extract_strided_slice %204 {offsets = [0, 3], sizes = [64, 68], strides = [1, 1]} : vector<64x144xf32> to vector<64x68xf32>
    %209 = vector.extract_strided_slice %204 {offsets = [0, 4], sizes = [64, 68], strides = [1, 1]} : vector<64x144xf32> to vector<64x68xf32>
    %210 = tpu.concatenate %205, %206, %207, %208, %209 in 0 : vector<64x68xf32>, vector<64x68xf32>, vector<64x68xf32>, vector<64x68xf32>, vector<64x68xf32> -> vector<320x68xf32>
    %211 = vector.extract_strided_slice %204 {offsets = [0, 72], sizes = [64, 68], strides = [1, 1]} : vector<64x144xf32> to vector<64x68xf32>
    %212 = vector.extract_strided_slice %204 {offsets = [0, 73], sizes = [64, 68], strides = [1, 1]} : vector<64x144xf32> to vector<64x68xf32>
    %213 = vector.extract_strided_slice %204 {offsets = [0, 74], sizes = [64, 68], strides = [1, 1]} : vector<64x144xf32> to vector<64x68xf32>
    %214 = vector.extract_strided_slice %204 {offsets = [0, 75], sizes = [64, 68], strides = [1, 1]} : vector<64x144xf32> to vector<64x68xf32>
    %215 = vector.extract_strided_slice %204 {offsets = [0, 76], sizes = [64, 68], strides = [1, 1]} : vector<64x144xf32> to vector<64x68xf32>
    %216 = tpu.concatenate %211, %212, %213, %214, %215 in 0 : vector<64x68xf32>, vector<64x68xf32>, vector<64x68xf32>, vector<64x68xf32>, vector<64x68xf32> -> vector<320x68xf32>
    %217 = tpu.concatenate %210, %216 in 1 : vector<320x68xf32>, vector<320x68xf32> -> vector<320x136xf32>
    %c120 = arith.constant 120 : index
    %c0_56 = arith.constant 0 : index
    %218 = vector.load %arg1[%c120, %c0_56] : memref<192x320xf32, #tpu.memory_space<vmem>>, vector<32x320xf32>
    %cst_57 = arith.constant dense<0.000000e+00> : vector<32x136xf32>
    %219 = tpu.matmul %218, %217, %cst_57 {dimension_numbers = #tpu.dot_dimension_numbers<[1], [0], [0], [1], [0, 0, 1, 1], [], []>} : vector<32x320xf32>, vector<320x136xf32>, vector<32x136xf32> -> vector<32x136xf32>
    %c120_58 = arith.constant 120 : index
    %c0_59 = arith.constant 0 : index
    %220 = vector.load %arg2[%c120_58, %c0_59] : memref<192x4xf32, #tpu.memory_space<vmem>>, vector<32x1xf32>
    %c120_60 = arith.constant 120 : index
    %c1_61 = arith.constant 1 : index
    %221 = vector.load %arg2[%c120_60, %c1_61] : memref<192x4xf32, #tpu.memory_space<vmem>>, vector<32x1xf32>
    %cst_62 = arith.constant dense<0.000000e+00> : vector<32xf32>
    %222 = vector.multi_reduction <add>, %219, %cst_62 [1] : vector<32x136xf32> to vector<32xf32>
    %223 = vector.shape_cast %222 : vector<32xf32> to vector<32x1xf32>
    %cst_63 = arith.constant 0.0073529412 : f32
    %224 = vector.broadcast %cst_63 : f32 to vector<32x1xf32>
    %225 = arith.mulf %223, %224 : vector<32x1xf32>
    %226 = arith.mulf %219, %219 : vector<32x136xf32>
    %cst_64 = arith.constant dense<0.000000e+00> : vector<32xf32>
    %227 = vector.multi_reduction <add>, %226, %cst_64 [1] : vector<32x136xf32> to vector<32xf32>
    %228 = vector.shape_cast %227 : vector<32xf32> to vector<32x1xf32>
    %cst_65 = arith.constant 0.0073529412 : f32
    %229 = vector.broadcast %cst_65 : f32 to vector<32x1xf32>
    %230 = arith.mulf %228, %229 : vector<32x1xf32>
    %231 = arith.mulf %225, %225 : vector<32x1xf32>
    %232 = arith.subf %230, %231 : vector<32x1xf32>
    %cst_66 = arith.constant 0.000000e+00 : f32
    %233 = vector.broadcast %cst_66 : f32 to vector<32x1xf32>
    %234 = arith.maximumf %232, %233 : vector<32x1xf32>
    %cst_67 = arith.constant 9.99999974E-6 : f32
    %235 = vector.broadcast %cst_67 : f32 to vector<32x1xf32>
    %236 = arith.addf %234, %235 : vector<32x1xf32>
    %237 = math.rsqrt %236 : vector<32x1xf32>
    %238 = arith.mulf %220, %237 : vector<32x1xf32>
    %239 = vector.broadcast %238 : vector<32x1xf32> to vector<32x136xf32>
    %240 = arith.mulf %219, %239 : vector<32x136xf32>
    %241 = arith.mulf %225, %238 : vector<32x1xf32>
    %242 = arith.subf %221, %241 : vector<32x1xf32>
    %243 = vector.broadcast %242 : vector<32x1xf32> to vector<32x136xf32>
    %244 = arith.addf %240, %243 : vector<32x136xf32>
    %cst_68 = arith.constant 0.000000e+00 : f32
    %245 = vector.broadcast %cst_68 : f32 to vector<32x136xf32>
    %246 = arith.cmpf ogt, %244, %245 : vector<32x136xf32>
    %cst_69 = arith.constant 0.00999999977 : f32
    %247 = vector.broadcast %cst_69 : f32 to vector<32x136xf32>
    %248 = arith.mulf %247, %244 : vector<32x136xf32>
    %249 = arith.select %246, %244, %248 : vector<32x136xi1>, vector<32x136xf32>
    %250 = vector.extract_strided_slice %249 {offsets = [0, 0], sizes = [32, 64], strides = [1, 1]} : vector<32x136xf32> to vector<32x64xf32>
    %251 = vector.extract_strided_slice %249 {offsets = [0, 1], sizes = [32, 64], strides = [1, 1]} : vector<32x136xf32> to vector<32x64xf32>
    %252 = vector.extract_strided_slice %249 {offsets = [0, 2], sizes = [32, 64], strides = [1, 1]} : vector<32x136xf32> to vector<32x64xf32>
    %253 = vector.extract_strided_slice %249 {offsets = [0, 3], sizes = [32, 64], strides = [1, 1]} : vector<32x136xf32> to vector<32x64xf32>
    %254 = vector.extract_strided_slice %249 {offsets = [0, 4], sizes = [32, 64], strides = [1, 1]} : vector<32x136xf32> to vector<32x64xf32>
    %255 = tpu.concatenate %250, %251, %252, %253, %254 in 0 : vector<32x64xf32>, vector<32x64xf32>, vector<32x64xf32>, vector<32x64xf32>, vector<32x64xf32> -> vector<160x64xf32>
    %256 = vector.extract_strided_slice %249 {offsets = [0, 68], sizes = [32, 64], strides = [1, 1]} : vector<32x136xf32> to vector<32x64xf32>
    %257 = vector.extract_strided_slice %249 {offsets = [0, 69], sizes = [32, 64], strides = [1, 1]} : vector<32x136xf32> to vector<32x64xf32>
    %258 = vector.extract_strided_slice %249 {offsets = [0, 70], sizes = [32, 64], strides = [1, 1]} : vector<32x136xf32> to vector<32x64xf32>
    %259 = vector.extract_strided_slice %249 {offsets = [0, 71], sizes = [32, 64], strides = [1, 1]} : vector<32x136xf32> to vector<32x64xf32>
    %260 = vector.extract_strided_slice %249 {offsets = [0, 72], sizes = [32, 64], strides = [1, 1]} : vector<32x136xf32> to vector<32x64xf32>
    %261 = tpu.concatenate %256, %257, %258, %259, %260 in 0 : vector<32x64xf32>, vector<32x64xf32>, vector<32x64xf32>, vector<32x64xf32>, vector<32x64xf32> -> vector<160x64xf32>
    %262 = tpu.concatenate %255, %261 in 1 : vector<160x64xf32>, vector<160x64xf32> -> vector<160x128xf32>
    %c152 = arith.constant 152 : index
    %c0_70 = arith.constant 0 : index
    %263 = vector.load %arg1[%c152, %c0_70] : memref<192x320xf32, #tpu.memory_space<vmem>>, vector<32x160xf32>
    %cst_71 = arith.constant dense<0.000000e+00> : vector<32x128xf32>
    %264 = tpu.matmul %263, %262, %cst_71 {dimension_numbers = #tpu.dot_dimension_numbers<[1], [0], [0], [1], [0, 0, 1, 1], [], []>} : vector<32x160xf32>, vector<160x128xf32>, vector<32x128xf32> -> vector<32x128xf32>
    %c152_72 = arith.constant 152 : index
    %c0_73 = arith.constant 0 : index
    %265 = vector.load %arg2[%c152_72, %c0_73] : memref<192x4xf32, #tpu.memory_space<vmem>>, vector<32x1xf32>
    %c152_74 = arith.constant 152 : index
    %c1_75 = arith.constant 1 : index
    %266 = vector.load %arg2[%c152_74, %c1_75] : memref<192x4xf32, #tpu.memory_space<vmem>>, vector<32x1xf32>
    %cst_76 = arith.constant dense<0.000000e+00> : vector<32xf32>
    %267 = vector.multi_reduction <add>, %264, %cst_76 [1] : vector<32x128xf32> to vector<32xf32>
    %268 = vector.shape_cast %267 : vector<32xf32> to vector<32x1xf32>
    %cst_77 = arith.constant 7.812500e-03 : f32
    %269 = vector.broadcast %cst_77 : f32 to vector<32x1xf32>
    %270 = arith.mulf %268, %269 : vector<32x1xf32>
    %271 = arith.mulf %264, %264 : vector<32x128xf32>
    %cst_78 = arith.constant dense<0.000000e+00> : vector<32xf32>
    %272 = vector.multi_reduction <add>, %271, %cst_78 [1] : vector<32x128xf32> to vector<32xf32>
    %273 = vector.shape_cast %272 : vector<32xf32> to vector<32x1xf32>
    %cst_79 = arith.constant 7.812500e-03 : f32
    %274 = vector.broadcast %cst_79 : f32 to vector<32x1xf32>
    %275 = arith.mulf %273, %274 : vector<32x1xf32>
    %276 = arith.mulf %270, %270 : vector<32x1xf32>
    %277 = arith.subf %275, %276 : vector<32x1xf32>
    %cst_80 = arith.constant 0.000000e+00 : f32
    %278 = vector.broadcast %cst_80 : f32 to vector<32x1xf32>
    %279 = arith.maximumf %277, %278 : vector<32x1xf32>
    %cst_81 = arith.constant 9.99999974E-6 : f32
    %280 = vector.broadcast %cst_81 : f32 to vector<32x1xf32>
    %281 = arith.addf %279, %280 : vector<32x1xf32>
    %282 = math.rsqrt %281 : vector<32x1xf32>
    %283 = arith.mulf %265, %282 : vector<32x1xf32>
    %284 = vector.broadcast %283 : vector<32x1xf32> to vector<32x128xf32>
    %285 = arith.mulf %264, %284 : vector<32x128xf32>
    %286 = arith.mulf %270, %283 : vector<32x1xf32>
    %287 = arith.subf %266, %286 : vector<32x1xf32>
    %288 = vector.broadcast %287 : vector<32x1xf32> to vector<32x128xf32>
    %289 = arith.addf %285, %288 : vector<32x128xf32>
    %cst_82 = arith.constant 0.000000e+00 : f32
    %290 = vector.broadcast %cst_82 : f32 to vector<32x128xf32>
    %291 = arith.cmpf ogt, %289, %290 : vector<32x128xf32>
    %cst_83 = arith.constant 0.00999999977 : f32
    %292 = vector.broadcast %cst_83 : f32 to vector<32x128xf32>
    %293 = arith.mulf %292, %289 : vector<32x128xf32>
    %294 = arith.select %291, %289, %293 : vector<32x128xi1>, vector<32x128xf32>
    %c184 = arith.constant 184 : index
    %c0_84 = arith.constant 0 : index
    %295 = vector.load %arg1[%c184, %c0_84] : memref<192x320xf32, #tpu.memory_space<vmem>>, vector<1x32xf32>
    %cst_85 = arith.constant dense<0.000000e+00> : vector<1x128xf32>
    %296 = tpu.matmul %295, %294, %cst_85 {dimension_numbers = #tpu.dot_dimension_numbers<[1], [0], [0], [1], [0, 0, 1, 1], [], []>} : vector<1x32xf32>, vector<32x128xf32>, vector<1x128xf32> -> vector<1x128xf32>
    %c184_86 = arith.constant 184 : index
    %c2 = arith.constant 2 : index
    %297 = vector.load %arg2[%c184_86, %c2] : memref<192x4xf32, #tpu.memory_space<vmem>>, vector<1x1xf32>
    %298 = vector.broadcast %297 : vector<1x1xf32> to vector<1x128xf32>
    %299 = arith.addf %296, %298 : vector<1x128xf32>
    %cst_87 = arith.constant 0.000000e+00 : f32
    %300 = vector.broadcast %cst_87 : f32 to vector<1x128xf32>
    %301 = arith.cmpf ogt, %299, %300 : vector<1x128xf32>
    %cst_88 = arith.constant 0.00999999977 : f32
    %302 = vector.broadcast %cst_88 : f32 to vector<1x128xf32>
    %303 = arith.mulf %302, %299 : vector<1x128xf32>
    %304 = arith.select %301, %299, %303 : vector<1x128xi1>, vector<1x128xf32>
    %305 = vector.extract_strided_slice %304 {offsets = [0, 0], sizes = [1, 64], strides = [1, 1]} : vector<1x128xf32> to vector<1x64xf32>
    %306 = vector.extract_strided_slice %304 {offsets = [0, 64], sizes = [1, 64], strides = [1, 1]} : vector<1x128xf32> to vector<1x64xf32>
    %307 = tpu.concatenate %305, %306 in 0 : vector<1x64xf32>, vector<1x64xf32> -> vector<2x64xf32>
    %c0_89 = arith.constant 0 : index
    %c0_90 = arith.constant 0 : index
    %308 = vector.load %arg3[%c0_89, %c0_90] : memref<72x16xf32, #tpu.memory_space<vmem>>, vector<64x16xf32>
    %c64 = arith.constant 64 : index
    %c0_91 = arith.constant 0 : index
    %309 = vector.load %arg3[%c64, %c0_91] : memref<72x16xf32, #tpu.memory_space<vmem>>, vector<1x16xf32>
    %cst_92 = arith.constant dense<0.000000e+00> : vector<2x16xf32>
    %310 = tpu.matmul %307, %308, %cst_92 {dimension_numbers = #tpu.dot_dimension_numbers<[1], [0], [0], [1], [0, 0, 1, 1], [], []>} : vector<2x64xf32>, vector<64x16xf32>, vector<2x16xf32> -> vector<2x16xf32>
    %311 = vector.broadcast %309 : vector<1x16xf32> to vector<2x16xf32>
    %312 = arith.addf %310, %311 : vector<2x16xf32>
    %313 = tpu.iota {dimensions = array<i32: 1>} : vector<2x16xi32>
    %cst_93 = arith.constant 0.000000e+00 : f32
    %314 = vector.broadcast %cst_93 : f32 to vector<2x16xf32>
    %315 = arith.maximumf %312, %314 : vector<2x16xf32>
    %316 = math.absf %312 : vector<2x16xf32>
    %cst_94 = arith.constant 0.000000e+00 : f32
    %317 = vector.broadcast %cst_94 : f32 to vector<2x16xf32>
    %318 = arith.subf %317, %316 : vector<2x16xf32>
    %319 = math.exp %318 : vector<2x16xf32>
    %cst_95 = arith.constant 1.000000e+00 : f32
    %320 = vector.broadcast %cst_95 : f32 to vector<2x16xf32>
    %321 = arith.addf %320, %319 : vector<2x16xf32>
    %322 = math.log %321 : vector<2x16xf32>
    %323 = arith.addf %315, %322 : vector<2x16xf32>
    %c8_i32 = arith.constant 8 : i32
    %324 = vector.broadcast %c8_i32 : i32 to vector<2x16xi32>
    %325 = arith.cmpi slt, %313, %324 : vector<2x16xi32>
    %326 = arith.select %325, %312, %323 : vector<2x16xi1>, vector<2x16xf32>
    %c0_96 = arith.constant 0 : index
    %c0_97 = arith.constant 0 : index
    %327 = vector.load %arg4[%c0_96, %c0_97] : memref<2x16xf32, #tpu.memory_space<vmem>>, vector<2x16xf32>
    tpu.vector_store %arg4[%c0_96, %c0_97], %326 {strides = array<i32>} : memref<2x16xf32, #tpu.memory_space<vmem>>, vector<2x16xf32>,
    return
  }
}

</mosaic_0001>

<llo_original>
// kernel: tpu_custom_call.1
$region0: #{tpu_custom_call.1}
  #allocation0 [shape = 'u32[]', space=smem, size = 0x4, offset = 0x4, fixed_abs, tag = 'smem constant byte address 0x4 - core index']
  #allocation1 [shape = 'u32[144,128]{1,0:T(1,128)}', space=vmem, size = 0x12000, scoped, tag = 'internal scratch']
  %s0 = inlined_call_operand.vmem [shape: f32[2,200], index: 0, kind: input, shape index: {}]
  %s1 = inlined_call_operand.hbm [shape: f32[192,320], index: 1, kind: input, shape index: {}]
  %s2 = inlined_call_operand.vmem [shape: f32[192,4], index: 2, kind: input, shape index: {}]
  %s3 = inlined_call_operand.vmem [shape: f32[72,16], index: 3, kind: input, shape index: {}]
  %s4 = inlined_call_operand.hbm [shape: f32[2,16], index: 4, kind: output, shape index: {}]
  %s5 = sld [smem:[#allocation0]]
  $region30: #{tpu_custom_call.1} parent=0
    _
  %s7 = ssub.s32 1, %s5
  %s8 = scalar_select 0, %s7, %s5
  $region1: #{tpu_custom_call.1} parent=0
    #allocation2 [shape = 'u8[294912]{0}', space=vmem, size = 0x48000, scoped, tag = 'input window, operand 1, single buffered']
    #allocation3 [shape = 's32[1]{0}', space=sflag, size = 0x4, scoped, tag = 'scoped memory for tpu_custom_call.1']
    #allocation4 [shape = 's32[1]{0}', space=sflag, size = 0x4, scoped, tag = 'scoped memory for tpu_custom_call.1']
    #allocation5 [shape = 'u8[1024]{0}', space=vmem, size = 0x400, scoped, tag = 'output window, operand 0, single buffered']
    %9 = vsyncpa [#allocation3], 0
    %10 = vsyncpa [#allocation4], 0
    // Predicated region
    $region2: #{tpu_custom_call.1} parent=1 // pred_check
      _
    $region3: #{tpu_custom_call.1} parent=1 // pred_check_branch
      %12 = sbr.rel (0) target = $region5
    $region4: #{tpu_custom_call.1} parent=1 // pred_region
      _
    $region5: #{tpu_custom_call.1} parent=1 // pred_fallthru
      _
    // Predicated region
    $region6: #{tpu_custom_call.1} parent=1 // pred_check
      _
    $region7: #{tpu_custom_call.1} parent=1 // pred_check_branch
      %14 = sbr.rel (0) target = $region9
    $region8: #{tpu_custom_call.1} parent=1 // pred_region
      %s16 = ssub.s32 9216, 9216
      %17 = vsyncadd [#allocation3], %s16
      %s18 = sshll.u32 [#allocation2], 4
      %s19 = int_to_ptr.vmem [resolvable:$true] %s18
      %24 = dma.hbm_to_vmem [thread:$0]  %s1, 9216, %s19, [#allocation3], 384, 384, 24
    $region9: #{tpu_custom_call.1} parent=1 // pred_fallthru
      _
    // Predicated region
    $region10: #{tpu_custom_call.1} parent=1 // pred_check
      _
    $region11: #{tpu_custom_call.1} parent=1 // pred_check_branch
      %26 = sbr.rel (0) target = $region13
    $region12: #{tpu_custom_call.1} parent=1 // pred_region
      _
    $region13: #{tpu_custom_call.1} parent=1 // pred_fallthru
      _
    // Predicated region
    $region14: #{tpu_custom_call.1} parent=1 // pred_check
      _
    $region15: #{tpu_custom_call.1} parent=1 // pred_check_branch
      %28 = sbr.rel (0) target = $region17
    $region16: #{tpu_custom_call.1} parent=1 // pred_region
      _
    $region17: #{tpu_custom_call.1} parent=1 // pred_fallthru
      _
    // Predicated region
    $region18: #{tpu_custom_call.1} parent=1 // pred_check
      _
    $region19: #{tpu_custom_call.1} parent=1 // pred_check_branch
      %30 = sbr.rel (0) target = $region21
    $region20: #{tpu_custom_call.1} parent=1 // pred_region
      %31 = dma.done [#allocation3], 9216
    $region21: #{tpu_custom_call.1} parent=1 // pred_fallthru
      _
    %v32 = vld [vmem:[%s0] sm:$0xf]
    %v34 = vcombine.low %v32, %v32
    %v36 = vunpack.c.l.s4 1983009808
    %v37 = vunpack.c.0.s8 %v36
    %v38 = vlaneseq
    %v39 = vshrl.u32 %v38, 7
    %v40 = vsub.s32 %v37, %v39
    %v41 = vrot.slane %v34, %v40
    %v43 = vunpack.c.l.s4 1983009808
    %v44 = vunpack.c.0.s8 %v43
    %v45 = vlaneseq
    %v46 = vshrl.u32 %v45, 7
    %v47 = vsub.s32 %v44, %v46
    %v48 = vrot.slane %v32, %v47
    %49 = vrot.lane.b32.xlu0 %v41, 127
    %v50 = vpop.permute.xlu0 %49
    %v52 = vcombine.low %v48, %v48
    %53 = vrot.lane.b32.xlu0 %v52, 126
    %v54 = vpop.permute.xlu0 %53
    %v56 = vcombine.low %v41, %v41
    %57 = vrot.lane.b32.xlu0 %v56, 125
    %v58 = vpop.permute.xlu0 %57
    %60 = vrot.lane.b32.xlu0 %v48, 124
    %v61 = vpop.permute.xlu0 %60
    %63 = vrot.lane.b32.xlu0 %v41, 123
    %v64 = vpop.permute.xlu0 %63
    %66 = vrot.lane.b32.xlu0 %v52, 122
    %v67 = vpop.permute.xlu0 %66
    %69 = vrot.lane.b32.xlu0 %v56, 121
    %v70 = vpop.permute.xlu0 %69
    %72 = vrot.lane.b32.xlu0 %v48, 120
    %v73 = vpop.permute.xlu0 %72
    %75 = vrot.lane.b32.xlu0 %v41, 119
    %v76 = vpop.permute.xlu0 %75
    %78 = vrot.lane.b32.xlu0 %v52, 118
    %v79 = vpop.permute.xlu0 %78
    %81 = vrot.lane.b32.xlu0 %v56, 117
    %v82 = vpop.permute.xlu0 %81
    %84 = vrot.lane.b32.xlu0 %v48, 116
    %v85 = vpop.permute.xlu0 %84
    %vm87 = vcmask 1041408
    %v88 = vsel %vm87, %v32, %v50
    %vm89 = vcmask 1043456
    %v90 = vsel %vm89, %v88, %v54
    %vm91 = vcmask 1045504
    %v92 = vsel %vm91, %v90, %v58
    %v93 = vsel %vm87, %v61, %v64
    %v94 = vsel %vm89, %v93, %v67
    %v95 = vsel %vm91, %v94, %v70
    %v96 = vsel %vm87, %v73, %v76
    %v97 = vsel %vm89, %v96, %v79
    %v98 = vsel %vm91, %v97, %v82
    %v99 = vcombine.high %v48, %v48
    %v102 = vcombine.high %v41, %v41
    %103 = vrot.lane.b32.xlu0 %v102, 127
    %v104 = vpop.permute.xlu0 %103
    %vm105 = vcmask 1039360
    %v106 = vsel %vm105, %v50, %v104
    %109 = vrot.lane.b32.xlu0 %v48, 126
    %v110 = vpop.permute.xlu0 %109
    %vm111 = vcmask 1031168
    %v112 = vsel %vm111, %v54, %v110
    %115 = vrot.lane.b32.xlu0 %v41, 125
    %v116 = vpop.permute.xlu0 %115
    %vm117 = vcmask 1022976
    %v118 = vsel %vm117, %v58, %v116
    %121 = vrot.lane.b32.xlu0 %v99, 124
    %v122 = vpop.permute.xlu0 %121
    %vm123 = vcmask 1014784
    %v124 = vsel %vm123, %v61, %v122
    %127 = vrot.lane.b32.xlu0 %v102, 123
    %v128 = vpop.permute.xlu0 %127
    %vm129 = vcmask 1006592
    %v130 = vsel %vm129, %v64, %v128
    %133 = vrot.lane.b32.xlu0 %v48, 122
    %v134 = vpop.permute.xlu0 %133
    %vm135 = vcmask 998400
    %v136 = vsel %vm135, %v67, %v134
    %139 = vrot.lane.b32.xlu0 %v41, 121
    %v140 = vpop.permute.xlu0 %139
    %vm141 = vcmask 990208
    %v142 = vsel %vm141, %v70, %v140
    %145 = vrot.lane.b32.xlu0 %v99, 120
    %v146 = vpop.permute.xlu0 %145
    %vm147 = vcmask 982016
    %v148 = vsel %vm147, %v73, %v146
    %151 = vrot.lane.b32.xlu0 %v102, 119
    %v152 = vpop.permute.xlu0 %151
    %vm153 = vcmask 973824
    %v154 = vsel %vm153, %v76, %v152
    %157 = vrot.lane.b32.xlu0 %v48, 118
    %v158 = vpop.permute.xlu0 %157
    %vm159 = vcmask 965632
    %v160 = vsel %vm159, %v79, %v158
    %163 = vrot.lane.b32.xlu0 %v41, 117
    %v164 = vpop.permute.xlu0 %163
    %vm165 = vcmask 957440
    %v166 = vsel %vm165, %v82, %v164
    %169 = vrot.lane.b32.xlu0 %v99, 116
    %v170 = vpop.permute.xlu0 %169
    %vm171 = vcmask 949248
    %v172 = vsel %vm171, %v85, %v170
    %v173 = vsel %vm87, %v48, %v106
    %v174 = vsel %vm87, %v99, %v104
    %v175 = vsel %vm89, %v173, %v112
    %v176 = vsel %vm89, %v174, %v110
    %v177 = vsel %vm91, %v175, %v118
    %v178 = vsel %vm91, %v176, %v116
    %v179 = vsel %vm87, %v124, %v130
    %v180 = vsel %vm87, %v122, %v128
    %v181 = vsel %vm89, %v179, %v136
    %v182 = vsel %vm89, %v180, %v134
    %v183 = vsel %vm91, %v181, %v142
    %v184 = vsel %vm91, %v182, %v140
    %v185 = vsel %vm87, %v148, %v154
    %v186 = vsel %vm87, %v146, %v152
    %v187 = vsel %vm89, %v185, %v160
    %v188 = vsel %vm89, %v186, %v158
    %v189 = vsel %vm91, %v187, %v166
    %v190 = vsel %vm91, %v188, %v164
    %197 = vrot.lane.b32.xlu0 %v177, 116
    %v198 = vpop.permute.xlu0 %197
    %199 = vrot.lane.b32.xlu0 %v178, 116
    %v200 = vpop.permute.xlu0 %199
    %201 = vrot.lane.b32.xlu0 %v183, 116
    %v202 = vpop.permute.xlu0 %201
    %203 = vrot.lane.b32.xlu0 %v184, 116
    %v204 = vpop.permute.xlu0 %203
    %205 = vrot.lane.b32.xlu0 %v189, 116
    %v206 = vpop.permute.xlu0 %205
    %207 = vrot.lane.b32.xlu0 %v190, 116
    %v208 = vpop.permute.xlu0 %207
    %209 = vrot.lane.b32.xlu0 %v172, 116
    %v210 = vpop.permute.xlu0 %209
    %211 = vrot.lane.b32.xlu0 %v170, 116
    %v212 = vpop.permute.xlu0 %211
    %v213 = vsel %vm171, %v198, %v200
    %v214 = vsel %vm171, %v202, %v204
    %v215 = vsel %vm171, %v206, %v208
    %v216 = vsel %vm171, %v210, %v212
    %vm224 = vcmask 719872
    %v225 = vsel %vm224, %v92, %v213
    %v226 = vsel %vm224, %v95, %v214
    %v227 = vsel %vm224, %v98, %v215
    %v228 = vsel %vm224, %v85, %v216
    %v229 = vld [vmem:[#allocation2] sm:$0xff]
    %vm230 = vcmask 211968
    %v232 = vsel %vm230, %v229, 0
    %v235 = vsel %vm87, %v228, 0
    %v237 = vsel %vm87, %v212, 0
    %239 = vmatprep.subr.mxu0 %v200
    %240 = vmatpush1.msra.mxu0 %v225
    %241 = vmatprep.subr.mxu0 %v204
    %242 = vmatpush1.msra.mxu0 %v226
    %243 = vmatprep.subr.mxu0 %v208
    %244 = vmatpush1.msra.mxu0 %v227
    %245 = vmatprep.subr.mxu0 %v237
    %246 = vmatpush1.msra.mxu0 %v235
    %247 = vmatprep.subr.mxu0 0.0
    %248 = vmatpush1.msra.mxu0 0.0
    %249 = vmatprep.subr.mxu0 0.0
    %250 = vmatpush1.msra.mxu0 0.0
    %251 = vmatprep.subr.mxu0 0.0
    %252 = vmatpush1.msra.mxu0 0.0
    %253 = vmatprep.subr.mxu0 0.0
    %254 = vmatpush1.msra.mxu0 0.0
    %255 = vmatprep.subr.mxu0 0.0
    %256 = vmatpush1.msra.mxu0 0.0
    %257 = vmatprep.subr.mxu0 0.0
    %258 = vmatpush1.msra.mxu0 0.0
    %259 = vmatprep.subr.mxu0 0.0
    %260 = vmatpush1.msra.mxu0 0.0
    %261 = vmatprep.subr.mxu0 0.0
    %262 = vmatpush1.msra.mxu0 0.0
    %263 = vmatprep.subr.mxu0 0.0
    %264 = vmatpush1.msra.mxu0 0.0
    %265 = vmatprep.subr.mxu0 0.0
    %266 = vmatpush1.msra.mxu0 0.0
    %267 = vmatprep.subr.mxu0 0.0
    %268 = vmatpush1.msra.mxu0 0.0
    %269 = vmatprep.subr.mxu0 0.0
    %270 = vmatpush1.msra.mxu0 0.0
    %271 = vmatprep.subr.mxu0 0.0
    %272 = vmatpush1.msra.mxu0 0.0
    %273 = vmatprep.subr.mxu0 0.0
    %274 = vmatpush1.msra.mxu0 0.0
    %275 = vmatprep.subr.mxu0 0.0
    %276 = vmatpush1.msra.mxu0 0.0
    %277 = vmatprep.subr.mxu0 0.0
    %278 = vmatpush1.msra.mxu0 0.0
    %279 = vmatprep.subr.mxu0 0.0
    %280 = vmatpush1.msra.mxu0 0.0
    %281 = vmatprep.subr.mxu0 0.0
    %282 = vmatpush1.msra.mxu0 0.0
    %283 = vmatprep.subr.mxu0 0.0
    %284 = vmatpush1.msra.mxu0 0.0
    %285 = vmatprep.subr.mxu0 0.0
    %286 = vmatpush1.msra.mxu0 0.0
    %287 = vmatprep.subr.mxu0 0.0
    %288 = vmatpush1.msra.mxu0 0.0
    %289 = vmatprep.subr.mxu0 0.0
    %290 = vmatpush1.msra.mxu0 0.0
    %291 = vmatprep.subr.mxu0 0.0
    %292 = vmatpush1.msra.mxu0 0.0
    %293 = vmatprep.subr.mxu0 0.0
    %294 = vmatpush1.msra.mxu0 0.0
    %295 = vmatprep.subr.mxu0 0.0
    %296 = vmatpush1.msra.mxu0 0.0
    %297 = vmatprep.subr.mxu0 0.0
    %298 = vmatpush1.msra.mxu0 0.0
    %299 = vmatprep.subr.mxu0 0.0
    %300 = vmatpush1.msra.mxu0 0.0
    %301 = vmatprep.subr.mxu0 0.0
    %302 = vmatpush1.msra.mxu0 0.0
    %303 = vmatprep.mubr.f32.mxu0 0.0
    %304 = vmatmul.mubr.f32.gmra.mrb[0].mxu0 %v232
    %v305 = vpop.f32.mrb[0].mxu0
    %v306 = vadd.f32 0.0, %v305
    %v307 = vpop.f32.mrb[0].mxu0
    %v308 = vadd.f32 0.0, %v307
    %309 = vdwg.mxu0
    %v310 = vld [vmem:[%s2] sm:$0xff]
    %vm311 = vcmask 392192
    %v312 = vsel %vm311, %v308, 0.0
    %v313 = vadd.f32 %v306, %v312
    %314 = vadd.xlane.f32.xlu0 %v313
    %v315 = vpop.xlane.xlu0 %314
    %v316 = vmul.f32 %v315, 0.0056818184
    %v317 = vmul.f32 %v306, %v306
    %v318 = vmul.f32 %v308, %v308
    %v319 = vsel %vm311, %v318, 0.0
    %v320 = vadd.f32 %v317, %v319
    %321 = vadd.xlane.f32.xlu0 %v320
    %v322 = vpop.xlane.xlu0 %321
    %v323 = vmul.f32 %v322, 0.0056818184
    %v324 = vmul.f32 %v316, %v316
    %v325 = vsub.f32 %v323, %v324
    %v326 = vmax.f32 %v325, 0.0
    %v327 = vadd.f32 %v326, 1e-05
    %v328 = vrsqrt.pop %v327
    %v329 = vmul.f32 %v310, %v328
    %331 = vset.pattern.permute.xlu0 0
    %332 = vperm.xlu0 %331, %v329
    %v333 = vpop.permute.xlu0 %332
    %v335 = vmul.f32 %v306, %v333
    %v336 = vmul.f32 %v308, %v333
    %v337 = vmul.f32 %v316, %v329
    %339 = vrot.lane.b32.xlu0 %v337, 1
    %v340 = vpop.permute.xlu0 %339
    %v342 = vsub.f32 %v310, %v340
    %344 = vset.pattern.permute.xlu0 1
    %345 = vperm.xlu0 %344, %v342
    %v346 = vpop.permute.xlu0 %345
    %v348 = vadd.f32 %v335, %v346
    %v349 = vadd.f32 %v336, %v346
    %vm350 = vcmp.gt.f32.partialorder %v348, 0.0
    %vm351 = vcmp.gt.f32.partialorder %v349, 0.0
    %v352 = vmul.f32 %v348, 0.01
    %v353 = vmul.f32 %v349, 0.01
    %v354 = vsel %vm350, %v348, %v352
    %v355 = vsel %vm351, %v349, %v353
    %357 = vrot.lane.b32.xlu0 %v354, 127
    %v358 = vpop.permute.xlu0 %357
    %360 = vrot.lane.b32.xlu0 %v354, 126
    %v361 = vpop.permute.xlu0 %360
    %363 = vrot.lane.b32.xlu0 %v354, 125
    %v364 = vpop.permute.xlu0 %363
    %366 = vrot.lane.b32.xlu0 %v354, 124
    %v367 = vpop.permute.xlu0 %366
    %369 = vrot.lane.b32.xlu0 %v354, 123
    %v370 = vpop.permute.xlu0 %369
    %372 = vrot.lane.b32.xlu0 %v354, 122
    %v373 = vpop.permute.xlu0 %372
    %375 = vrot.lane.b32.xlu0 %v354, 121
    %v376 = vpop.permute.xlu0 %375
    %378 = vrot.lane.b32.xlu0 %v354, 120
    %v379 = vpop.permute.xlu0 %378
    %382 = vrot.lane.b32.xlu0 %v355, 127
    %v383 = vpop.permute.xlu0 %382
    %v384 = vsel %vm105, %v358, %v383
    %385 = vrot.lane.b32.xlu0 %v355, 126
    %v386 = vpop.permute.xlu0 %385
    %v387 = vsel %vm111, %v361, %v386
    %388 = vrot.lane.b32.xlu0 %v355, 125
    %v389 = vpop.permute.xlu0 %388
    %v390 = vsel %vm117, %v364, %v389
    %391 = vrot.lane.b32.xlu0 %v355, 124
    %v392 = vpop.permute.xlu0 %391
    %v393 = vsel %vm123, %v367, %v392
    %394 = vrot.lane.b32.xlu0 %v355, 123
    %v395 = vpop.permute.xlu0 %394
    %v396 = vsel %vm129, %v370, %v395
    %397 = vrot.lane.b32.xlu0 %v355, 122
    %v398 = vpop.permute.xlu0 %397
    %v399 = vsel %vm135, %v373, %v398
    %400 = vrot.lane.b32.xlu0 %v355, 121
    %v401 = vpop.permute.xlu0 %400
    %v402 = vsel %vm141, %v376, %v401
    %403 = vrot.lane.b32.xlu0 %v355, 120
    %v404 = vpop.permute.xlu0 %403
    %v405 = vsel %vm147, %v379, %v404
    %406 = vrot.lane.b32.xlu0 %v384, 120
    %v407 = vpop.permute.xlu0 %406
    %408 = vrot.lane.b32.xlu0 %v383, 120
    %v409 = vpop.permute.xlu0 %408
    %410 = vrot.lane.b32.xlu0 %v387, 120
    %v411 = vpop.permute.xlu0 %410
    %412 = vrot.lane.b32.xlu0 %v386, 120
    %v413 = vpop.permute.xlu0 %412
    %414 = vrot.lane.b32.xlu0 %v390, 120
    %v415 = vpop.permute.xlu0 %414
    %416 = vrot.lane.b32.xlu0 %v389, 120
    %v417 = vpop.permute.xlu0 %416
    %418 = vrot.lane.b32.xlu0 %v393, 120
    %v419 = vpop.permute.xlu0 %418
    %420 = vrot.lane.b32.xlu0 %v392, 120
    %v421 = vpop.permute.xlu0 %420
    %422 = vrot.lane.b32.xlu0 %v396, 120
    %v423 = vpop.permute.xlu0 %422
    %424 = vrot.lane.b32.xlu0 %v395, 120
    %v425 = vpop.permute.xlu0 %424
    %426 = vrot.lane.b32.xlu0 %v399, 120
    %v427 = vpop.permute.xlu0 %426
    %428 = vrot.lane.b32.xlu0 %v398, 120
    %v429 = vpop.permute.xlu0 %428
    %430 = vrot.lane.b32.xlu0 %v402, 120
    %v431 = vpop.permute.xlu0 %430
    %432 = vrot.lane.b32.xlu0 %v401, 120
    %v433 = vpop.permute.xlu0 %432
    %434 = vrot.lane.b32.xlu0 %v405, 120
    %v435 = vpop.permute.xlu0 %434
    %436 = vrot.lane.b32.xlu0 %v404, 120
    %v437 = vpop.permute.xlu0 %436
    %v438 = vsel %vm147, %v407, %v409
    %v439 = vsel %vm147, %v411, %v413
    %v440 = vsel %vm147, %v415, %v417
    %v441 = vsel %vm147, %v419, %v421
    %v442 = vsel %vm147, %v423, %v425
    %v443 = vsel %vm147, %v427, %v429
    %v444 = vsel %vm147, %v431, %v433
    %v445 = vsel %vm147, %v435, %v437
    %vm464 = vcmask 654336
    %v465 = vsel %vm464, %v354, %v405
    %v466 = vsel %vm464, %v358, %v438
    %v467 = vsel %vm464, %v361, %v439
    %v468 = vsel %vm464, %v364, %v440
    %v469 = vsel %vm464, %v367, %v441
    %v470 = vsel %vm464, %v370, %v442
    %v471 = vsel %vm464, %v373, %v443
    %v472 = vsel %vm464, %v376, %v444
    %v473 = vsel %vm464, %v379, %v445
    %v474 = vld [vmem:[#allocation2 + $0x18] sm:$0xff]
    %v475 = vld [vmem:[#allocation2 + $0x30] sm:$0xff]
    %vm476 = vcmask 588800
    %v478 = vsel %vm476, %v474, 0
    %v481 = vsel %vm476, %v475, 0
    %483 = vmatprep.subr.mxu0 %v404
    %484 = vmatpush1.msra.mxu0 %v465
    %485 = vmatprep.subr.mxu0 %v409
    %486 = vmatpush1.msra.mxu0 %v466
    %487 = vmatprep.subr.mxu0 %v413
    %488 = vmatpush1.msra.mxu0 %v467
    %489 = vmatprep.subr.mxu0 %v417
    %490 = vmatpush1.msra.mxu0 %v468
    %491 = vmatprep.subr.mxu0 %v421
    %492 = vmatpush1.msra.mxu0 %v469
    %493 = vmatprep.subr.mxu0 %v425
    %494 = vmatpush1.msra.mxu0 %v470
    %495 = vmatprep.subr.mxu0 %v429
    %496 = vmatpush1.msra.mxu0 %v471
    %497 = vmatprep.subr.mxu0 %v433
    %498 = vmatpush1.msra.mxu0 %v472
    %499 = vmatprep.subr.mxu0 %v437
    %500 = vmatpush1.msra.mxu0 %v473
    %501 = vmatprep.subr.mxu0 0.0
    %502 = vmatpush1.msra.mxu0 0.0
    %503 = vmatprep.subr.mxu0 0.0
    %504 = vmatpush1.msra.mxu0 0.0
    %505 = vmatprep.subr.mxu0 0.0
    %506 = vmatpush1.msra.mxu0 0.0
    %507 = vmatprep.subr.mxu0 0.0
    %508 = vmatpush1.msra.mxu0 0.0
    %509 = vmatprep.subr.mxu0 0.0
    %510 = vmatpush1.msra.mxu0 0.0
    %511 = vmatprep.subr.mxu0 0.0
    %512 = vmatpush1.msra.mxu0 0.0
    %513 = vmatprep.subr.mxu0 0.0
    %514 = vmatpush1.msra.mxu0 0.0
    %515 = vmatprep.subr.mxu0 0.0
    %516 = vmatpush1.msra.mxu0 0.0
    %517 = vmatprep.subr.mxu0 0.0
    %518 = vmatpush1.msra.mxu0 0.0
    %519 = vmatprep.subr.mxu0 0.0
    %520 = vmatpush1.msra.mxu0 0.0
    %521 = vmatprep.subr.mxu0 0.0
    %522 = vmatpush1.msra.mxu0 0.0
    %523 = vmatprep.subr.mxu0 0.0
    %524 = vmatpush1.msra.mxu0 0.0
    %525 = vmatprep.subr.mxu0 0.0
    %526 = vmatpush1.msra.mxu0 0.0
    %527 = vmatprep.subr.mxu0 0.0
    %528 = vmatpush1.msra.mxu0 0.0
    %529 = vmatprep.subr.mxu0 0.0
    %530 = vmatpush1.msra.mxu0 0.0
    %531 = vmatprep.subr.mxu0 0.0
    %532 = vmatpush1.msra.mxu0 0.0
    %533 = vmatprep.subr.mxu0 0.0
    %534 = vmatpush1.msra.mxu0 0.0
    %535 = vmatprep.subr.mxu0 0.0
    %536 = vmatpush1.msra.mxu0 0.0
    %537 = vmatprep.subr.mxu0 0.0
    %538 = vmatpush1.msra.mxu0 0.0
    %539 = vmatprep.subr.mxu0 0.0
    %540 = vmatpush1.msra.mxu0 0.0
    %541 = vmatprep.subr.mxu0 0.0
    %542 = vmatpush1.msra.mxu0 0.0
    %543 = vmatprep.subr.mxu0 0.0
    %544 = vmatpush1.msra.mxu0 0.0
    %545 = vmatprep.subr.mxu0 0.0
    %546 = vmatpush1.msra.mxu0 0.0
    %547 = vmatprep.mubr.f32.mxu0 0.0
    %548 = vmatmul.mubr.f32.gmra.mrb[0].mxu0 %v478
    %v549 = vpop.f32.mrb[0].mxu0
    %v550 = vadd.f32 0.0, %v549
    %v551 = vpop.f32.mrb[0].mxu0
    %v552 = vadd.f32 0.0, %v551
    %553 = vmatprep.mubr.f32.mxu0 0.0
    %554 = vmatmul.mubr.f32.gmra.mrb[0].mxu0 %v481
    %v555 = vpop.f32.mrb[0].mxu0
    %v556 = vadd.f32 0.0, %v555
    %v557 = vpop.f32.mrb[0].mxu0
    %v558 = vadd.f32 0.0, %v557
    %559 = vdwg.mxu0
    %v560 = vld [vmem:[%s2 + $0x8] sm:$0xff]
    %v561 = vld [vmem:[%s2 + $0x10] sm:$0xff]
    %vm562 = vcmask 261120
    %v563 = vsel %vm562, %v552, 0.0
    %v564 = vadd.f32 %v550, %v563
    %565 = vadd.xlane.f32.xlu0 %v564
    %v566 = vpop.xlane.xlu0 %565
    %v567 = vsel %vm562, %v558, 0.0
    %v568 = vadd.f32 %v556, %v567
    %569 = vadd.xlane.f32.xlu0 %v568
    %v570 = vpop.xlane.xlu0 %569
    %v571 = vmul.f32 %v566, 0.00625
    %v572 = vmul.f32 %v570, 0.00625
    %v573 = vmul.f32 %v550, %v550
    %v574 = vmul.f32 %v552, %v552
    %v575 = vmul.f32 %v556, %v556
    %v576 = vmul.f32 %v558, %v558
    %v577 = vsel %vm562, %v574, 0.0
    %v578 = vadd.f32 %v573, %v577
    %579 = vadd.xlane.f32.xlu0 %v578
    %v580 = vpop.xlane.xlu0 %579
    %v581 = vsel %vm562, %v576, 0.0
    %v582 = vadd.f32 %v575, %v581
    %583 = vadd.xlane.f32.xlu0 %v582
    %v584 = vpop.xlane.xlu0 %583
    %v585 = vmul.f32 %v580, 0.00625
    %v586 = vmul.f32 %v584, 0.00625
    %v587 = vmul.f32 %v571, %v571
    %v588 = vmul.f32 %v572, %v572
    %v589 = vsub.f32 %v585, %v587
    %v590 = vsub.f32 %v586, %v588
    %v591 = vmax.f32 %v589, 0.0
    %v592 = vmax.f32 %v590, 0.0
    %v593 = vadd.f32 %v591, 1e-05
    %v594 = vadd.f32 %v592, 1e-05
    %v595 = vrsqrt.pop %v593
    %v596 = vrsqrt.pop %v594
    %v597 = vmul.f32 %v560, %v595
    %v598 = vmul.f32 %v561, %v596
    %600 = vset.pattern.permute.xlu0 0
    %601 = vperm.xlu0 %600, %v597
    %v602 = vpop.permute.xlu0 %601
    %605 = vset.pattern.permute.xlu0 0
    %606 = vperm.xlu0 %605, %v598
    %v607 = vpop.permute.xlu0 %606
    %v609 = vmul.f32 %v550, %v602
    %v610 = vmul.f32 %v552, %v602
    %v611 = vmul.f32 %v556, %v607
    %v612 = vmul.f32 %v558, %v607
    %v613 = vmul.f32 %v571, %v597
    %v614 = vmul.f32 %v572, %v598
    %617 = vrot.lane.b32.xlu0 %v613, 1
    %v618 = vpop.permute.xlu0 %617
    %619 = vrot.lane.b32.xlu0 %v614, 1
    %v620 = vpop.permute.xlu0 %619
    %v623 = vsub.f32 %v560, %v618
    %v624 = vsub.f32 %v561, %v620
    %626 = vset.pattern.permute.xlu0 1
    %627 = vperm.xlu0 %626, %v623
    %v628 = vpop.permute.xlu0 %627
    %631 = vset.pattern.permute.xlu0 1
    %632 = vperm.xlu0 %631, %v624
    %v633 = vpop.permute.xlu0 %632
    %v635 = vadd.f32 %v609, %v628
    %v636 = vadd.f32 %v610, %v628
    %v637 = vadd.f32 %v611, %v633
    %v638 = vadd.f32 %v612, %v633
    %vm639 = vcmp.gt.f32.partialorder %v635, 0.0
    %vm640 = vcmp.gt.f32.partialorder %v636, 0.0
    %vm641 = vcmp.gt.f32.partialorder %v637, 0.0
    %vm642 = vcmp.gt.f32.partialorder %v638, 0.0
    %v643 = vmul.f32 %v635, 0.01
    %v644 = vmul.f32 %v636, 0.01
    %v645 = vmul.f32 %v637, 0.01
    %v646 = vmul.f32 %v638, 0.01
    %v647 = vsel %vm639, %v635, %v643
    %v648 = vsel %vm640, %v636, %v644
    %v649 = vsel %vm641, %v637, %v645
    %v650 = vsel %vm642, %v638, %v646
    %653 = vrot.lane.b32.xlu0 %v647, 127
    %v654 = vpop.permute.xlu0 %653
    %655 = vrot.lane.b32.xlu0 %v649, 127
    %v656 = vpop.permute.xlu0 %655
    %659 = vrot.lane.b32.xlu0 %v647, 126
    %v660 = vpop.permute.xlu0 %659
    %661 = vrot.lane.b32.xlu0 %v649, 126
    %v662 = vpop.permute.xlu0 %661
    %665 = vrot.lane.b32.xlu0 %v647, 125
    %v666 = vpop.permute.xlu0 %665
    %667 = vrot.lane.b32.xlu0 %v649, 125
    %v668 = vpop.permute.xlu0 %667
    %671 = vrot.lane.b32.xlu0 %v647, 124
    %v672 = vpop.permute.xlu0 %671
    %673 = vrot.lane.b32.xlu0 %v649, 124
    %v674 = vpop.permute.xlu0 %673
    %679 = vrot.lane.b32.xlu0 %v648, 127
    %v680 = vpop.permute.xlu0 %679
    %681 = vrot.lane.b32.xlu0 %v650, 127
    %v682 = vpop.permute.xlu0 %681
    %v683 = vsel %vm105, %v654, %v680
    %v684 = vsel %vm105, %v656, %v682
    %685 = vrot.lane.b32.xlu0 %v648, 126
    %v686 = vpop.permute.xlu0 %685
    %687 = vrot.lane.b32.xlu0 %v650, 126
    %v688 = vpop.permute.xlu0 %687
    %v689 = vsel %vm111, %v660, %v686
    %v690 = vsel %vm111, %v662, %v688
    %691 = vrot.lane.b32.xlu0 %v648, 125
    %v692 = vpop.permute.xlu0 %691
    %693 = vrot.lane.b32.xlu0 %v650, 125
    %v694 = vpop.permute.xlu0 %693
    %v695 = vsel %vm117, %v666, %v692
    %v696 = vsel %vm117, %v668, %v694
    %697 = vrot.lane.b32.xlu0 %v648, 124
    %v698 = vpop.permute.xlu0 %697
    %699 = vrot.lane.b32.xlu0 %v650, 124
    %v700 = vpop.permute.xlu0 %699
    %v701 = vsel %vm123, %v672, %v698
    %v702 = vsel %vm123, %v674, %v700
    %703 = vrot.lane.b32.xlu0 %v683, 124
    %v704 = vpop.permute.xlu0 %703
    %705 = vrot.lane.b32.xlu0 %v680, 124
    %v706 = vpop.permute.xlu0 %705
    %707 = vrot.lane.b32.xlu0 %v684, 124
    %v708 = vpop.permute.xlu0 %707
    %709 = vrot.lane.b32.xlu0 %v682, 124
    %v710 = vpop.permute.xlu0 %709
    %711 = vrot.lane.b32.xlu0 %v689, 124
    %v712 = vpop.permute.xlu0 %711
    %713 = vrot.lane.b32.xlu0 %v686, 124
    %v714 = vpop.permute.xlu0 %713
    %715 = vrot.lane.b32.xlu0 %v690, 124
    %v716 = vpop.permute.xlu0 %715
    %717 = vrot.lane.b32.xlu0 %v688, 124
    %v718 = vpop.permute.xlu0 %717
    %719 = vrot.lane.b32.xlu0 %v695, 124
    %v720 = vpop.permute.xlu0 %719
    %721 = vrot.lane.b32.xlu0 %v692, 124
    %v722 = vpop.permute.xlu0 %721
    %723 = vrot.lane.b32.xlu0 %v696, 124
    %v724 = vpop.permute.xlu0 %723
    %725 = vrot.lane.b32.xlu0 %v694, 124
    %v726 = vpop.permute.xlu0 %725
    %727 = vrot.lane.b32.xlu0 %v701, 124
    %v728 = vpop.permute.xlu0 %727
    %729 = vrot.lane.b32.xlu0 %v698, 124
    %v730 = vpop.permute.xlu0 %729
    %731 = vrot.lane.b32.xlu0 %v702, 124
    %v732 = vpop.permute.xlu0 %731
    %733 = vrot.lane.b32.xlu0 %v700, 124
    %v734 = vpop.permute.xlu0 %733
    %v735 = vsel %vm123, %v704, %v706
    %v736 = vsel %vm123, %v708, %v710
    %v737 = vsel %vm123, %v712, %v714
    %v738 = vsel %vm123, %v716, %v718
    %v739 = vsel %vm123, %v720, %v722
    %v740 = vsel %vm123, %v724, %v726
    %v741 = vsel %vm123, %v728, %v730
    %v742 = vsel %vm123, %v732, %v734
    %vm763 = vcmask 621568
    %v764 = vsel %vm763, %v647, %v701
    %v765 = vsel %vm763, %v649, %v702
    %v766 = vsel %vm763, %v654, %v735
    %v767 = vsel %vm763, %v656, %v736
    %v768 = vsel %vm763, %v660, %v737
    %v769 = vsel %vm763, %v662, %v738
    %v770 = vsel %vm763, %v666, %v739
    %v771 = vsel %vm763, %v668, %v740
    %v772 = vsel %vm763, %v672, %v741
    %v773 = vsel %vm763, %v674, %v742
    %v774 = vld [vmem:[#allocation2 + $0x48] sm:$0xff]
    %v775 = vld [vmem:[#allocation2 + $0x60] sm:$0xff]
    %v776 = vld [vmem:[#allocation2 + $0x78] sm:$0xff]
    %v777 = vld [vmem:[#allocation2 + $0x90] sm:$0xff]
    %v779 = vsel %vm464, %v774, 0
    %v782 = vsel %vm464, %v775, 0
    %v785 = vsel %vm464, %v776, 0
    %v788 = vsel %vm464, %v777, 0
    %790 = vmatprep.subr.mxu0 %v698
    %791 = vmatpush1.msra.mxu0 %v764
    %792 = vmatprep.subr.mxu0 %v700
    %793 = vmatpush1.msra.mxu0 %v765
    %794 = vmatprep.subr.mxu0 %v706
    %795 = vmatpush1.msra.mxu0 %v766
    %796 = vmatprep.subr.mxu0 %v710
    %797 = vmatpush1.msra.mxu0 %v767
    %798 = vmatprep.subr.mxu0 %v714
    %799 = vmatpush1.msra.mxu0 %v768
    %800 = vmatprep.subr.mxu0 %v718
    %801 = vmatpush1.msra.mxu0 %v769
    %802 = vmatprep.subr.mxu0 %v722
    %803 = vmatpush1.msra.mxu0 %v770
    %804 = vmatprep.subr.mxu0 %v726
    %805 = vmatpush1.msra.mxu0 %v771
    %806 = vmatprep.subr.mxu0 %v730
    %807 = vmatpush1.msra.mxu0 %v772
    %808 = vmatprep.subr.mxu0 %v734
    %809 = vmatpush1.msra.mxu0 %v773
    %810 = vmatprep.subr.mxu0 0.0
    %811 = vmatpush1.msra.mxu0 0.0
    %812 = vmatprep.subr.mxu0 0.0
    %813 = vmatpush1.msra.mxu0 0.0
    %814 = vmatprep.subr.mxu0 0.0
    %815 = vmatpush1.msra.mxu0 0.0
    %816 = vmatprep.subr.mxu0 0.0
    %817 = vmatpush1.msra.mxu0 0.0
    %818 = vmatprep.subr.mxu0 0.0
    %819 = vmatpush1.msra.mxu0 0.0
    %820 = vmatprep.subr.mxu0 0.0
    %821 = vmatpush1.msra.mxu0 0.0
    %822 = vmatprep.subr.mxu0 0.0
    %823 = vmatpush1.msra.mxu0 0.0
    %824 = vmatprep.subr.mxu0 0.0
    %825 = vmatpush1.msra.mxu0 0.0
    %826 = vmatprep.subr.mxu0 0.0
    %827 = vmatpush1.msra.mxu0 0.0
    %828 = vmatprep.subr.mxu0 0.0
    %829 = vmatpush1.msra.mxu0 0.0
    %830 = vmatprep.subr.mxu0 0.0
    %831 = vmatpush1.msra.mxu0 0.0
    %832 = vmatprep.subr.mxu0 0.0
    %833 = vmatpush1.msra.mxu0 0.0
    %834 = vmatprep.subr.mxu0 0.0
    %835 = vmatpush1.msra.mxu0 0.0
    %836 = vmatprep.subr.mxu0 0.0
    %837 = vmatpush1.msra.mxu0 0.0
    %838 = vmatprep.subr.mxu0 0.0
    %839 = vmatpush1.msra.mxu0 0.0
    %840 = vmatprep.subr.mxu0 0.0
    %841 = vmatpush1.msra.mxu0 0.0
    %842 = vmatprep.subr.mxu0 0.0
    %843 = vmatpush1.msra.mxu0 0.0
    %844 = vmatprep.subr.mxu0 0.0
    %845 = vmatpush1.msra.mxu0 0.0
    %846 = vmatprep.subr.mxu0 0.0
    %847 = vmatpush1.msra.mxu0 0.0
    %848 = vmatprep.subr.mxu0 0.0
    %849 = vmatpush1.msra.mxu0 0.0
    %850 = vmatprep.subr.mxu0 0.0
    %851 = vmatpush1.msra.mxu0 0.0
    %852 = vmatprep.subr.mxu0 0.0
    %853 = vmatpush1.msra.mxu0 0.0
    %854 = vmatprep.mubr.f32.mxu0 0.0
    %855 = vmatmul.mubr.f32.gmra.mrb[0].mxu0 %v779
    %v856 = vpop.f32.mrb[0].mxu0
    %v857 = vadd.f32 0.0, %v856
    %v858 = vpop.f32.mrb[0].mxu0
    %v859 = vadd.f32 0.0, %v858
    %860 = vmatprep.mubr.f32.mxu0 0.0
    %861 = vmatmul.mubr.f32.gmra.mrb[0].mxu0 %v782
    %v862 = vpop.f32.mrb[0].mxu0
    %v863 = vadd.f32 0.0, %v862
    %v864 = vpop.f32.mrb[0].mxu0
    %v865 = vadd.f32 0.0, %v864
    %866 = vmatprep.mubr.f32.mxu0 0.0
    %867 = vmatmul.mubr.f32.gmra.mrb[0].mxu0 %v785
    %v868 = vpop.f32.mrb[0].mxu0
    %v869 = vadd.f32 0.0, %v868
    %v870 = vpop.f32.mrb[0].mxu0
    %v871 = vadd.f32 0.0, %v870
    %872 = vmatprep.mubr.f32.mxu0 0.0
    %873 = vmatmul.mubr.f32.gmra.mrb[0].mxu0 %v788
    %v874 = vpop.f32.mrb[0].mxu0
    %v875 = vadd.f32 0.0, %v874
    %v876 = vpop.f32.mrb[0].mxu0
    %v877 = vadd.f32 0.0, %v876
    %878 = vdwg.mxu0
    %v879 = vld [vmem:[%s2 + $0x18] sm:$0xff]
    %v880 = vld [vmem:[%s2 + $0x20] sm:$0xff]
    %v881 = vld [vmem:[%s2 + $0x28] sm:$0xff]
    %v882 = vld [vmem:[%s2 + $0x30] sm:$0xff]
    %vm883 = vcmask 195584
    %v884 = vsel %vm883, %v859, 0.0
    %v885 = vadd.f32 %v857, %v884
    %886 = vadd.xlane.f32.xlu0 %v885
    %v887 = vpop.xlane.xlu0 %886
    %v888 = vsel %vm883, %v865, 0.0
    %v889 = vadd.f32 %v863, %v888
    %890 = vadd.xlane.f32.xlu0 %v889
    %v891 = vpop.xlane.xlu0 %890
    %v892 = vsel %vm883, %v871, 0.0
    %v893 = vadd.f32 %v869, %v892
    %894 = vadd.xlane.f32.xlu0 %v893
    %v895 = vpop.xlane.xlu0 %894
    %v896 = vsel %vm883, %v877, 0.0
    %v897 = vadd.f32 %v875, %v896
    %898 = vadd.xlane.f32.xlu0 %v897
    %v899 = vpop.xlane.xlu0 %898
    %v900 = vmul.f32 %v887, 0.0065789474
    %v901 = vmul.f32 %v891, 0.0065789474
    %v902 = vmul.f32 %v895, 0.0065789474
    %v903 = vmul.f32 %v899, 0.0065789474
    %v904 = vmul.f32 %v857, %v857
    %v905 = vmul.f32 %v859, %v859
    %v906 = vmul.f32 %v863, %v863
    %v907 = vmul.f32 %v865, %v865
    %v908 = vmul.f32 %v869, %v869
    %v909 = vmul.f32 %v871, %v871
    %v910 = vmul.f32 %v875, %v875
    %v911 = vmul.f32 %v877, %v877
    %v912 = vsel %vm883, %v905, 0.0
    %v913 = vadd.f32 %v904, %v912
    %914 = vadd.xlane.f32.xlu0 %v913
    %v915 = vpop.xlane.xlu0 %914
    %v916 = vsel %vm883, %v907, 0.0
    %v917 = vadd.f32 %v906, %v916
    %918 = vadd.xlane.f32.xlu0 %v917
    %v919 = vpop.xlane.xlu0 %918
    %v920 = vsel %vm883, %v909, 0.0
    %v921 = vadd.f32 %v908, %v920
    %922 = vadd.xlane.f32.xlu0 %v921
    %v923 = vpop.xlane.xlu0 %922
    %v924 = vsel %vm883, %v911, 0.0
    %v925 = vadd.f32 %v910, %v924
    %926 = vadd.xlane.f32.xlu0 %v925
    %v927 = vpop.xlane.xlu0 %926
    %v928 = vmul.f32 %v915, 0.0065789474
    %v929 = vmul.f32 %v919, 0.0065789474
    %v930 = vmul.f32 %v923, 0.0065789474
    %v931 = vmul.f32 %v927, 0.0065789474
    %v932 = vmul.f32 %v900, %v900
    %v933 = vmul.f32 %v901, %v901
    %v934 = vmul.f32 %v902, %v902
    %v935 = vmul.f32 %v903, %v903
    %v936 = vsub.f32 %v928, %v932
    %v937 = vsub.f32 %v929, %v933
    %v938 = vsub.f32 %v930, %v934
    %v939 = vsub.f32 %v931, %v935
    %v940 = vmax.f32 %v936, 0.0
    %v941 = vmax.f32 %v937, 0.0
    %v942 = vmax.f32 %v938, 0.0
    %v943 = vmax.f32 %v939, 0.0
    %v944 = vadd.f32 %v940, 1e-05
    %v945 = vadd.f32 %v941, 1e-05
    %v946 = vadd.f32 %v942, 1e-05
    %v947 = vadd.f32 %v943, 1e-05
    %v948 = vrsqrt.pop %v944
    %v949 = vrsqrt.pop %v945
    %v950 = vrsqrt.pop %v946
    %v951 = vrsqrt.pop %v947
    %v952 = vmul.f32 %v879, %v948
    %v953 = vmul.f32 %v880, %v949
    %v954 = vmul.f32 %v881, %v950
    %v955 = vmul.f32 %v882, %v951
    %957 = vset.pattern.permute.xlu0 0
    %958 = vperm.xlu0 %957, %v952
    %v959 = vpop.permute.xlu0 %958
    %962 = vset.pattern.permute.xlu0 0
    %963 = vperm.xlu0 %962, %v953
    %v964 = vpop.permute.xlu0 %963
    %967 = vset.pattern.permute.xlu0 0
    %968 = vperm.xlu0 %967, %v954
    %v969 = vpop.permute.xlu0 %968
    %972 = vset.pattern.permute.xlu0 0
    %973 = vperm.xlu0 %972, %v955
    %v974 = vpop.permute.xlu0 %973
    %v976 = vmul.f32 %v857, %v959
    %v977 = vmul.f32 %v859, %v959
    %v978 = vmul.f32 %v863, %v964
    %v979 = vmul.f32 %v865, %v964
    %v980 = vmul.f32 %v869, %v969
    %v981 = vmul.f32 %v871, %v969
    %v982 = vmul.f32 %v875, %v974
    %v983 = vmul.f32 %v877, %v974
    %v984 = vmul.f32 %v900, %v952
    %v985 = vmul.f32 %v901, %v953
    %v986 = vmul.f32 %v902, %v954
    %v987 = vmul.f32 %v903, %v955
    %992 = vrot.lane.b32.xlu0 %v984, 1
    %v993 = vpop.permute.xlu0 %992
    %994 = vrot.lane.b32.xlu0 %v985, 1
    %v995 = vpop.permute.xlu0 %994
    %996 = vrot.lane.b32.xlu0 %v986, 1
    %v997 = vpop.permute.xlu0 %996
    %998 = vrot.lane.b32.xlu0 %v987, 1
    %v999 = vpop.permute.xlu0 %998
    %v1004 = vsub.f32 %v879, %v993
    %v1005 = vsub.f32 %v880, %v995
    %v1006 = vsub.f32 %v881, %v997
    %v1007 = vsub.f32 %v882, %v999
    %1009 = vset.pattern.permute.xlu0 1
    %1010 = vperm.xlu0 %1009, %v1004
    %v1011 = vpop.permute.xlu0 %1010
    %1014 = vset.pattern.permute.xlu0 1
    %1015 = vperm.xlu0 %1014, %v1005
    %v1016 = vpop.permute.xlu0 %1015
    %1019 = vset.pattern.permute.xlu0 1
    %1020 = vperm.xlu0 %1019, %v1006
    %v1021 = vpop.permute.xlu0 %1020
    %1024 = vset.pattern.permute.xlu0 1
    %1025 = vperm.xlu0 %1024, %v1007
    %v1026 = vpop.permute.xlu0 %1025
    %v1028 = vadd.f32 %v976, %v1011
    %v1029 = vadd.f32 %v977, %v1011
    %v1030 = vadd.f32 %v978, %v1016
    %v1031 = vadd.f32 %v979, %v1016
    %v1032 = vadd.f32 %v980, %v1021
    %v1033 = vadd.f32 %v981, %v1021
    %v1034 = vadd.f32 %v982, %v1026
    %v1035 = vadd.f32 %v983, %v1026
    %vm1036 = vcmp.gt.f32.partialorder %v1028, 0.0
    %vm1037 = vcmp.gt.f32.partialorder %v1029, 0.0
    %vm1038 = vcmp.gt.f32.partialorder %v1030, 0.0
    %vm1039 = vcmp.gt.f32.partialorder %v1031, 0.0
    %vm1040 = vcmp.gt.f32.partialorder %v1032, 0.0
    %vm1041 = vcmp.gt.f32.partialorder %v1033, 0.0
    %vm1042 = vcmp.gt.f32.partialorder %v1034, 0.0
    %vm1043 = vcmp.gt.f32.partialorder %v1035, 0.0
    %v1044 = vmul.f32 %v1028, 0.01
    %v1045 = vmul.f32 %v1029, 0.01
    %v1046 = vmul.f32 %v1030, 0.01
    %v1047 = vmul.f32 %v1031, 0.01
    %v1048 = vmul.f32 %v1032, 0.01
    %v1049 = vmul.f32 %v1033, 0.01
    %v1050 = vmul.f32 %v1034, 0.01
    %v1051 = vmul.f32 %v1035, 0.01
    %v1052 = vsel %vm1036, %v1028, %v1044
    %v1053 = vsel %vm1037, %v1029, %v1045
    %v1054 = vsel %vm1038, %v1030, %v1046
    %v1055 = vsel %vm1039, %v1031, %v1047
    %v1056 = vsel %vm1040, %v1032, %v1048
    %v1057 = vsel %vm1041, %v1033, %v1049
    %v1058 = vsel %vm1042, %v1034, %v1050
    %v1059 = vsel %vm1043, %v1035, %v1051
    %1064 = vrot.lane.b32.xlu0 %v1052, 127
    %v1065 = vpop.permute.xlu0 %1064
    %1066 = vrot.lane.b32.xlu0 %v1054, 127
    %v1067 = vpop.permute.xlu0 %1066
    %1068 = vrot.lane.b32.xlu0 %v1056, 127
    %v1069 = vpop.permute.xlu0 %1068
    %1070 = vrot.lane.b32.xlu0 %v1058, 127
    %v1071 = vpop.permute.xlu0 %1070
    %1076 = vrot.lane.b32.xlu0 %v1052, 126
    %v1077 = vpop.permute.xlu0 %1076
    %1078 = vrot.lane.b32.xlu0 %v1054, 126
    %v1079 = vpop.permute.xlu0 %1078
    %1080 = vrot.lane.b32.xlu0 %v1056, 126
    %v1081 = vpop.permute.xlu0 %1080
    %1082 = vrot.lane.b32.xlu0 %v1058, 126
    %v1083 = vpop.permute.xlu0 %1082
    %1088 = vrot.lane.b32.xlu0 %v1052, 125
    %v1089 = vpop.permute.xlu0 %1088
    %1090 = vrot.lane.b32.xlu0 %v1054, 125
    %v1091 = vpop.permute.xlu0 %1090
    %1092 = vrot.lane.b32.xlu0 %v1056, 125
    %v1093 = vpop.permute.xlu0 %1092
    %1094 = vrot.lane.b32.xlu0 %v1058, 125
    %v1095 = vpop.permute.xlu0 %1094
    %1100 = vrot.lane.b32.xlu0 %v1052, 124
    %v1101 = vpop.permute.xlu0 %1100
    %1102 = vrot.lane.b32.xlu0 %v1054, 124
    %v1103 = vpop.permute.xlu0 %1102
    %1104 = vrot.lane.b32.xlu0 %v1056, 124
    %v1105 = vpop.permute.xlu0 %1104
    %1106 = vrot.lane.b32.xlu0 %v1058, 124
    %v1107 = vpop.permute.xlu0 %1106
    %1116 = vrot.lane.b32.xlu0 %v1053, 127
    %v1117 = vpop.permute.xlu0 %1116
    %1118 = vrot.lane.b32.xlu0 %v1055, 127
    %v1119 = vpop.permute.xlu0 %1118
    %1120 = vrot.lane.b32.xlu0 %v1057, 127
    %v1121 = vpop.permute.xlu0 %1120
    %1122 = vrot.lane.b32.xlu0 %v1059, 127
    %v1123 = vpop.permute.xlu0 %1122
    %v1124 = vsel %vm105, %v1065, %v1117
    %v1125 = vsel %vm105, %v1067, %v1119
    %v1126 = vsel %vm105, %v1069, %v1121
    %v1127 = vsel %vm105, %v1071, %v1123
    %1128 = vrot.lane.b32.xlu0 %v1053, 126
    %v1129 = vpop.permute.xlu0 %1128
    %1130 = vrot.lane.b32.xlu0 %v1055, 126
    %v1131 = vpop.permute.xlu0 %1130
    %1132 = vrot.lane.b32.xlu0 %v1057, 126
    %v1133 = vpop.permute.xlu0 %1132
    %1134 = vrot.lane.b32.xlu0 %v1059, 126
    %v1135 = vpop.permute.xlu0 %1134
    %v1136 = vsel %vm111, %v1077, %v1129
    %v1137 = vsel %vm111, %v1079, %v1131
    %v1138 = vsel %vm111, %v1081, %v1133
    %v1139 = vsel %vm111, %v1083, %v1135
    %1140 = vrot.lane.b32.xlu0 %v1053, 125
    %v1141 = vpop.permute.xlu0 %1140
    %1142 = vrot.lane.b32.xlu0 %v1055, 125
    %v1143 = vpop.permute.xlu0 %1142
    %1144 = vrot.lane.b32.xlu0 %v1057, 125
    %v1145 = vpop.permute.xlu0 %1144
    %1146 = vrot.lane.b32.xlu0 %v1059, 125
    %v1147 = vpop.permute.xlu0 %1146
    %v1148 = vsel %vm117, %v1089, %v1141
    %v1149 = vsel %vm117, %v1091, %v1143
    %v1150 = vsel %vm117, %v1093, %v1145
    %v1151 = vsel %vm117, %v1095, %v1147
    %1152 = vrot.lane.b32.xlu0 %v1053, 124
    %v1153 = vpop.permute.xlu0 %1152
    %1154 = vrot.lane.b32.xlu0 %v1055, 124
    %v1155 = vpop.permute.xlu0 %1154
    %1156 = vrot.lane.b32.xlu0 %v1057, 124
    %v1157 = vpop.permute.xlu0 %1156
    %1158 = vrot.lane.b32.xlu0 %v1059, 124
    %v1159 = vpop.permute.xlu0 %1158
    %v1160 = vsel %vm123, %v1101, %v1153
    %v1161 = vsel %vm123, %v1103, %v1155
    %v1162 = vsel %vm123, %v1105, %v1157
    %v1163 = vsel %vm123, %v1107, %v1159
    %1164 = vrot.lane.b32.xlu0 %v1124, 124
    %v1165 = vpop.permute.xlu0 %1164
    %1166 = vrot.lane.b32.xlu0 %v1117, 124
    %v1167 = vpop.permute.xlu0 %1166
    %1168 = vrot.lane.b32.xlu0 %v1125, 124
    %v1169 = vpop.permute.xlu0 %1168
    %1170 = vrot.lane.b32.xlu0 %v1119, 124
    %v1171 = vpop.permute.xlu0 %1170
    %1172 = vrot.lane.b32.xlu0 %v1126, 124
    %v1173 = vpop.permute.xlu0 %1172
    %1174 = vrot.lane.b32.xlu0 %v1121, 124
    %v1175 = vpop.permute.xlu0 %1174
    %1176 = vrot.lane.b32.xlu0 %v1127, 124
    %v1177 = vpop.permute.xlu0 %1176
    %1178 = vrot.lane.b32.xlu0 %v1123, 124
    %v1179 = vpop.permute.xlu0 %1178
    %1180 = vrot.lane.b32.xlu0 %v1136, 124
    %v1181 = vpop.permute.xlu0 %1180
    %1182 = vrot.lane.b32.xlu0 %v1129, 124
    %v1183 = vpop.permute.xlu0 %1182
    %1184 = vrot.lane.b32.xlu0 %v1137, 124
    %v1185 = vpop.permute.xlu0 %1184
    %1186 = vrot.lane.b32.xlu0 %v1131, 124
    %v1187 = vpop.permute.xlu0 %1186
    %1188 = vrot.lane.b32.xlu0 %v1138, 124
    %v1189 = vpop.permute.xlu0 %1188
    %1190 = vrot.lane.b32.xlu0 %v1133, 124
    %v1191 = vpop.permute.xlu0 %1190
    %1192 = vrot.lane.b32.xlu0 %v1139, 124
    %v1193 = vpop.permute.xlu0 %1192
    %1194 = vrot.lane.b32.xlu0 %v1135, 124
    %v1195 = vpop.permute.xlu0 %1194
    %1196 = vrot.lane.b32.xlu0 %v1148, 124
    %v1197 = vpop.permute.xlu0 %1196
    %1198 = vrot.lane.b32.xlu0 %v1141, 124
    %v1199 = vpop.permute.xlu0 %1198
    %1200 = vrot.lane.b32.xlu0 %v1149, 124
    %v1201 = vpop.permute.xlu0 %1200
    %1202 = vrot.lane.b32.xlu0 %v1143, 124
    %v1203 = vpop.permute.xlu0 %1202
    %1204 = vrot.lane.b32.xlu0 %v1150, 124
    %v1205 = vpop.permute.xlu0 %1204
    %1206 = vrot.lane.b32.xlu0 %v1145, 124
    %v1207 = vpop.permute.xlu0 %1206
    %1208 = vrot.lane.b32.xlu0 %v1151, 124
    %v1209 = vpop.permute.xlu0 %1208
    %1210 = vrot.lane.b32.xlu0 %v1147, 124
    %v1211 = vpop.permute.xlu0 %1210
    %1212 = vrot.lane.b32.xlu0 %v1160, 124
    %v1213 = vpop.permute.xlu0 %1212
    %1214 = vrot.lane.b32.xlu0 %v1153, 124
    %v1215 = vpop.permute.xlu0 %1214
    %1216 = vrot.lane.b32.xlu0 %v1161, 124
    %v1217 = vpop.permute.xlu0 %1216
    %1218 = vrot.lane.b32.xlu0 %v1155, 124
    %v1219 = vpop.permute.xlu0 %1218
    %1220 = vrot.lane.b32.xlu0 %v1162, 124
    %v1221 = vpop.permute.xlu0 %1220
    %1222 = vrot.lane.b32.xlu0 %v1157, 124
    %v1223 = vpop.permute.xlu0 %1222
    %1224 = vrot.lane.b32.xlu0 %v1163, 124
    %v1225 = vpop.permute.xlu0 %1224
    %1226 = vrot.lane.b32.xlu0 %v1159, 124
    %v1227 = vpop.permute.xlu0 %1226
    %v1228 = vsel %vm123, %v1165, %v1167
    %v1229 = vsel %vm123, %v1169, %v1171
    %v1230 = vsel %vm123, %v1173, %v1175
    %v1231 = vsel %vm123, %v1177, %v1179
    %v1232 = vsel %vm123, %v1181, %v1183
    %v1233 = vsel %vm123, %v1185, %v1187
    %v1234 = vsel %vm123, %v1189, %v1191
    %v1235 = vsel %vm123, %v1193, %v1195
    %v1236 = vsel %vm123, %v1197, %v1199
    %v1237 = vsel %vm123, %v1201, %v1203
    %v1238 = vsel %vm123, %v1205, %v1207
    %v1239 = vsel %vm123, %v1209, %v1211
    %v1240 = vsel %vm123, %v1213, %v1215
    %v1241 = vsel %vm123, %v1217, %v1219
    %v1242 = vsel %vm123, %v1221, %v1223
    %v1243 = vsel %vm123, %v1225, %v1227
    %v1284 = vsel %vm476, %v1052, %v1160
    %v1285 = vsel %vm476, %v1054, %v1161
    %v1286 = vsel %vm476, %v1056, %v1162
    %v1287 = vsel %vm476, %v1058, %v1163
    %v1288 = vsel %vm476, %v1065, %v1228
    %v1289 = vsel %vm476, %v1067, %v1229
    %v1290 = vsel %vm476, %v1069, %v1230
    %v1291 = vsel %vm476, %v1071, %v1231
    %v1292 = vsel %vm476, %v1077, %v1232
    %v1293 = vsel %vm476, %v1079, %v1233
    %v1294 = vsel %vm476, %v1081, %v1234
    %v1295 = vsel %vm476, %v1083, %v1235
    %v1296 = vsel %vm476, %v1089, %v1236
    %v1297 = vsel %vm476, %v1091, %v1237
    %v1298 = vsel %vm476, %v1093, %v1238
    %v1299 = vsel %vm476, %v1095, %v1239
    %v1300 = vsel %vm476, %v1101, %v1240
    %v1301 = vsel %vm476, %v1103, %v1241
    %v1302 = vsel %vm476, %v1105, %v1242
    %v1303 = vsel %vm476, %v1107, %v1243
    %v1304 = vld [vmem:[#allocation2 + $0xa8] sm:$0xff]
    %v1305 = vld [vmem:[#allocation2 + $0xb0] sm:$0xff]
    %v1306 = vld [vmem:[#allocation2 + $0xc0] sm:$0xff]
    %v1307 = vld [vmem:[#allocation2 + $0xc8] sm:$0xff]
    %v1308 = vld [vmem:[#allocation2 + $0xd8] sm:$0xff]
    %v1309 = vld [vmem:[#allocation2 + $0xe0] sm:$0xff]
    %v1310 = vld [vmem:[#allocation2 + $0xf0] sm:$0xff]
    %v1311 = vld [vmem:[#allocation2 + $0xf8] sm:$0xff]
    %v1312 = vld [vmem:[#allocation2 + $0x108] sm:$0xff]
    %v1313 = vld [vmem:[#allocation2 + $0x110] sm:$0xff]
    %v1314 = vld [vmem:[#allocation2 + $0x120] sm:$0xff]
    %v1315 = vld [vmem:[#allocation2 + $0x128] sm:$0xff]
    %v1316 = vld [vmem:[#allocation2 + $0x138] sm:$0xff]
    %v1317 = vld [vmem:[#allocation2 + $0x140] sm:$0xff]
    %v1318 = vld [vmem:[#allocation2 + $0x150] sm:$0xff]
    %v1319 = vld [vmem:[#allocation2 + $0x158] sm:$0xff]
    %v1321 = vsel %vm562, %v1305, 0
    %v1324 = vsel %vm562, %v1307, 0
    %v1327 = vsel %vm562, %v1309, 0
    %v1330 = vsel %vm562, %v1311, 0
    %v1333 = vsel %vm562, %v1313, 0
    %v1336 = vsel %vm562, %v1315, 0
    %v1339 = vsel %vm562, %v1317, 0
    %v1342 = vsel %vm562, %v1319, 0
    %1344 = vmatprep.subr.mxu0 %v1153
    %1345 = vmatpush1.msra.mxu0 %v1284
    %1346 = vmatprep.subr.mxu0 %v1155
    %1347 = vmatpush1.msra.mxu0 %v1285
    %1348 = vmatprep.subr.mxu0 %v1157
    %1349 = vmatpush1.msra.mxu0 %v1286
    %1350 = vmatprep.subr.mxu0 %v1159
    %1351 = vmatpush1.msra.mxu0 %v1287
    %1352 = vmatprep.subr.mxu0 %v1167
    %1353 = vmatpush1.msra.mxu0 %v1288
    %1354 = vmatprep.subr.mxu0 %v1171
    %1355 = vmatpush1.msra.mxu0 %v1289
    %1356 = vmatprep.subr.mxu0 %v1175
    %1357 = vmatpush1.msra.mxu0 %v1290
    %1358 = vmatprep.subr.mxu0 %v1179
    %1359 = vmatpush1.msra.mxu0 %v1291
    %1360 = vmatprep.subr.mxu0 %v1183
    %1361 = vmatpush1.msra.mxu0 %v1292
    %1362 = vmatprep.subr.mxu0 %v1187
    %1363 = vmatpush1.msra.mxu0 %v1293
    %1364 = vmatprep.subr.mxu0 %v1191
    %1365 = vmatpush1.msra.mxu0 %v1294
    %1366 = vmatprep.subr.mxu0 %v1195
    %1367 = vmatpush1.msra.mxu0 %v1295
    %1368 = vmatprep.subr.mxu0 %v1199
    %1369 = vmatpush1.msra.mxu0 %v1296
    %1370 = vmatprep.subr.mxu0 %v1203
    %1371 = vmatpush1.msra.mxu0 %v1297
    %1372 = vmatprep.subr.mxu0 %v1207
    %1373 = vmatpush1.msra.mxu0 %v1298
    %1374 = vmatprep.subr.mxu0 %v1211
    %1375 = vmatpush1.msra.mxu0 %v1299
    %1376 = vmatprep.subr.mxu0 %v1215
    %1377 = vmatpush1.msra.mxu0 %v1300
    %1378 = vmatprep.subr.mxu0 %v1219
    %1379 = vmatpush1.msra.mxu0 %v1301
    %1380 = vmatprep.subr.mxu0 %v1223
    %1381 = vmatpush1.msra.mxu0 %v1302
    %1382 = vmatprep.subr.mxu0 %v1227
    %1383 = vmatpush1.msra.mxu0 %v1303
    %1384 = vmatprep.subr.mxu0 0.0
    %1385 = vmatpush1.msra.mxu0 0.0
    %1386 = vmatprep.subr.mxu0 0.0
    %1387 = vmatpush1.msra.mxu0 0.0
    %1388 = vmatprep.subr.mxu0 0.0
    %1389 = vmatpush1.msra.mxu0 0.0
    %1390 = vmatprep.subr.mxu0 0.0
    %1391 = vmatpush1.msra.mxu0 0.0
    %1392 = vmatprep.subr.mxu0 0.0
    %1393 = vmatpush1.msra.mxu0 0.0
    %1394 = vmatprep.subr.mxu0 0.0
    %1395 = vmatpush1.msra.mxu0 0.0
    %1396 = vmatprep.subr.mxu0 0.0
    %1397 = vmatpush1.msra.mxu0 0.0
    %1398 = vmatprep.subr.mxu0 0.0
    %1399 = vmatpush1.msra.mxu0 0.0
    %1400 = vmatprep.subr.mxu0 0.0
    %1401 = vmatpush1.msra.mxu0 0.0
    %1402 = vmatprep.subr.mxu0 0.0
    %1403 = vmatpush1.msra.mxu0 0.0
    %1404 = vmatprep.subr.mxu0 0.0
    %1405 = vmatpush1.msra.mxu0 0.0
    %1406 = vmatprep.subr.mxu0 0.0
    %1407 = vmatpush1.msra.mxu0 0.0
    %1408 = vmatprep.mubr.f32.mxu0 %v1321
    %1409 = vmatmul.mubr.f32.gmra.mrb[0].mxu0 %v1304
    %v1410 = vpop.f32.mrb[0].mxu0
    %v1411 = vadd.f32 0.0, %v1410
    %v1412 = vpop.f32.mrb[0].mxu0
    %v1413 = vadd.f32 0.0, %v1412
    %1414 = vmatprep.mubr.f32.mxu0 %v1324
    %1415 = vmatmul.mubr.f32.gmra.mrb[0].mxu0 %v1306
    %v1416 = vpop.f32.mrb[0].mxu0
    %v1417 = vadd.f32 0.0, %v1416
    %v1418 = vpop.f32.mrb[0].mxu0
    %v1419 = vadd.f32 0.0, %v1418
    %1420 = vmatprep.mubr.f32.mxu0 %v1327
    %1421 = vmatmul.mubr.f32.gmra.mrb[0].mxu0 %v1308
    %v1422 = vpop.f32.mrb[0].mxu0
    %v1423 = vadd.f32 0.0, %v1422
    %v1424 = vpop.f32.mrb[0].mxu0
    %v1425 = vadd.f32 0.0, %v1424
    %1426 = vmatprep.mubr.f32.mxu0 %v1330
    %1427 = vmatmul.mubr.f32.gmra.mrb[0].mxu0 %v1310
    %v1428 = vpop.f32.mrb[0].mxu0
    %v1429 = vadd.f32 0.0, %v1428
    %v1430 = vpop.f32.mrb[0].mxu0
    %v1431 = vadd.f32 0.0, %v1430
    %1432 = vmatprep.mubr.f32.mxu0 %v1333
    %1433 = vmatmul.mubr.f32.gmra.mrb[0].mxu0 %v1312
    %v1434 = vpop.f32.mrb[0].mxu0
    %v1435 = vadd.f32 0.0, %v1434
    %v1436 = vpop.f32.mrb[0].mxu0
    %v1437 = vadd.f32 0.0, %v1436
    %1438 = vmatprep.mubr.f32.mxu0 %v1336
    %1439 = vmatmul.mubr.f32.gmra.mrb[0].mxu0 %v1314
    %v1440 = vpop.f32.mrb[0].mxu0
    %v1441 = vadd.f32 0.0, %v1440
    %v1442 = vpop.f32.mrb[0].mxu0
    %v1443 = vadd.f32 0.0, %v1442
    %1444 = vmatprep.mubr.f32.mxu0 %v1339
    %1445 = vmatmul.mubr.f32.gmra.mrb[0].mxu0 %v1316
    %v1446 = vpop.f32.mrb[0].mxu0
    %v1447 = vadd.f32 0.0, %v1446
    %v1448 = vpop.f32.mrb[0].mxu0
    %v1449 = vadd.f32 0.0, %v1448
    %1450 = vmatprep.mubr.f32.mxu0 %v1342
    %1451 = vmatmul.mubr.f32.gmra.mrb[0].mxu0 %v1318
    %v1452 = vpop.f32.mrb[0].mxu0
    %v1453 = vadd.f32 0.0, %v1452
    %v1454 = vpop.f32.mrb[0].mxu0
    %v1455 = vadd.f32 0.0, %v1454
    %1456 = vdwg.mxu0
    %v1457 = vld [vmem:[%s2 + $0x38] sm:$0xff]
    %v1458 = vld [vmem:[%s2 + $0x40] sm:$0xff]
    %v1459 = vld [vmem:[%s2 + $0x48] sm:$0xff]
    %v1460 = vld [vmem:[%s2 + $0x50] sm:$0xff]
    %v1461 = vld [vmem:[%s2 + $0x58] sm:$0xff]
    %v1462 = vld [vmem:[%s2 + $0x60] sm:$0xff]
    %v1463 = vld [vmem:[%s2 + $0x68] sm:$0xff]
    %v1464 = vld [vmem:[%s2 + $0x70] sm:$0xff]
    %vm1465 = vcmask 130048
    %v1466 = vsel %vm1465, %v1413, 0.0
    %v1467 = vadd.f32 %v1411, %v1466
    %1468 = vadd.xlane.f32.xlu0 %v1467
    %v1469 = vpop.xlane.xlu0 %1468
    %v1470 = vsel %vm1465, %v1419, 0.0
    %v1471 = vadd.f32 %v1417, %v1470
    %1472 = vadd.xlane.f32.xlu0 %v1471
    %v1473 = vpop.xlane.xlu0 %1472
    %v1474 = vsel %vm1465, %v1425, 0.0
    %v1475 = vadd.f32 %v1423, %v1474
    %1476 = vadd.xlane.f32.xlu0 %v1475
    %v1477 = vpop.xlane.xlu0 %1476
    %v1478 = vsel %vm1465, %v1431, 0.0
    %v1479 = vadd.f32 %v1429, %v1478
    %1480 = vadd.xlane.f32.xlu0 %v1479
    %v1481 = vpop.xlane.xlu0 %1480
    %v1482 = vsel %vm1465, %v1437, 0.0
    %v1483 = vadd.f32 %v1435, %v1482
    %1484 = vadd.xlane.f32.xlu0 %v1483
    %v1485 = vpop.xlane.xlu0 %1484
    %v1486 = vsel %vm1465, %v1443, 0.0
    %v1487 = vadd.f32 %v1441, %v1486
    %1488 = vadd.xlane.f32.xlu0 %v1487
    %v1489 = vpop.xlane.xlu0 %1488
    %v1490 = vsel %vm1465, %v1449, 0.0
    %v1491 = vadd.f32 %v1447, %v1490
    %1492 = vadd.xlane.f32.xlu0 %v1491
    %v1493 = vpop.xlane.xlu0 %1492
    %v1494 = vsel %vm1465, %v1455, 0.0
    %v1495 = vadd.f32 %v1453, %v1494
    %1496 = vadd.xlane.f32.xlu0 %v1495
    %v1497 = vpop.xlane.xlu0 %1496
    %v1498 = vmul.f32 %v1469, 0.0069444445
    %v1499 = vmul.f32 %v1473, 0.0069444445
    %v1500 = vmul.f32 %v1477, 0.0069444445
    %v1501 = vmul.f32 %v1481, 0.0069444445
    %v1502 = vmul.f32 %v1485, 0.0069444445
    %v1503 = vmul.f32 %v1489, 0.0069444445
    %v1504 = vmul.f32 %v1493, 0.0069444445
    %v1505 = vmul.f32 %v1497, 0.0069444445
    %v1506 = vmul.f32 %v1411, %v1411
    %v1507 = vmul.f32 %v1413, %v1413
    %v1508 = vmul.f32 %v1417, %v1417
    %v1509 = vmul.f32 %v1419, %v1419
    %v1510 = vmul.f32 %v1423, %v1423
    %v1511 = vmul.f32 %v1425, %v1425
    %v1512 = vmul.f32 %v1429, %v1429
    %v1513 = vmul.f32 %v1431, %v1431
    %v1514 = vmul.f32 %v1435, %v1435
    %v1515 = vmul.f32 %v1437, %v1437
    %v1516 = vmul.f32 %v1441, %v1441
    %v1517 = vmul.f32 %v1443, %v1443
    %v1518 = vmul.f32 %v1447, %v1447
    %v1519 = vmul.f32 %v1449, %v1449
    %v1520 = vmul.f32 %v1453, %v1453
    %v1521 = vmul.f32 %v1455, %v1455
    %v1522 = vsel %vm1465, %v1507, 0.0
    %v1523 = vadd.f32 %v1506, %v1522
    %1524 = vadd.xlane.f32.xlu0 %v1523
    %v1525 = vpop.xlane.xlu0 %1524
    %v1526 = vsel %vm1465, %v1509, 0.0
    %v1527 = vadd.f32 %v1508, %v1526
    %1528 = vadd.xlane.f32.xlu0 %v1527
    %v1529 = vpop.xlane.xlu0 %1528
    %v1530 = vsel %vm1465, %v1511, 0.0
    %v1531 = vadd.f32 %v1510, %v1530
    %1532 = vadd.xlane.f32.xlu0 %v1531
    %v1533 = vpop.xlane.xlu0 %1532
    %v1534 = vsel %vm1465, %v1513, 0.0
    %v1535 = vadd.f32 %v1512, %v1534
    %1536 = vadd.xlane.f32.xlu0 %v1535
    %v1537 = vpop.xlane.xlu0 %1536
    %v1538 = vsel %vm1465, %v1515, 0.0
    %v1539 = vadd.f32 %v1514, %v1538
    %1540 = vadd.xlane.f32.xlu0 %v1539
    %v1541 = vpop.xlane.xlu0 %1540
    %v1542 = vsel %vm1465, %v1517, 0.0
    %v1543 = vadd.f32 %v1516, %v1542
    %1544 = vadd.xlane.f32.xlu0 %v1543
    %v1545 = vpop.xlane.xlu0 %1544
    %v1546 = vsel %vm1465, %v1519, 0.0
    %v1547 = vadd.f32 %v1518, %v1546
    %1548 = vadd.xlane.f32.xlu0 %v1547
    %v1549 = vpop.xlane.xlu0 %1548
    %v1550 = vsel %vm1465, %v1521, 0.0
    %v1551 = vadd.f32 %v1520, %v1550
    %1552 = vadd.xlane.f32.xlu0 %v1551
    %v1553 = vpop.xlane.xlu0 %1552
    %v1554 = vmul.f32 %v1525, 0.0069444445
    %v1555 = vmul.f32 %v1529, 0.0069444445
    %v1556 = vmul.f32 %v1533, 0.0069444445
    %v1557 = vmul.f32 %v1537, 0.0069444445
    %v1558 = vmul.f32 %v1541, 0.0069444445
    %v1559 = vmul.f32 %v1545, 0.0069444445
    %v1560 = vmul.f32 %v1549, 0.0069444445
    %v1561 = vmul.f32 %v1553, 0.0069444445
    %v1562 = vmul.f32 %v1498, %v1498
    %v1563 = vmul.f32 %v1499, %v1499
    %v1564 = vmul.f32 %v1500, %v1500
    %v1565 = vmul.f32 %v1501, %v1501
    %v1566 = vmul.f32 %v1502, %v1502
    %v1567 = vmul.f32 %v1503, %v1503
    %v1568 = vmul.f32 %v1504, %v1504
    %v1569 = vmul.f32 %v1505, %v1505
    %v1570 = vsub.f32 %v1554, %v1562
    %v1571 = vsub.f32 %v1555, %v1563
    %v1572 = vsub.f32 %v1556, %v1564
    %v1573 = vsub.f32 %v1557, %v1565
    %v1574 = vsub.f32 %v1558, %v1566
    %v1575 = vsub.f32 %v1559, %v1567
    %v1576 = vsub.f32 %v1560, %v1568
    %v1577 = vsub.f32 %v1561, %v1569
    %v1578 = vmax.f32 %v1570, 0.0
    %v1579 = vmax.f32 %v1571, 0.0
    %v1580 = vmax.f32 %v1572, 0.0
    %v1581 = vmax.f32 %v1573, 0.0
    %v1582 = vmax.f32 %v1574, 0.0
    %v1583 = vmax.f32 %v1575, 0.0
    %v1584 = vmax.f32 %v1576, 0.0
    %v1585 = vmax.f32 %v1577, 0.0
    %v1586 = vadd.f32 %v1578, 1e-05
    %v1587 = vadd.f32 %v1579, 1e-05
    %v1588 = vadd.f32 %v1580, 1e-05
    %v1589 = vadd.f32 %v1581, 1e-05
    %v1590 = vadd.f32 %v1582, 1e-05
    %v1591 = vadd.f32 %v1583, 1e-05
    %v1592 = vadd.f32 %v1584, 1e-05
    %v1593 = vadd.f32 %v1585, 1e-05
    %v1594 = vrsqrt.pop %v1586
    %v1595 = vrsqrt.pop %v1587
    %v1596 = vrsqrt.pop %v1588
    %v1597 = vrsqrt.pop %v1589
    %v1598 = vrsqrt.pop %v1590
    %v1599 = vrsqrt.pop %v1591
    %v1600 = vrsqrt.pop %v1592
    %v1601 = vrsqrt.pop %v1593
    %v1602 = vmul.f32 %v1457, %v1594
    %v1603 = vmul.f32 %v1458, %v1595
    %v1604 = vmul.f32 %v1459, %v1596
    %v1605 = vmul.f32 %v1460, %v1597
    %v1606 = vmul.f32 %v1461, %v1598
    %v1607 = vmul.f32 %v1462, %v1599
    %v1608 = vmul.f32 %v1463, %v1600
    %v1609 = vmul.f32 %v1464, %v1601
    %1611 = vset.pattern.permute.xlu0 0
    %1612 = vperm.xlu0 %1611, %v1602
    %v1613 = vpop.permute.xlu0 %1612
    %1616 = vset.pattern.permute.xlu0 0
    %1617 = vperm.xlu0 %1616, %v1603
    %v1618 = vpop.permute.xlu0 %1617
    %1621 = vset.pattern.permute.xlu0 0
    %1622 = vperm.xlu0 %1621, %v1604
    %v1623 = vpop.permute.xlu0 %1622
    %1626 = vset.pattern.permute.xlu0 0
    %1627 = vperm.xlu0 %1626, %v1605
    %v1628 = vpop.permute.xlu0 %1627
    %1631 = vset.pattern.permute.xlu0 0
    %1632 = vperm.xlu0 %1631, %v1606
    %v1633 = vpop.permute.xlu0 %1632
    %1636 = vset.pattern.permute.xlu0 0
    %1637 = vperm.xlu0 %1636, %v1607
    %v1638 = vpop.permute.xlu0 %1637
    %1641 = vset.pattern.permute.xlu0 0
    %1642 = vperm.xlu0 %1641, %v1608
    %v1643 = vpop.permute.xlu0 %1642
    %1646 = vset.pattern.permute.xlu0 0
    %1647 = vperm.xlu0 %1646, %v1609
    %v1648 = vpop.permute.xlu0 %1647
    %v1650 = vmul.f32 %v1411, %v1613
    %v1651 = vmul.f32 %v1413, %v1613
    %v1652 = vmul.f32 %v1417, %v1618
    %v1653 = vmul.f32 %v1419, %v1618
    %v1654 = vmul.f32 %v1423, %v1623
    %v1655 = vmul.f32 %v1425, %v1623
    %v1656 = vmul.f32 %v1429, %v1628
    %v1657 = vmul.f32 %v1431, %v1628
    %v1658 = vmul.f32 %v1435, %v1633
    %v1659 = vmul.f32 %v1437, %v1633
    %v1660 = vmul.f32 %v1441, %v1638
    %v1661 = vmul.f32 %v1443, %v1638
    %v1662 = vmul.f32 %v1447, %v1643
    %v1663 = vmul.f32 %v1449, %v1643
    %v1664 = vmul.f32 %v1453, %v1648
    %v1665 = vmul.f32 %v1455, %v1648
    %v1666 = vmul.f32 %v1498, %v1602
    %v1667 = vmul.f32 %v1499, %v1603
    %v1668 = vmul.f32 %v1500, %v1604
    %v1669 = vmul.f32 %v1501, %v1605
    %v1670 = vmul.f32 %v1502, %v1606
    %v1671 = vmul.f32 %v1503, %v1607
    %v1672 = vmul.f32 %v1504, %v1608
    %v1673 = vmul.f32 %v1505, %v1609
    %1682 = vrot.lane.b32.xlu0 %v1666, 1
    %v1683 = vpop.permute.xlu0 %1682
    %1684 = vrot.lane.b32.xlu0 %v1667, 1
    %v1685 = vpop.permute.xlu0 %1684
    %1686 = vrot.lane.b32.xlu0 %v1668, 1
    %v1687 = vpop.permute.xlu0 %1686
    %1688 = vrot.lane.b32.xlu0 %v1669, 1
    %v1689 = vpop.permute.xlu0 %1688
    %1690 = vrot.lane.b32.xlu0 %v1670, 1
    %v1691 = vpop.permute.xlu0 %1690
    %1692 = vrot.lane.b32.xlu0 %v1671, 1
    %v1693 = vpop.permute.xlu0 %1692
    %1694 = vrot.lane.b32.xlu0 %v1672, 1
    %v1695 = vpop.permute.xlu0 %1694
    %1696 = vrot.lane.b32.xlu0 %v1673, 1
    %v1697 = vpop.permute.xlu0 %1696
    %v1706 = vsub.f32 %v1457, %v1683
    %v1707 = vsub.f32 %v1458, %v1685
    %v1708 = vsub.f32 %v1459, %v1687
    %v1709 = vsub.f32 %v1460, %v1689
    %v1710 = vsub.f32 %v1461, %v1691
    %v1711 = vsub.f32 %v1462, %v1693
    %v1712 = vsub.f32 %v1463, %v1695
    %v1713 = vsub.f32 %v1464, %v1697
    %1715 = vset.pattern.permute.xlu0 1
    %1716 = vperm.xlu0 %1715, %v1706
    %v1717 = vpop.permute.xlu0 %1716
    %1720 = vset.pattern.permute.xlu0 1
    %1721 = vperm.xlu0 %1720, %v1707
    %v1722 = vpop.permute.xlu0 %1721
    %1725 = vset.pattern.permute.xlu0 1
    %1726 = vperm.xlu0 %1725, %v1708
    %v1727 = vpop.permute.xlu0 %1726
    %1730 = vset.pattern.permute.xlu0 1
    %1731 = vperm.xlu0 %1730, %v1709
    %v1732 = vpop.permute.xlu0 %1731
    %1735 = vset.pattern.permute.xlu0 1
    %1736 = vperm.xlu0 %1735, %v1710
    %v1737 = vpop.permute.xlu0 %1736
    %1740 = vset.pattern.permute.xlu0 1
    %1741 = vperm.xlu0 %1740, %v1711
    %v1742 = vpop.permute.xlu0 %1741
    %1745 = vset.pattern.permute.xlu0 1
    %1746 = vperm.xlu0 %1745, %v1712
    %v1747 = vpop.permute.xlu0 %1746
    %1750 = vset.pattern.permute.xlu0 1
    %1751 = vperm.xlu0 %1750, %v1713
    %v1752 = vpop.permute.xlu0 %1751
    %v1754 = vadd.f32 %v1650, %v1717
    %v1755 = vadd.f32 %v1651, %v1717
    %v1756 = vadd.f32 %v1652, %v1722
    %v1757 = vadd.f32 %v1653, %v1722
    %v1758 = vadd.f32 %v1654, %v1727
    %v1759 = vadd.f32 %v1655, %v1727
    %v1760 = vadd.f32 %v1656, %v1732
    %v1761 = vadd.f32 %v1657, %v1732
    %v1762 = vadd.f32 %v1658, %v1737
    %v1763 = vadd.f32 %v1659, %v1737
    %v1764 = vadd.f32 %v1660, %v1742
    %v1765 = vadd.f32 %v1661, %v1742
    %v1766 = vadd.f32 %v1662, %v1747
    %v1767 = vadd.f32 %v1663, %v1747
    %v1768 = vadd.f32 %v1664, %v1752
    %v1769 = vadd.f32 %v1665, %v1752
    %vm1770 = vcmp.gt.f32.partialorder %v1754, 0.0
    %vm1771 = vcmp.gt.f32.partialorder %v1755, 0.0
    %vm1772 = vcmp.gt.f32.partialorder %v1756, 0.0
    %vm1773 = vcmp.gt.f32.partialorder %v1757, 0.0
    %vm1774 = vcmp.gt.f32.partialorder %v1758, 0.0
    %vm1775 = vcmp.gt.f32.partialorder %v1759, 0.0
    %vm1776 = vcmp.gt.f32.partialorder %v1760, 0.0
    %vm1777 = vcmp.gt.f32.partialorder %v1761, 0.0
    %vm1778 = vcmp.gt.f32.partialorder %v1762, 0.0
    %vm1779 = vcmp.gt.f32.partialorder %v1763, 0.0
    %vm1780 = vcmp.gt.f32.partialorder %v1764, 0.0
    %vm1781 = vcmp.gt.f32.partialorder %v1765, 0.0
    %vm1782 = vcmp.gt.f32.partialorder %v1766, 0.0
    %vm1783 = vcmp.gt.f32.partialorder %v1767, 0.0
    %vm1784 = vcmp.gt.f32.partialorder %v1768, 0.0
    %vm1785 = vcmp.gt.f32.partialorder %v1769, 0.0
    %v1786 = vmul.f32 %v1754, 0.01
    %v1787 = vmul.f32 %v1755, 0.01
    %v1788 = vmul.f32 %v1756, 0.01
    %v1789 = vmul.f32 %v1757, 0.01
    %v1790 = vmul.f32 %v1758, 0.01
    %v1791 = vmul.f32 %v1759, 0.01
    %v1792 = vmul.f32 %v1760, 0.01
    %v1793 = vmul.f32 %v1761, 0.01
    %v1794 = vmul.f32 %v1762, 0.01
    %v1795 = vmul.f32 %v1763, 0.01
    %v1796 = vmul.f32 %v1764, 0.01
    %v1797 = vmul.f32 %v1765, 0.01
    %v1798 = vmul.f32 %v1766, 0.01
    %v1799 = vmul.f32 %v1767, 0.01
    %v1800 = vmul.f32 %v1768, 0.01
    %v1801 = vmul.f32 %v1769, 0.01
    %v1802 = vsel %vm1770, %v1754, %v1786
    %v1803 = vsel %vm1771, %v1755, %v1787
    %v1804 = vsel %vm1772, %v1756, %v1788
    %v1805 = vsel %vm1773, %v1757, %v1789
    %v1806 = vsel %vm1774, %v1758, %v1790
    %v1807 = vsel %vm1775, %v1759, %v1791
    %v1808 = vsel %vm1776, %v1760, %v1792
    %v1809 = vsel %vm1777, %v1761, %v1793
    %v1810 = vsel %vm1778, %v1762, %v1794
    %v1811 = vsel %vm1779, %v1763, %v1795
    %v1812 = vsel %vm1780, %v1764, %v1796
    %v1813 = vsel %vm1781, %v1765, %v1797
    %v1814 = vsel %vm1782, %v1766, %v1798
    %v1815 = vsel %vm1783, %v1767, %v1799
    %v1816 = vsel %vm1784, %v1768, %v1800
    %v1817 = vsel %vm1785, %v1769, %v1801
    %1826 = vrot.lane.b32.xlu0 %v1802, 127
    %v1827 = vpop.permute.xlu0 %1826
    %1828 = vrot.lane.b32.xlu0 %v1804, 127
    %v1829 = vpop.permute.xlu0 %1828
    %1830 = vrot.lane.b32.xlu0 %v1806, 127
    %v1831 = vpop.permute.xlu0 %1830
    %1832 = vrot.lane.b32.xlu0 %v1808, 127
    %v1833 = vpop.permute.xlu0 %1832
    %1834 = vrot.lane.b32.xlu0 %v1810, 127
    %v1835 = vpop.permute.xlu0 %1834
    %1836 = vrot.lane.b32.xlu0 %v1812, 127
    %v1837 = vpop.permute.xlu0 %1836
    %1838 = vrot.lane.b32.xlu0 %v1814, 127
    %v1839 = vpop.permute.xlu0 %1838
    %1840 = vrot.lane.b32.xlu0 %v1816, 127
    %v1841 = vpop.permute.xlu0 %1840
    %1850 = vrot.lane.b32.xlu0 %v1802, 126
    %v1851 = vpop.permute.xlu0 %1850
    %1852 = vrot.lane.b32.xlu0 %v1804, 126
    %v1853 = vpop.permute.xlu0 %1852
    %1854 = vrot.lane.b32.xlu0 %v1806, 126
    %v1855 = vpop.permute.xlu0 %1854
    %1856 = vrot.lane.b32.xlu0 %v1808, 126
    %v1857 = vpop.permute.xlu0 %1856
    %1858 = vrot.lane.b32.xlu0 %v1810, 126
    %v1859 = vpop.permute.xlu0 %1858
    %1860 = vrot.lane.b32.xlu0 %v1812, 126
    %v1861 = vpop.permute.xlu0 %1860
    %1862 = vrot.lane.b32.xlu0 %v1814, 126
    %v1863 = vpop.permute.xlu0 %1862
    %1864 = vrot.lane.b32.xlu0 %v1816, 126
    %v1865 = vpop.permute.xlu0 %1864
    %1874 = vrot.lane.b32.xlu0 %v1802, 125
    %v1875 = vpop.permute.xlu0 %1874
    %1876 = vrot.lane.b32.xlu0 %v1804, 125
    %v1877 = vpop.permute.xlu0 %1876
    %1878 = vrot.lane.b32.xlu0 %v1806, 125
    %v1879 = vpop.permute.xlu0 %1878
    %1880 = vrot.lane.b32.xlu0 %v1808, 125
    %v1881 = vpop.permute.xlu0 %1880
    %1882 = vrot.lane.b32.xlu0 %v1810, 125
    %v1883 = vpop.permute.xlu0 %1882
    %1884 = vrot.lane.b32.xlu0 %v1812, 125
    %v1885 = vpop.permute.xlu0 %1884
    %1886 = vrot.lane.b32.xlu0 %v1814, 125
    %v1887 = vpop.permute.xlu0 %1886
    %1888 = vrot.lane.b32.xlu0 %v1816, 125
    %v1889 = vpop.permute.xlu0 %1888
    %1898 = vrot.lane.b32.xlu0 %v1802, 124
    %v1899 = vpop.permute.xlu0 %1898
    %1900 = vrot.lane.b32.xlu0 %v1804, 124
    %v1901 = vpop.permute.xlu0 %1900
    %1902 = vrot.lane.b32.xlu0 %v1806, 124
    %v1903 = vpop.permute.xlu0 %1902
    %1904 = vrot.lane.b32.xlu0 %v1808, 124
    %v1905 = vpop.permute.xlu0 %1904
    %1906 = vrot.lane.b32.xlu0 %v1810, 124
    %v1907 = vpop.permute.xlu0 %1906
    %1908 = vrot.lane.b32.xlu0 %v1812, 124
    %v1909 = vpop.permute.xlu0 %1908
    %1910 = vrot.lane.b32.xlu0 %v1814, 124
    %v1911 = vpop.permute.xlu0 %1910
    %1912 = vrot.lane.b32.xlu0 %v1816, 124
    %v1913 = vpop.permute.xlu0 %1912
    %1930 = vrot.lane.b32.xlu0 %v1803, 127
    %v1931 = vpop.permute.xlu0 %1930
    %1932 = vrot.lane.b32.xlu0 %v1805, 127
    %v1933 = vpop.permute.xlu0 %1932
    %1934 = vrot.lane.b32.xlu0 %v1807, 127
    %v1935 = vpop.permute.xlu0 %1934
    %1936 = vrot.lane.b32.xlu0 %v1809, 127
    %v1937 = vpop.permute.xlu0 %1936
    %1938 = vrot.lane.b32.xlu0 %v1811, 127
    %v1939 = vpop.permute.xlu0 %1938
    %1940 = vrot.lane.b32.xlu0 %v1813, 127
    %v1941 = vpop.permute.xlu0 %1940
    %1942 = vrot.lane.b32.xlu0 %v1815, 127
    %v1943 = vpop.permute.xlu0 %1942
    %1944 = vrot.lane.b32.xlu0 %v1817, 127
    %v1945 = vpop.permute.xlu0 %1944
    %v1946 = vsel %vm105, %v1827, %v1931
    %v1947 = vsel %vm105, %v1829, %v1933
    %v1948 = vsel %vm105, %v1831, %v1935
    %v1949 = vsel %vm105, %v1833, %v1937
    %v1950 = vsel %vm105, %v1835, %v1939
    %v1951 = vsel %vm105, %v1837, %v1941
    %v1952 = vsel %vm105, %v1839, %v1943
    %v1953 = vsel %vm105, %v1841, %v1945
    %1954 = vrot.lane.b32.xlu0 %v1803, 126
    %v1955 = vpop.permute.xlu0 %1954
    %1956 = vrot.lane.b32.xlu0 %v1805, 126
    %v1957 = vpop.permute.xlu0 %1956
    %1958 = vrot.lane.b32.xlu0 %v1807, 126
    %v1959 = vpop.permute.xlu0 %1958
    %1960 = vrot.lane.b32.xlu0 %v1809, 126
    %v1961 = vpop.permute.xlu0 %1960
    %1962 = vrot.lane.b32.xlu0 %v1811, 126
    %v1963 = vpop.permute.xlu0 %1962
    %1964 = vrot.lane.b32.xlu0 %v1813, 126
    %v1965 = vpop.permute.xlu0 %1964
    %1966 = vrot.lane.b32.xlu0 %v1815, 126
    %v1967 = vpop.permute.xlu0 %1966
    %1968 = vrot.lane.b32.xlu0 %v1817, 126
    %v1969 = vpop.permute.xlu0 %1968
    %v1970 = vsel %vm111, %v1851, %v1955
    %v1971 = vsel %vm111, %v1853, %v1957
    %v1972 = vsel %vm111, %v1855, %v1959
    %v1973 = vsel %vm111, %v1857, %v1961
    %v1974 = vsel %vm111, %v1859, %v1963
    %v1975 = vsel %vm111, %v1861, %v1965
    %v1976 = vsel %vm111, %v1863, %v1967
    %v1977 = vsel %vm111, %v1865, %v1969
    %1978 = vrot.lane.b32.xlu0 %v1803, 125
    %v1979 = vpop.permute.xlu0 %1978
    %1980 = vrot.lane.b32.xlu0 %v1805, 125
    %v1981 = vpop.permute.xlu0 %1980
    %1982 = vrot.lane.b32.xlu0 %v1807, 125
    %v1983 = vpop.permute.xlu0 %1982
    %1984 = vrot.lane.b32.xlu0 %v1809, 125
    %v1985 = vpop.permute.xlu0 %1984
    %1986 = vrot.lane.b32.xlu0 %v1811, 125
    %v1987 = vpop.permute.xlu0 %1986
    %1988 = vrot.lane.b32.xlu0 %v1813, 125
    %v1989 = vpop.permute.xlu0 %1988
    %1990 = vrot.lane.b32.xlu0 %v1815, 125
    %v1991 = vpop.permute.xlu0 %1990
    %1992 = vrot.lane.b32.xlu0 %v1817, 125
    %v1993 = vpop.permute.xlu0 %1992
    %v1994 = vsel %vm117, %v1875, %v1979
    %v1995 = vsel %vm117, %v1877, %v1981
    %v1996 = vsel %vm117, %v1879, %v1983
    %v1997 = vsel %vm117, %v1881, %v1985
    %v1998 = vsel %vm117, %v1883, %v1987
    %v1999 = vsel %vm117, %v1885, %v1989
    %v2000 = vsel %vm117, %v1887, %v1991
    %v2001 = vsel %vm117, %v1889, %v1993
    %2002 = vrot.lane.b32.xlu0 %v1803, 124
    %v2003 = vpop.permute.xlu0 %2002
    %2004 = vrot.lane.b32.xlu0 %v1805, 124
    %v2005 = vpop.permute.xlu0 %2004
    %2006 = vrot.lane.b32.xlu0 %v1807, 124
    %v2007 = vpop.permute.xlu0 %2006
    %2008 = vrot.lane.b32.xlu0 %v1809, 124
    %v2009 = vpop.permute.xlu0 %2008
    %2010 = vrot.lane.b32.xlu0 %v1811, 124
    %v2011 = vpop.permute.xlu0 %2010
    %2012 = vrot.lane.b32.xlu0 %v1813, 124
    %v2013 = vpop.permute.xlu0 %2012
    %2014 = vrot.lane.b32.xlu0 %v1815, 124
    %v2015 = vpop.permute.xlu0 %2014
    %2016 = vrot.lane.b32.xlu0 %v1817, 124
    %v2017 = vpop.permute.xlu0 %2016
    %v2018 = vsel %vm123, %v1899, %v2003
    %v2019 = vsel %vm123, %v1901, %v2005
    %v2020 = vsel %vm123, %v1903, %v2007
    %v2021 = vsel %vm123, %v1905, %v2009
    %v2022 = vsel %vm123, %v1907, %v2011
    %v2023 = vsel %vm123, %v1909, %v2013
    %v2024 = vsel %vm123, %v1911, %v2015
    %v2025 = vsel %vm123, %v1913, %v2017
    %2026 = vrot.lane.b32.xlu0 %v1946, 124
    %v2027 = vpop.permute.xlu0 %2026
    %2028 = vrot.lane.b32.xlu0 %v1931, 124
    %v2029 = vpop.permute.xlu0 %2028
    %2030 = vrot.lane.b32.xlu0 %v1947, 124
    %v2031 = vpop.permute.xlu0 %2030
    %2032 = vrot.lane.b32.xlu0 %v1933, 124
    %v2033 = vpop.permute.xlu0 %2032
    %2034 = vrot.lane.b32.xlu0 %v1948, 124
    %v2035 = vpop.permute.xlu0 %2034
    %2036 = vrot.lane.b32.xlu0 %v1935, 124
    %v2037 = vpop.permute.xlu0 %2036
    %2038 = vrot.lane.b32.xlu0 %v1949, 124
    %v2039 = vpop.permute.xlu0 %2038
    %2040 = vrot.lane.b32.xlu0 %v1937, 124
    %v2041 = vpop.permute.xlu0 %2040
    %2042 = vrot.lane.b32.xlu0 %v1950, 124
    %v2043 = vpop.permute.xlu0 %2042
    %2044 = vrot.lane.b32.xlu0 %v1939, 124
    %v2045 = vpop.permute.xlu0 %2044
    %2046 = vrot.lane.b32.xlu0 %v1951, 124
    %v2047 = vpop.permute.xlu0 %2046
    %2048 = vrot.lane.b32.xlu0 %v1941, 124
    %v2049 = vpop.permute.xlu0 %2048
    %2050 = vrot.lane.b32.xlu0 %v1952, 124
    %v2051 = vpop.permute.xlu0 %2050
    %2052 = vrot.lane.b32.xlu0 %v1943, 124
    %v2053 = vpop.permute.xlu0 %2052
    %2054 = vrot.lane.b32.xlu0 %v1953, 124
    %v2055 = vpop.permute.xlu0 %2054
    %2056 = vrot.lane.b32.xlu0 %v1945, 124
    %v2057 = vpop.permute.xlu0 %2056
    %2058 = vrot.lane.b32.xlu0 %v1970, 124
    %v2059 = vpop.permute.xlu0 %2058
    %2060 = vrot.lane.b32.xlu0 %v1955, 124
    %v2061 = vpop.permute.xlu0 %2060
    %2062 = vrot.lane.b32.xlu0 %v1971, 124
    %v2063 = vpop.permute.xlu0 %2062
    %2064 = vrot.lane.b32.xlu0 %v1957, 124
    %v2065 = vpop.permute.xlu0 %2064
    %2066 = vrot.lane.b32.xlu0 %v1972, 124
    %v2067 = vpop.permute.xlu0 %2066
    %2068 = vrot.lane.b32.xlu0 %v1959, 124
    %v2069 = vpop.permute.xlu0 %2068
    %2070 = vrot.lane.b32.xlu0 %v1973, 124
    %v2071 = vpop.permute.xlu0 %2070
    %2072 = vrot.lane.b32.xlu0 %v1961, 124
    %v2073 = vpop.permute.xlu0 %2072
    %2074 = vrot.lane.b32.xlu0 %v1974, 124
    %v2075 = vpop.permute.xlu0 %2074
    %2076 = vrot.lane.b32.xlu0 %v1963, 124
    %v2077 = vpop.permute.xlu0 %2076
    %2078 = vrot.lane.b32.xlu0 %v1975, 124
    %v2079 = vpop.permute.xlu0 %2078
    %2080 = vrot.lane.b32.xlu0 %v1965, 124
    %v2081 = vpop.permute.xlu0 %2080
    %2082 = vrot.lane.b32.xlu0 %v1976, 124
    %v2083 = vpop.permute.xlu0 %2082
    %2084 = vrot.lane.b32.xlu0 %v1967, 124
    %v2085 = vpop.permute.xlu0 %2084
    %2086 = vrot.lane.b32.xlu0 %v1977, 124
    %v2087 = vpop.permute.xlu0 %2086
    %2088 = vrot.lane.b32.xlu0 %v1969, 124
    %v2089 = vpop.permute.xlu0 %2088
    %2090 = vrot.lane.b32.xlu0 %v1994, 124
    %v2091 = vpop.permute.xlu0 %2090
    %2092 = vrot.lane.b32.xlu0 %v1979, 124
    %v2093 = vpop.permute.xlu0 %2092
    %2094 = vrot.lane.b32.xlu0 %v1995, 124
    %v2095 = vpop.permute.xlu0 %2094
    %2096 = vrot.lane.b32.xlu0 %v1981, 124
    %v2097 = vpop.permute.xlu0 %2096
    %2098 = vrot.lane.b32.xlu0 %v1996, 124
    %v2099 = vpop.permute.xlu0 %2098
    %2100 = vrot.lane.b32.xlu0 %v1983, 124
    %v2101 = vpop.permute.xlu0 %2100
    %2102 = vrot.lane.b32.xlu0 %v1997, 124
    %v2103 = vpop.permute.xlu0 %2102
    %2104 = vrot.lane.b32.xlu0 %v1985, 124
    %v2105 = vpop.permute.xlu0 %2104
    %2106 = vrot.lane.b32.xlu0 %v1998, 124
    %v2107 = vpop.permute.xlu0 %2106
    %2108 = vrot.lane.b32.xlu0 %v1987, 124
    %v2109 = vpop.permute.xlu0 %2108
    %2110 = vrot.lane.b32.xlu0 %v1999, 124
    %v2111 = vpop.permute.xlu0 %2110
    %2112 = vrot.lane.b32.xlu0 %v1989, 124
    %v2113 = vpop.permute.xlu0 %2112
    %2114 = vrot.lane.b32.xlu0 %v2000, 124
    %v2115 = vpop.permute.xlu0 %2114
    %2116 = vrot.lane.b32.xlu0 %v1991, 124
    %v2117 = vpop.permute.xlu0 %2116
    %2118 = vrot.lane.b32.xlu0 %v2001, 124
    %v2119 = vpop.permute.xlu0 %2118
    %2120 = vrot.lane.b32.xlu0 %v1993, 124
    %v2121 = vpop.permute.xlu0 %2120
    %2122 = vrot.lane.b32.xlu0 %v2018, 124
    %v2123 = vpop.permute.xlu0 %2122
    %2124 = vrot.lane.b32.xlu0 %v2003, 124
    %v2125 = vpop.permute.xlu0 %2124
    %2126 = vrot.lane.b32.xlu0 %v2019, 124
    %v2127 = vpop.permute.xlu0 %2126
    %2128 = vrot.lane.b32.xlu0 %v2005, 124
    %v2129 = vpop.permute.xlu0 %2128
    %2130 = vrot.lane.b32.xlu0 %v2020, 124
    %v2131 = vpop.permute.xlu0 %2130
    %2132 = vrot.lane.b32.xlu0 %v2007, 124
    %v2133 = vpop.permute.xlu0 %2132
    %2134 = vrot.lane.b32.xlu0 %v2021, 124
    %v2135 = vpop.permute.xlu0 %2134
    %2136 = vrot.lane.b32.xlu0 %v2009, 124
    %v2137 = vpop.permute.xlu0 %2136
    %2138 = vrot.lane.b32.xlu0 %v2022, 124
    %v2139 = vpop.permute.xlu0 %2138
    %2140 = vrot.lane.b32.xlu0 %v2011, 124
    %v2141 = vpop.permute.xlu0 %2140
    %2142 = vrot.lane.b32.xlu0 %v2023, 124
    %v2143 = vpop.permute.xlu0 %2142
    %2144 = vrot.lane.b32.xlu0 %v2013, 124
    %v2145 = vpop.permute.xlu0 %2144
    %2146 = vrot.lane.b32.xlu0 %v2024, 124
    %v2147 = vpop.permute.xlu0 %2146
    %2148 = vrot.lane.b32.xlu0 %v2015, 124
    %v2149 = vpop.permute.xlu0 %2148
    %2150 = vrot.lane.b32.xlu0 %v2025, 124
    %v2151 = vpop.permute.xlu0 %2150
    %2152 = vrot.lane.b32.xlu0 %v2017, 124
    %v2153 = vpop.permute.xlu0 %2152
    %v2154 = vsel %vm123, %v2027, %v2029
    %v2155 = vsel %vm123, %v2031, %v2033
    %v2156 = vsel %vm123, %v2035, %v2037
    %v2157 = vsel %vm123, %v2039, %v2041
    %v2158 = vsel %vm123, %v2043, %v2045
    %v2159 = vsel %vm123, %v2047, %v2049
    %v2160 = vsel %vm123, %v2051, %v2053
    %v2161 = vsel %vm123, %v2055, %v2057
    %v2162 = vsel %vm123, %v2059, %v2061
    %v2163 = vsel %vm123, %v2063, %v2065
    %v2164 = vsel %vm123, %v2067, %v2069
    %v2165 = vsel %vm123, %v2071, %v2073
    %v2166 = vsel %vm123, %v2075, %v2077
    %v2167 = vsel %vm123, %v2079, %v2081
    %v2168 = vsel %vm123, %v2083, %v2085
    %v2169 = vsel %vm123, %v2087, %v2089
    %v2170 = vsel %vm123, %v2091, %v2093
    %v2171 = vsel %vm123, %v2095, %v2097
    %v2172 = vsel %vm123, %v2099, %v2101
    %v2173 = vsel %vm123, %v2103, %v2105
    %v2174 = vsel %vm123, %v2107, %v2109
    %v2175 = vsel %vm123, %v2111, %v2113
    %v2176 = vsel %vm123, %v2115, %v2117
    %v2177 = vsel %vm123, %v2119, %v2121
    %v2178 = vsel %vm123, %v2123, %v2125
    %v2179 = vsel %vm123, %v2127, %v2129
    %v2180 = vsel %vm123, %v2131, %v2133
    %v2181 = vsel %vm123, %v2135, %v2137
    %v2182 = vsel %vm123, %v2139, %v2141
    %v2183 = vsel %vm123, %v2143, %v2145
    %v2184 = vsel %vm123, %v2147, %v2149
    %v2185 = vsel %vm123, %v2151, %v2153
    %vm2266 = vcmask 556032
    %v2267 = vsel %vm2266, %v1802, %v2018
    %v2268 = vsel %vm2266, %v1804, %v2019
    %v2269 = vsel %vm2266, %v1806, %v2020
    %v2270 = vsel %vm2266, %v1808, %v2021
    %v2271 = vsel %vm2266, %v1810, %v2022
    %v2272 = vsel %vm2266, %v1812, %v2023
    %v2273 = vsel %vm2266, %v1814, %v2024
    %v2274 = vsel %vm2266, %v1816, %v2025
    %v2275 = vsel %vm2266, %v1827, %v2154
    %v2276 = vsel %vm2266, %v1829, %v2155
    %v2277 = vsel %vm2266, %v1831, %v2156
    %v2278 = vsel %vm2266, %v1833, %v2157
    %v2279 = vsel %vm2266, %v1835, %v2158
    %v2280 = vsel %vm2266, %v1837, %v2159
    %v2281 = vsel %vm2266, %v1839, %v2160
    %v2282 = vsel %vm2266, %v1841, %v2161
    %v2283 = vsel %vm2266, %v1851, %v2162
    %v2284 = vsel %vm2266, %v1853, %v2163
    %v2285 = vsel %vm2266, %v1855, %v2164
    %v2286 = vsel %vm2266, %v1857, %v2165
    %v2287 = vsel %vm2266, %v1859, %v2166
    %v2288 = vsel %vm2266, %v1861, %v2167
    %v2289 = vsel %vm2266, %v1863, %v2168
    %v2290 = vsel %vm2266, %v1865, %v2169
    %v2291 = vsel %vm2266, %v1875, %v2170
    %v2292 = vsel %vm2266, %v1877, %v2171
    %v2293 = vsel %vm2266, %v1879, %v2172
    %v2294 = vsel %vm2266, %v1881, %v2173
    %v2295 = vsel %vm2266, %v1883, %v2174
    %v2296 = vsel %vm2266, %v1885, %v2175
    %v2297 = vsel %vm2266, %v1887, %v2176
    %v2298 = vsel %vm2266, %v1889, %v2177
    %v2299 = vsel %vm2266, %v1899, %v2178
    %v2300 = vsel %vm2266, %v1901, %v2179
    %v2301 = vsel %vm2266, %v1903, %v2180
    %v2302 = vsel %vm2266, %v1905, %v2181
    %v2303 = vsel %vm2266, %v1907, %v2182
    %v2304 = vsel %vm2266, %v1909, %v2183
    %v2305 = vsel %vm2266, %v1911, %v2184
    %v2306 = vsel %vm2266, %v1913, %v2185
    %v2307 = vld [vmem:[#allocation2 + $0x168] sm:$0xff]
    %v2308 = vld [vmem:[#allocation2 + $0x170] sm:$0xff]
    %v2309 = vld [vmem:[#allocation2 + $0x178] sm:$0xff]
    %v2310 = vld [vmem:[#allocation2 + $0x180] sm:$0xff]
    %v2311 = vld [vmem:[#allocation2 + $0x188] sm:$0xff]
    %v2312 = vld [vmem:[#allocation2 + $0x190] sm:$0xff]
    %v2313 = vld [vmem:[#allocation2 + $0x198] sm:$0xff]
    %v2314 = vld [vmem:[#allocation2 + $0x1a0] sm:$0xff]
    %v2315 = vld [vmem:[#allocation2 + $0x1a8] sm:$0xff]
    %v2316 = vld [vmem:[#allocation2 + $0x1b0] sm:$0xff]
    %v2317 = vld [vmem:[#allocation2 + $0x1b8] sm:$0xff]
    %v2318 = vld [vmem:[#allocation2 + $0x1c0] sm:$0xff]
    %vm2319 = vcmask 523264
    %v2321 = vsel %vm2319, %v2309, 0
    %v2324 = vsel %vm2319, %v2312, 0
    %v2327 = vsel %vm2319, %v2315, 0
    %v2330 = vsel %vm2319, %v2318, 0
    %2332 = vmatprep.subr.mxu0 %v2003
    %2333 = vmatpush1.msra.mxu0 %v2267
    %2334 = vmatprep.subr.mxu0 %v2005
    %2335 = vmatpush1.msra.mxu0 %v2268
    %2336 = vmatprep.subr.mxu0 %v2007
    %2337 = vmatpush1.msra.mxu0 %v2269
    %2338 = vmatprep.subr.mxu0 %v2009
    %2339 = vmatpush1.msra.mxu0 %v2270
    %2340 = vmatprep.subr.mxu0 %v2011
    %2341 = vmatpush1.msra.mxu0 %v2271
    %2342 = vmatprep.subr.mxu0 %v2013
    %2343 = vmatpush1.msra.mxu0 %v2272
    %2344 = vmatprep.subr.mxu0 %v2015
    %2345 = vmatpush1.msra.mxu0 %v2273
    %2346 = vmatprep.subr.mxu0 %v2017
    %2347 = vmatpush1.msra.mxu0 %v2274
    %2348 = vmatprep.subr.mxu0 %v2029
    %2349 = vmatpush1.msra.mxu0 %v2275
    %2350 = vmatprep.subr.mxu0 %v2033
    %2351 = vmatpush1.msra.mxu0 %v2276
    %2352 = vmatprep.subr.mxu0 %v2037
    %2353 = vmatpush1.msra.mxu0 %v2277
    %2354 = vmatprep.subr.mxu0 %v2041
    %2355 = vmatpush1.msra.mxu0 %v2278
    %2356 = vmatprep.subr.mxu0 %v2045
    %2357 = vmatpush1.msra.mxu0 %v2279
    %2358 = vmatprep.subr.mxu0 %v2049
    %2359 = vmatpush1.msra.mxu0 %v2280
    %2360 = vmatprep.subr.mxu0 %v2053
    %2361 = vmatpush1.msra.mxu0 %v2281
    %2362 = vmatprep.subr.mxu0 %v2057
    %2363 = vmatpush1.msra.mxu0 %v2282
    %2364 = vmatprep.subr.mxu0 %v2061
    %2365 = vmatpush1.msra.mxu0 %v2283
    %2366 = vmatprep.subr.mxu0 %v2065
    %2367 = vmatpush1.msra.mxu0 %v2284
    %2368 = vmatprep.subr.mxu0 %v2069
    %2369 = vmatpush1.msra.mxu0 %v2285
    %2370 = vmatprep.subr.mxu0 %v2073
    %2371 = vmatpush1.msra.mxu0 %v2286
    %2372 = vmatprep.subr.mxu0 %v2077
    %2373 = vmatpush1.msra.mxu0 %v2287
    %2374 = vmatprep.subr.mxu0 %v2081
    %2375 = vmatpush1.msra.mxu0 %v2288
    %2376 = vmatprep.subr.mxu0 %v2085
    %2377 = vmatpush1.msra.mxu0 %v2289
    %2378 = vmatprep.subr.mxu0 %v2089
    %2379 = vmatpush1.msra.mxu0 %v2290
    %2380 = vmatprep.subr.mxu0 %v2093
    %2381 = vmatpush1.msra.mxu0 %v2291
    %2382 = vmatprep.subr.mxu0 %v2097
    %2383 = vmatpush1.msra.mxu0 %v2292
    %2384 = vmatprep.subr.mxu0 %v2101
    %2385 = vmatpush1.msra.mxu0 %v2293
    %2386 = vmatprep.subr.mxu0 %v2105
    %2387 = vmatpush1.msra.mxu0 %v2294
    %2388 = vmatprep.subr.mxu0 %v2109
    %2389 = vmatpush1.msra.mxu0 %v2295
    %2390 = vmatprep.subr.mxu0 %v2113
    %2391 = vmatpush1.msra.mxu0 %v2296
    %2392 = vmatprep.subr.mxu0 %v2117
    %2393 = vmatpush1.msra.mxu0 %v2297
    %2394 = vmatprep.subr.mxu0 %v2121
    %2395 = vmatpush1.msra.mxu0 %v2298
    %2396 = vmatprep.mubr.f32.mxu0 %v2308
    %2397 = vmatmul.mubr.f32.gmra.mrb[0].mxu0 %v2307
    %v2398 = vpop.f32.mrb[0].mxu0
    %v2399 = vadd.f32 0.0, %v2398
    %v2400 = vpop.f32.mrb[0].mxu0
    %v2401 = vadd.f32 0.0, %v2400
    %2402 = vmatprep.mubr.f32.mxu0 %v2311
    %2403 = vmatmul.mubr.f32.gmra.mrb[0].mxu0 %v2310
    %v2404 = vpop.f32.mrb[0].mxu0
    %v2405 = vadd.f32 0.0, %v2404
    %v2406 = vpop.f32.mrb[0].mxu0
    %v2407 = vadd.f32 0.0, %v2406
    %2408 = vmatprep.mubr.f32.mxu0 %v2314
    %2409 = vmatmul.mubr.f32.gmra.mrb[0].mxu0 %v2313
    %v2410 = vpop.f32.mrb[0].mxu0
    %v2411 = vadd.f32 0.0, %v2410
    %v2412 = vpop.f32.mrb[0].mxu0
    %v2413 = vadd.f32 0.0, %v2412
    %2414 = vmatprep.mubr.f32.mxu0 %v2317
    %2415 = vmatmul.mubr.f32.gmra.mrb[0].mxu0 %v2316
    %v2416 = vpop.f32.mrb[0].mxu0
    %v2417 = vadd.f32 0.0, %v2416
    %v2418 = vpop.f32.mrb[0].mxu0
    %v2419 = vadd.f32 0.0, %v2418
    %2420 = vdwg.mxu0
    %2421 = vmatprep.subr.mxu0 %v2125
    %2422 = vmatpush1.msra.mxu0 %v2299
    %2423 = vmatprep.subr.mxu0 %v2129
    %2424 = vmatpush1.msra.mxu0 %v2300
    %2425 = vmatprep.subr.mxu0 %v2133
    %2426 = vmatpush1.msra.mxu0 %v2301
    %2427 = vmatprep.subr.mxu0 %v2137
    %2428 = vmatpush1.msra.mxu0 %v2302
    %2429 = vmatprep.subr.mxu0 %v2141
    %2430 = vmatpush1.msra.mxu0 %v2303
    %2431 = vmatprep.subr.mxu0 %v2145
    %2432 = vmatpush1.msra.mxu0 %v2304
    %2433 = vmatprep.subr.mxu0 %v2149
    %2434 = vmatpush1.msra.mxu0 %v2305
    %2435 = vmatprep.subr.mxu0 %v2153
    %2436 = vmatpush1.msra.mxu0 %v2306
    %2437 = vmatprep.subr.mxu0 0.0
    %2438 = vmatpush1.msra.mxu0 0.0
    %2439 = vmatprep.subr.mxu0 0.0
    %2440 = vmatpush1.msra.mxu0 0.0
    %2441 = vmatprep.subr.mxu0 0.0
    %2442 = vmatpush1.msra.mxu0 0.0
    %2443 = vmatprep.subr.mxu0 0.0
    %2444 = vmatpush1.msra.mxu0 0.0
    %2445 = vmatprep.subr.mxu0 0.0
    %2446 = vmatpush1.msra.mxu0 0.0
    %2447 = vmatprep.subr.mxu0 0.0
    %2448 = vmatpush1.msra.mxu0 0.0
    %2449 = vmatprep.subr.mxu0 0.0
    %2450 = vmatpush1.msra.mxu0 0.0
    %2451 = vmatprep.subr.mxu0 0.0
    %2452 = vmatpush1.msra.mxu0 0.0
    %2453 = vmatprep.subr.mxu0 0.0
    %2454 = vmatpush1.msra.mxu0 0.0
    %2455 = vmatprep.subr.mxu0 0.0
    %2456 = vmatpush1.msra.mxu0 0.0
    %2457 = vmatprep.subr.mxu0 0.0
    %2458 = vmatpush1.msra.mxu0 0.0
    %2459 = vmatprep.subr.mxu0 0.0
    %2460 = vmatpush1.msra.mxu0 0.0
    %2461 = vmatprep.subr.mxu0 0.0
    %2462 = vmatpush1.msra.mxu0 0.0
    %2463 = vmatprep.subr.mxu0 0.0
    %2464 = vmatpush1.msra.mxu0 0.0
    %2465 = vmatprep.subr.mxu0 0.0
    %2466 = vmatpush1.msra.mxu0 0.0
    %2467 = vmatprep.subr.mxu0 0.0
    %2468 = vmatpush1.msra.mxu0 0.0
    %2469 = vmatprep.subr.mxu0 0.0
    %2470 = vmatpush1.msra.mxu0 0.0
    %2471 = vmatprep.subr.mxu0 0.0
    %2472 = vmatpush1.msra.mxu0 0.0
    %2473 = vmatprep.subr.mxu0 0.0
    %2474 = vmatpush1.msra.mxu0 0.0
    %2475 = vmatprep.subr.mxu0 0.0
    %2476 = vmatpush1.msra.mxu0 0.0
    %2477 = vmatprep.subr.mxu0 0.0
    %2478 = vmatpush1.msra.mxu0 0.0
    %2479 = vmatprep.subr.mxu0 0.0
    %2480 = vmatpush1.msra.mxu0 0.0
    %2481 = vmatprep.subr.mxu0 0.0
    %2482 = vmatpush1.msra.mxu0 0.0
    %2483 = vmatprep.subr.mxu0 0.0
    %2484 = vmatpush1.msra.mxu0 0.0
    %2485 = vmatprep.mubr.f32.mxu0 0.0
    %2486 = vmatmul.mubr.f32.gmra.mrb[0].mxu0 %v2321
    %v2487 = vpop.f32.mrb[0].mxu0
    %v2488 = vadd.f32 %v2399, %v2487
    %v2489 = vpop.f32.mrb[0].mxu0
    %v2490 = vadd.f32 %v2401, %v2489
    %2491 = vmatprep.mubr.f32.mxu0 0.0
    %2492 = vmatmul.mubr.f32.gmra.mrb[0].mxu0 %v2324
    %v2493 = vpop.f32.mrb[0].mxu0
    %v2494 = vadd.f32 %v2405, %v2493
    %v2495 = vpop.f32.mrb[0].mxu0
    %v2496 = vadd.f32 %v2407, %v2495
    %2497 = vmatprep.mubr.f32.mxu0 0.0
    %2498 = vmatmul.mubr.f32.gmra.mrb[0].mxu0 %v2327
    %v2499 = vpop.f32.mrb[0].mxu0
    %v2500 = vadd.f32 %v2411, %v2499
    %v2501 = vpop.f32.mrb[0].mxu0
    %v2502 = vadd.f32 %v2413, %v2501
    %2503 = vmatprep.mubr.f32.mxu0 0.0
    %2504 = vmatmul.mubr.f32.gmra.mrb[0].mxu0 %v2330
    %v2505 = vpop.f32.mrb[0].mxu0
    %v2506 = vadd.f32 %v2417, %v2505
    %v2507 = vpop.f32.mrb[0].mxu0
    %v2508 = vadd.f32 %v2419, %v2507
    %2509 = vdwg.mxu0
    %v2510 = vld [vmem:[%s2 + $0x78] sm:$0xff]
    %v2511 = vld [vmem:[%s2 + $0x80] sm:$0xff]
    %v2512 = vld [vmem:[%s2 + $0x88] sm:$0xff]
    %v2513 = vld [vmem:[%s2 + $0x90] sm:$0xff]
    %vm2514 = vcmask 64512
    %v2515 = vsel %vm2514, %v2490, 0.0
    %v2516 = vadd.f32 %v2488, %v2515
    %2517 = vadd.xlane.f32.xlu0 %v2516
    %v2518 = vpop.xlane.xlu0 %2517
    %v2519 = vsel %vm2514, %v2496, 0.0
    %v2520 = vadd.f32 %v2494, %v2519
    %2521 = vadd.xlane.f32.xlu0 %v2520
    %v2522 = vpop.xlane.xlu0 %2521
    %v2523 = vsel %vm2514, %v2502, 0.0
    %v2524 = vadd.f32 %v2500, %v2523
    %2525 = vadd.xlane.f32.xlu0 %v2524
    %v2526 = vpop.xlane.xlu0 %2525
    %v2527 = vsel %vm2514, %v2508, 0.0
    %v2528 = vadd.f32 %v2506, %v2527
    %2529 = vadd.xlane.f32.xlu0 %v2528
    %v2530 = vpop.xlane.xlu0 %2529
    %v2531 = vmul.f32 %v2518, 0.007352941
    %v2532 = vmul.f32 %v2522, 0.007352941
    %v2533 = vmul.f32 %v2526, 0.007352941
    %v2534 = vmul.f32 %v2530, 0.007352941
    %v2535 = vmul.f32 %v2488, %v2488
    %v2536 = vmul.f32 %v2490, %v2490
    %v2537 = vmul.f32 %v2494, %v2494
    %v2538 = vmul.f32 %v2496, %v2496
    %v2539 = vmul.f32 %v2500, %v2500
    %v2540 = vmul.f32 %v2502, %v2502
    %v2541 = vmul.f32 %v2506, %v2506
    %v2542 = vmul.f32 %v2508, %v2508
    %v2543 = vsel %vm2514, %v2536, 0.0
    %v2544 = vadd.f32 %v2535, %v2543
    %2545 = vadd.xlane.f32.xlu0 %v2544
    %v2546 = vpop.xlane.xlu0 %2545
    %v2547 = vsel %vm2514, %v2538, 0.0
    %v2548 = vadd.f32 %v2537, %v2547
    %2549 = vadd.xlane.f32.xlu0 %v2548
    %v2550 = vpop.xlane.xlu0 %2549
    %v2551 = vsel %vm2514, %v2540, 0.0
    %v2552 = vadd.f32 %v2539, %v2551
    %2553 = vadd.xlane.f32.xlu0 %v2552
    %v2554 = vpop.xlane.xlu0 %2553
    %v2555 = vsel %vm2514, %v2542, 0.0
    %v2556 = vadd.f32 %v2541, %v2555
    %2557 = vadd.xlane.f32.xlu0 %v2556
    %v2558 = vpop.xlane.xlu0 %2557
    %v2559 = vmul.f32 %v2546, 0.007352941
    %v2560 = vmul.f32 %v2550, 0.007352941
    %v2561 = vmul.f32 %v2554, 0.007352941
    %v2562 = vmul.f32 %v2558, 0.007352941
    %v2563 = vmul.f32 %v2531, %v2531
    %v2564 = vmul.f32 %v2532, %v2532
    %v2565 = vmul.f32 %v2533, %v2533
    %v2566 = vmul.f32 %v2534, %v2534
    %v2567 = vsub.f32 %v2559, %v2563
    %v2568 = vsub.f32 %v2560, %v2564
    %v2569 = vsub.f32 %v2561, %v2565
    %v2570 = vsub.f32 %v2562, %v2566
    %v2571 = vmax.f32 %v2567, 0.0
    %v2572 = vmax.f32 %v2568, 0.0
    %v2573 = vmax.f32 %v2569, 0.0
    %v2574 = vmax.f32 %v2570, 0.0
    %v2575 = vadd.f32 %v2571, 1e-05
    %v2576 = vadd.f32 %v2572, 1e-05
    %v2577 = vadd.f32 %v2573, 1e-05
    %v2578 = vadd.f32 %v2574, 1e-05
    %v2579 = vrsqrt.pop %v2575
    %v2580 = vrsqrt.pop %v2576
    %v2581 = vrsqrt.pop %v2577
    %v2582 = vrsqrt.pop %v2578
    %v2583 = vmul.f32 %v2510, %v2579
    %v2584 = vmul.f32 %v2511, %v2580
    %v2585 = vmul.f32 %v2512, %v2581
    %v2586 = vmul.f32 %v2513, %v2582
    %2588 = vset.pattern.permute.xlu0 0
    %2589 = vperm.xlu0 %2588, %v2583
    %v2590 = vpop.permute.xlu0 %2589
    %2593 = vset.pattern.permute.xlu0 0
    %2594 = vperm.xlu0 %2593, %v2584
    %v2595 = vpop.permute.xlu0 %2594
    %2598 = vset.pattern.permute.xlu0 0
    %2599 = vperm.xlu0 %2598, %v2585
    %v2600 = vpop.permute.xlu0 %2599
    %2603 = vset.pattern.permute.xlu0 0
    %2604 = vperm.xlu0 %2603, %v2586
    %v2605 = vpop.permute.xlu0 %2604
    %v2607 = vmul.f32 %v2488, %v2590
    %v2608 = vmul.f32 %v2490, %v2590
    %v2609 = vmul.f32 %v2494, %v2595
    %v2610 = vmul.f32 %v2496, %v2595
    %v2611 = vmul.f32 %v2500, %v2600
    %v2612 = vmul.f32 %v2502, %v2600
    %v2613 = vmul.f32 %v2506, %v2605
    %v2614 = vmul.f32 %v2508, %v2605
    %v2615 = vmul.f32 %v2531, %v2583
    %v2616 = vmul.f32 %v2532, %v2584
    %v2617 = vmul.f32 %v2533, %v2585
    %v2618 = vmul.f32 %v2534, %v2586
    %2623 = vrot.lane.b32.xlu0 %v2615, 1
    %v2624 = vpop.permute.xlu0 %2623
    %2625 = vrot.lane.b32.xlu0 %v2616, 1
    %v2626 = vpop.permute.xlu0 %2625
    %2627 = vrot.lane.b32.xlu0 %v2617, 1
    %v2628 = vpop.permute.xlu0 %2627
    %2629 = vrot.lane.b32.xlu0 %v2618, 1
    %v2630 = vpop.permute.xlu0 %2629
    %v2635 = vsub.f32 %v2510, %v2624
    %v2636 = vsub.f32 %v2511, %v2626
    %v2637 = vsub.f32 %v2512, %v2628
    %v2638 = vsub.f32 %v2513, %v2630
    %2640 = vset.pattern.permute.xlu0 1
    %2641 = vperm.xlu0 %2640, %v2635
    %v2642 = vpop.permute.xlu0 %2641
    %2645 = vset.pattern.permute.xlu0 1
    %2646 = vperm.xlu0 %2645, %v2636
    %v2647 = vpop.permute.xlu0 %2646
    %2650 = vset.pattern.permute.xlu0 1
    %2651 = vperm.xlu0 %2650, %v2637
    %v2652 = vpop.permute.xlu0 %2651
    %2655 = vset.pattern.permute.xlu0 1
    %2656 = vperm.xlu0 %2655, %v2638
    %v2657 = vpop.permute.xlu0 %2656
    %v2659 = vadd.f32 %v2607, %v2642
    %v2660 = vadd.f32 %v2608, %v2642
    %v2661 = vadd.f32 %v2609, %v2647
    %v2662 = vadd.f32 %v2610, %v2647
    %v2663 = vadd.f32 %v2611, %v2652
    %v2664 = vadd.f32 %v2612, %v2652
    %v2665 = vadd.f32 %v2613, %v2657
    %v2666 = vadd.f32 %v2614, %v2657
    %vm2667 = vcmp.gt.f32.partialorder %v2659, 0.0
    %vm2668 = vcmp.gt.f32.partialorder %v2660, 0.0
    %vm2669 = vcmp.gt.f32.partialorder %v2661, 0.0
    %vm2670 = vcmp.gt.f32.partialorder %v2662, 0.0
    %vm2671 = vcmp.gt.f32.partialorder %v2663, 0.0
    %vm2672 = vcmp.gt.f32.partialorder %v2664, 0.0
    %vm2673 = vcmp.gt.f32.partialorder %v2665, 0.0
    %vm2674 = vcmp.gt.f32.partialorder %v2666, 0.0
    %v2675 = vmul.f32 %v2659, 0.01
    %v2676 = vmul.f32 %v2660, 0.01
    %v2677 = vmul.f32 %v2661, 0.01
    %v2678 = vmul.f32 %v2662, 0.01
    %v2679 = vmul.f32 %v2663, 0.01
    %v2680 = vmul.f32 %v2664, 0.01
    %v2681 = vmul.f32 %v2665, 0.01
    %v2682 = vmul.f32 %v2666, 0.01
    %v2683 = vsel %vm2667, %v2659, %v2675
    %v2684 = vsel %vm2668, %v2660, %v2676
    %v2685 = vsel %vm2669, %v2661, %v2677
    %v2686 = vsel %vm2670, %v2662, %v2678
    %v2687 = vsel %vm2671, %v2663, %v2679
    %v2688 = vsel %vm2672, %v2664, %v2680
    %v2689 = vsel %vm2673, %v2665, %v2681
    %v2690 = vsel %vm2674, %v2666, %v2682
    %2695 = vrot.lane.b32.xlu0 %v2683, 127
    %v2696 = vpop.permute.xlu0 %2695
    %2697 = vrot.lane.b32.xlu0 %v2685, 127
    %v2698 = vpop.permute.xlu0 %2697
    %2699 = vrot.lane.b32.xlu0 %v2687, 127
    %v2700 = vpop.permute.xlu0 %2699
    %2701 = vrot.lane.b32.xlu0 %v2689, 127
    %v2702 = vpop.permute.xlu0 %2701
    %2707 = vrot.lane.b32.xlu0 %v2683, 126
    %v2708 = vpop.permute.xlu0 %2707
    %2709 = vrot.lane.b32.xlu0 %v2685, 126
    %v2710 = vpop.permute.xlu0 %2709
    %2711 = vrot.lane.b32.xlu0 %v2687, 126
    %v2712 = vpop.permute.xlu0 %2711
    %2713 = vrot.lane.b32.xlu0 %v2689, 126
    %v2714 = vpop.permute.xlu0 %2713
    %2719 = vrot.lane.b32.xlu0 %v2683, 125
    %v2720 = vpop.permute.xlu0 %2719
    %2721 = vrot.lane.b32.xlu0 %v2685, 125
    %v2722 = vpop.permute.xlu0 %2721
    %2723 = vrot.lane.b32.xlu0 %v2687, 125
    %v2724 = vpop.permute.xlu0 %2723
    %2725 = vrot.lane.b32.xlu0 %v2689, 125
    %v2726 = vpop.permute.xlu0 %2725
    %2731 = vrot.lane.b32.xlu0 %v2683, 124
    %v2732 = vpop.permute.xlu0 %2731
    %2733 = vrot.lane.b32.xlu0 %v2685, 124
    %v2734 = vpop.permute.xlu0 %2733
    %2735 = vrot.lane.b32.xlu0 %v2687, 124
    %v2736 = vpop.permute.xlu0 %2735
    %2737 = vrot.lane.b32.xlu0 %v2689, 124
    %v2738 = vpop.permute.xlu0 %2737
    %2747 = vrot.lane.b32.xlu0 %v2684, 127
    %v2748 = vpop.permute.xlu0 %2747
    %2749 = vrot.lane.b32.xlu0 %v2686, 127
    %v2750 = vpop.permute.xlu0 %2749
    %2751 = vrot.lane.b32.xlu0 %v2688, 127
    %v2752 = vpop.permute.xlu0 %2751
    %2753 = vrot.lane.b32.xlu0 %v2690, 127
    %v2754 = vpop.permute.xlu0 %2753
    %v2755 = vsel %vm105, %v2696, %v2748
    %v2756 = vsel %vm105, %v2698, %v2750
    %v2757 = vsel %vm105, %v2700, %v2752
    %v2758 = vsel %vm105, %v2702, %v2754
    %2759 = vrot.lane.b32.xlu0 %v2684, 126
    %v2760 = vpop.permute.xlu0 %2759
    %2761 = vrot.lane.b32.xlu0 %v2686, 126
    %v2762 = vpop.permute.xlu0 %2761
    %2763 = vrot.lane.b32.xlu0 %v2688, 126
    %v2764 = vpop.permute.xlu0 %2763
    %2765 = vrot.lane.b32.xlu0 %v2690, 126
    %v2766 = vpop.permute.xlu0 %2765
    %v2767 = vsel %vm111, %v2708, %v2760
    %v2768 = vsel %vm111, %v2710, %v2762
    %v2769 = vsel %vm111, %v2712, %v2764
    %v2770 = vsel %vm111, %v2714, %v2766
    %2771 = vrot.lane.b32.xlu0 %v2684, 125
    %v2772 = vpop.permute.xlu0 %2771
    %2773 = vrot.lane.b32.xlu0 %v2686, 125
    %v2774 = vpop.permute.xlu0 %2773
    %2775 = vrot.lane.b32.xlu0 %v2688, 125
    %v2776 = vpop.permute.xlu0 %2775
    %2777 = vrot.lane.b32.xlu0 %v2690, 125
    %v2778 = vpop.permute.xlu0 %2777
    %v2779 = vsel %vm117, %v2720, %v2772
    %v2780 = vsel %vm117, %v2722, %v2774
    %v2781 = vsel %vm117, %v2724, %v2776
    %v2782 = vsel %vm117, %v2726, %v2778
    %2783 = vrot.lane.b32.xlu0 %v2684, 124
    %v2784 = vpop.permute.xlu0 %2783
    %2785 = vrot.lane.b32.xlu0 %v2686, 124
    %v2786 = vpop.permute.xlu0 %2785
    %2787 = vrot.lane.b32.xlu0 %v2688, 124
    %v2788 = vpop.permute.xlu0 %2787
    %2789 = vrot.lane.b32.xlu0 %v2690, 124
    %v2790 = vpop.permute.xlu0 %2789
    %v2791 = vsel %vm123, %v2732, %v2784
    %v2792 = vsel %vm123, %v2734, %v2786
    %v2793 = vsel %vm123, %v2736, %v2788
    %v2794 = vsel %vm123, %v2738, %v2790
    %2795 = vrot.lane.b32.xlu0 %v2755, 124
    %v2796 = vpop.permute.xlu0 %2795
    %2797 = vrot.lane.b32.xlu0 %v2748, 124
    %v2798 = vpop.permute.xlu0 %2797
    %2799 = vrot.lane.b32.xlu0 %v2756, 124
    %v2800 = vpop.permute.xlu0 %2799
    %2801 = vrot.lane.b32.xlu0 %v2750, 124
    %v2802 = vpop.permute.xlu0 %2801
    %2803 = vrot.lane.b32.xlu0 %v2757, 124
    %v2804 = vpop.permute.xlu0 %2803
    %2805 = vrot.lane.b32.xlu0 %v2752, 124
    %v2806 = vpop.permute.xlu0 %2805
    %2807 = vrot.lane.b32.xlu0 %v2758, 124
    %v2808 = vpop.permute.xlu0 %2807
    %2809 = vrot.lane.b32.xlu0 %v2754, 124
    %v2810 = vpop.permute.xlu0 %2809
    %2811 = vrot.lane.b32.xlu0 %v2767, 124
    %v2812 = vpop.permute.xlu0 %2811
    %2813 = vrot.lane.b32.xlu0 %v2760, 124
    %v2814 = vpop.permute.xlu0 %2813
    %2815 = vrot.lane.b32.xlu0 %v2768, 124
    %v2816 = vpop.permute.xlu0 %2815
    %2817 = vrot.lane.b32.xlu0 %v2762, 124
    %v2818 = vpop.permute.xlu0 %2817
    %2819 = vrot.lane.b32.xlu0 %v2769, 124
    %v2820 = vpop.permute.xlu0 %2819
    %2821 = vrot.lane.b32.xlu0 %v2764, 124
    %v2822 = vpop.permute.xlu0 %2821
    %2823 = vrot.lane.b32.xlu0 %v2770, 124
    %v2824 = vpop.permute.xlu0 %2823
    %2825 = vrot.lane.b32.xlu0 %v2766, 124
    %v2826 = vpop.permute.xlu0 %2825
    %2827 = vrot.lane.b32.xlu0 %v2779, 124
    %v2828 = vpop.permute.xlu0 %2827
    %2829 = vrot.lane.b32.xlu0 %v2772, 124
    %v2830 = vpop.permute.xlu0 %2829
    %2831 = vrot.lane.b32.xlu0 %v2780, 124
    %v2832 = vpop.permute.xlu0 %2831
    %2833 = vrot.lane.b32.xlu0 %v2774, 124
    %v2834 = vpop.permute.xlu0 %2833
    %2835 = vrot.lane.b32.xlu0 %v2781, 124
    %v2836 = vpop.permute.xlu0 %2835
    %2837 = vrot.lane.b32.xlu0 %v2776, 124
    %v2838 = vpop.permute.xlu0 %2837
    %2839 = vrot.lane.b32.xlu0 %v2782, 124
    %v2840 = vpop.permute.xlu0 %2839
    %2841 = vrot.lane.b32.xlu0 %v2778, 124
    %v2842 = vpop.permute.xlu0 %2841
    %2843 = vrot.lane.b32.xlu0 %v2791, 124
    %v2844 = vpop.permute.xlu0 %2843
    %2845 = vrot.lane.b32.xlu0 %v2784, 124
    %v2846 = vpop.permute.xlu0 %2845
    %2847 = vrot.lane.b32.xlu0 %v2792, 124
    %v2848 = vpop.permute.xlu0 %2847
    %2849 = vrot.lane.b32.xlu0 %v2786, 124
    %v2850 = vpop.permute.xlu0 %2849
    %2851 = vrot.lane.b32.xlu0 %v2793, 124
    %v2852 = vpop.permute.xlu0 %2851
    %2853 = vrot.lane.b32.xlu0 %v2788, 124
    %v2854 = vpop.permute.xlu0 %2853
    %2855 = vrot.lane.b32.xlu0 %v2794, 124
    %v2856 = vpop.permute.xlu0 %2855
    %2857 = vrot.lane.b32.xlu0 %v2790, 124
    %v2858 = vpop.permute.xlu0 %2857
    %v2859 = vsel %vm123, %v2796, %v2798
    %v2860 = vsel %vm123, %v2800, %v2802
    %v2861 = vsel %vm123, %v2804, %v2806
    %v2862 = vsel %vm123, %v2808, %v2810
    %v2863 = vsel %vm123, %v2812, %v2814
    %v2864 = vsel %vm123, %v2816, %v2818
    %v2865 = vsel %vm123, %v2820, %v2822
    %v2866 = vsel %vm123, %v2824, %v2826
    %v2867 = vsel %vm123, %v2828, %v2830
    %v2868 = vsel %vm123, %v2832, %v2834
    %v2869 = vsel %vm123, %v2836, %v2838
    %v2870 = vsel %vm123, %v2840, %v2842
    %v2871 = vsel %vm123, %v2844, %v2846
    %v2872 = vsel %vm123, %v2848, %v2850
    %v2873 = vsel %vm123, %v2852, %v2854
    %v2874 = vsel %vm123, %v2856, %v2858
    %v2895 = vsel %vm2319, %v2683, %v2791
    %v2896 = vsel %vm2319, %v2685, %v2792
    %v2897 = vsel %vm2319, %v2687, %v2793
    %v2898 = vsel %vm2319, %v2689, %v2794
    %v2899 = vsel %vm2319, %v2696, %v2859
    %v2900 = vsel %vm2319, %v2698, %v2860
    %v2901 = vsel %vm2319, %v2700, %v2861
    %v2902 = vsel %vm2319, %v2702, %v2862
    %v2903 = vsel %vm2319, %v2708, %v2863
    %v2904 = vsel %vm2319, %v2710, %v2864
    %v2905 = vsel %vm2319, %v2712, %v2865
    %v2906 = vsel %vm2319, %v2714, %v2866
    %v2907 = vsel %vm2319, %v2720, %v2867
    %v2908 = vsel %vm2319, %v2722, %v2868
    %v2909 = vsel %vm2319, %v2724, %v2869
    %v2910 = vsel %vm2319, %v2726, %v2870
    %v2911 = vsel %vm2319, %v2732, %v2871
    %v2912 = vsel %vm2319, %v2734, %v2872
    %v2913 = vsel %vm2319, %v2736, %v2873
    %v2914 = vsel %vm2319, %v2738, %v2874
    %v2915 = vld [vmem:[#allocation2 + $0x1c8] sm:$0xff]
    %v2916 = vld [vmem:[#allocation2 + $0x1d0] sm:$0xff]
    %v2917 = vld [vmem:[#allocation2 + $0x1e0] sm:$0xff]
    %v2918 = vld [vmem:[#allocation2 + $0x1e8] sm:$0xff]
    %v2919 = vld [vmem:[#allocation2 + $0x1f8] sm:$0xff]
    %v2920 = vld [vmem:[#allocation2 + $0x200] sm:$0xff]
    %v2921 = vld [vmem:[#allocation2 + $0x210] sm:$0xff]
    %v2922 = vld [vmem:[#allocation2 + $0x218] sm:$0xff]
    %v2924 = vsel %vm562, %v2916, 0
    %v2927 = vsel %vm562, %v2918, 0
    %v2930 = vsel %vm562, %v2920, 0
    %v2933 = vsel %vm562, %v2922, 0
    %2935 = vmatprep.subr.mxu0 0.0
    %2936 = vmatpush1.msra.mxu0 %v2895
    %2937 = vmatprep.subr.mxu0 0.0
    %2938 = vmatpush1.msra.mxu0 %v2896
    %2939 = vmatprep.subr.mxu0 0.0
    %2940 = vmatpush1.msra.mxu0 %v2897
    %2941 = vmatprep.subr.mxu0 0.0
    %2942 = vmatpush1.msra.mxu0 %v2898
    %2943 = vmatprep.subr.mxu0 0.0
    %2944 = vmatpush1.msra.mxu0 %v2899
    %2945 = vmatprep.subr.mxu0 0.0
    %2946 = vmatpush1.msra.mxu0 %v2900
    %2947 = vmatprep.subr.mxu0 0.0
    %2948 = vmatpush1.msra.mxu0 %v2901
    %2949 = vmatprep.subr.mxu0 0.0
    %2950 = vmatpush1.msra.mxu0 %v2902
    %2951 = vmatprep.subr.mxu0 0.0
    %2952 = vmatpush1.msra.mxu0 %v2903
    %2953 = vmatprep.subr.mxu0 0.0
    %2954 = vmatpush1.msra.mxu0 %v2904
    %2955 = vmatprep.subr.mxu0 0.0
    %2956 = vmatpush1.msra.mxu0 %v2905
    %2957 = vmatprep.subr.mxu0 0.0
    %2958 = vmatpush1.msra.mxu0 %v2906
    %2959 = vmatprep.subr.mxu0 0.0
    %2960 = vmatpush1.msra.mxu0 %v2907
    %2961 = vmatprep.subr.mxu0 0.0
    %2962 = vmatpush1.msra.mxu0 %v2908
    %2963 = vmatprep.subr.mxu0 0.0
    %2964 = vmatpush1.msra.mxu0 %v2909
    %2965 = vmatprep.subr.mxu0 0.0
    %2966 = vmatpush1.msra.mxu0 %v2910
    %2967 = vmatprep.subr.mxu0 0.0
    %2968 = vmatpush1.msra.mxu0 %v2911
    %2969 = vmatprep.subr.mxu0 0.0
    %2970 = vmatpush1.msra.mxu0 %v2912
    %2971 = vmatprep.subr.mxu0 0.0
    %2972 = vmatpush1.msra.mxu0 %v2913
    %2973 = vmatprep.subr.mxu0 0.0
    %2974 = vmatpush1.msra.mxu0 %v2914
    %2975 = vmatprep.subr.mxu0 0.0
    %2976 = vmatpush1.msra.mxu0 0.0
    %2977 = vmatprep.subr.mxu0 0.0
    %2978 = vmatpush1.msra.mxu0 0.0
    %2979 = vmatprep.subr.mxu0 0.0
    %2980 = vmatpush1.msra.mxu0 0.0
    %2981 = vmatprep.subr.mxu0 0.0
    %2982 = vmatpush1.msra.mxu0 0.0
    %2983 = vmatprep.subr.mxu0 0.0
    %2984 = vmatpush1.msra.mxu0 0.0
    %2985 = vmatprep.subr.mxu0 0.0
    %2986 = vmatpush1.msra.mxu0 0.0
    %2987 = vmatprep.subr.mxu0 0.0
    %2988 = vmatpush1.msra.mxu0 0.0
    %2989 = vmatprep.subr.mxu0 0.0
    %2990 = vmatpush1.msra.mxu0 0.0
    %2991 = vmatprep.subr.mxu0 0.0
    %2992 = vmatpush1.msra.mxu0 0.0
    %2993 = vmatprep.subr.mxu0 0.0
    %2994 = vmatpush1.msra.mxu0 0.0
    %2995 = vmatprep.subr.mxu0 0.0
    %2996 = vmatpush1.msra.mxu0 0.0
    %2997 = vmatprep.subr.mxu0 0.0
    %2998 = vmatpush1.msra.mxu0 0.0
    %2999 = vmatprep.mubr.f32.mxu0 %v2924
    %3000 = vmatmul.mubr.f32.gmra.mrb[0].mxu0 %v2915
    %v3001 = vpop.f32.mrb[0].mxu0
    %v3002 = vadd.f32 0.0, %v3001
    %v3003 = vpop.f32.mrb[0].mxu0
    %3004 = vmatprep.mubr.f32.mxu0 %v2927
    %3005 = vmatmul.mubr.f32.gmra.mrb[0].mxu0 %v2917
    %v3006 = vpop.f32.mrb[0].mxu0
    %v3007 = vadd.f32 0.0, %v3006
    %v3008 = vpop.f32.mrb[0].mxu0
    %3009 = vmatprep.mubr.f32.mxu0 %v2930
    %3010 = vmatmul.mubr.f32.gmra.mrb[0].mxu0 %v2919
    %v3011 = vpop.f32.mrb[0].mxu0
    %v3012 = vadd.f32 0.0, %v3011
    %v3013 = vpop.f32.mrb[0].mxu0
    %3014 = vmatprep.mubr.f32.mxu0 %v2933
    %3015 = vmatmul.mubr.f32.gmra.mrb[0].mxu0 %v2921
    %v3016 = vpop.f32.mrb[0].mxu0
    %v3017 = vadd.f32 0.0, %v3016
    %v3018 = vpop.f32.mrb[0].mxu0
    %3019 = vdwg.mxu0
    %v3020 = vld [vmem:[%s2 + $0x98] sm:$0xff]
    %v3021 = vld [vmem:[%s2 + $0xa0] sm:$0xff]
    %v3022 = vld [vmem:[%s2 + $0xa8] sm:$0xff]
    %v3023 = vld [vmem:[%s2 + $0xb0] sm:$0xff]
    %3024 = vadd.xlane.f32.xlu0 %v3002
    %v3025 = vpop.xlane.xlu0 %3024
    %3026 = vadd.xlane.f32.xlu0 %v3007
    %v3027 = vpop.xlane.xlu0 %3026
    %3028 = vadd.xlane.f32.xlu0 %v3012
    %v3029 = vpop.xlane.xlu0 %3028
    %3030 = vadd.xlane.f32.xlu0 %v3017
    %v3031 = vpop.xlane.xlu0 %3030
    %v3032 = vmul.f32 %v3025, 0.0078125
    %v3033 = vmul.f32 %v3027, 0.0078125
    %v3034 = vmul.f32 %v3029, 0.0078125
    %v3035 = vmul.f32 %v3031, 0.0078125
    %v3036 = vmul.f32 %v3002, %v3002
    %v3037 = vmul.f32 %v3007, %v3007
    %v3038 = vmul.f32 %v3012, %v3012
    %v3039 = vmul.f32 %v3017, %v3017
    %3040 = vadd.xlane.f32.xlu0 %v3036
    %v3041 = vpop.xlane.xlu0 %3040
    %3042 = vadd.xlane.f32.xlu0 %v3037
    %v3043 = vpop.xlane.xlu0 %3042
    %3044 = vadd.xlane.f32.xlu0 %v3038
    %v3045 = vpop.xlane.xlu0 %3044
    %3046 = vadd.xlane.f32.xlu0 %v3039
    %v3047 = vpop.xlane.xlu0 %3046
    %v3048 = vmul.f32 %v3041, 0.0078125
    %v3049 = vmul.f32 %v3043, 0.0078125
    %v3050 = vmul.f32 %v3045, 0.0078125
    %v3051 = vmul.f32 %v3047, 0.0078125
    %v3052 = vmul.f32 %v3032, %v3032
    %v3053 = vmul.f32 %v3033, %v3033
    %v3054 = vmul.f32 %v3034, %v3034
    %v3055 = vmul.f32 %v3035, %v3035
    %v3056 = vsub.f32 %v3048, %v3052
    %v3057 = vsub.f32 %v3049, %v3053
    %v3058 = vsub.f32 %v3050, %v3054
    %v3059 = vsub.f32 %v3051, %v3055
    %v3060 = vmax.f32 %v3056, 0.0
    %v3061 = vmax.f32 %v3057, 0.0
    %v3062 = vmax.f32 %v3058, 0.0
    %v3063 = vmax.f32 %v3059, 0.0
    %v3064 = vadd.f32 %v3060, 1e-05
    %v3065 = vadd.f32 %v3061, 1e-05
    %v3066 = vadd.f32 %v3062, 1e-05
    %v3067 = vadd.f32 %v3063, 1e-05
    %v3068 = vrsqrt.pop %v3064
    %v3069 = vrsqrt.pop %v3065
    %v3070 = vrsqrt.pop %v3066
    %v3071 = vrsqrt.pop %v3067
    %v3072 = vmul.f32 %v3020, %v3068
    %v3073 = vmul.f32 %v3021, %v3069
    %v3074 = vmul.f32 %v3022, %v3070
    %v3075 = vmul.f32 %v3023, %v3071
    %3077 = vset.pattern.permute.xlu0 0
    %3078 = vperm.xlu0 %3077, %v3072
    %v3079 = vpop.permute.xlu0 %3078
    %3082 = vset.pattern.permute.xlu0 0
    %3083 = vperm.xlu0 %3082, %v3073
    %v3084 = vpop.permute.xlu0 %3083
    %3087 = vset.pattern.permute.xlu0 0
    %3088 = vperm.xlu0 %3087, %v3074
    %v3089 = vpop.permute.xlu0 %3088
    %3092 = vset.pattern.permute.xlu0 0
    %3093 = vperm.xlu0 %3092, %v3075
    %v3094 = vpop.permute.xlu0 %3093
    %v3096 = vmul.f32 %v3002, %v3079
    %v3097 = vmul.f32 %v3007, %v3084
    %v3098 = vmul.f32 %v3012, %v3089
    %v3099 = vmul.f32 %v3017, %v3094
    %v3100 = vmul.f32 %v3032, %v3072
    %v3101 = vmul.f32 %v3033, %v3073
    %v3102 = vmul.f32 %v3034, %v3074
    %v3103 = vmul.f32 %v3035, %v3075
    %3108 = vrot.lane.b32.xlu0 %v3100, 1
    %v3109 = vpop.permute.xlu0 %3108
    %3110 = vrot.lane.b32.xlu0 %v3101, 1
    %v3111 = vpop.permute.xlu0 %3110
    %3112 = vrot.lane.b32.xlu0 %v3102, 1
    %v3113 = vpop.permute.xlu0 %3112
    %3114 = vrot.lane.b32.xlu0 %v3103, 1
    %v3115 = vpop.permute.xlu0 %3114
    %v3120 = vsub.f32 %v3020, %v3109
    %v3121 = vsub.f32 %v3021, %v3111
    %v3122 = vsub.f32 %v3022, %v3113
    %v3123 = vsub.f32 %v3023, %v3115
    %3125 = vset.pattern.permute.xlu0 1
    %3126 = vperm.xlu0 %3125, %v3120
    %v3127 = vpop.permute.xlu0 %3126
    %3130 = vset.pattern.permute.xlu0 1
    %3131 = vperm.xlu0 %3130, %v3121
    %v3132 = vpop.permute.xlu0 %3131
    %3135 = vset.pattern.permute.xlu0 1
    %3136 = vperm.xlu0 %3135, %v3122
    %v3137 = vpop.permute.xlu0 %3136
    %3140 = vset.pattern.permute.xlu0 1
    %3141 = vperm.xlu0 %3140, %v3123
    %v3142 = vpop.permute.xlu0 %3141
    %v3144 = vadd.f32 %v3096, %v3127
    %v3145 = vadd.f32 %v3097, %v3132
    %v3146 = vadd.f32 %v3098, %v3137
    %v3147 = vadd.f32 %v3099, %v3142
    %vm3148 = vcmp.gt.f32.partialorder %v3144, 0.0
    %vm3149 = vcmp.gt.f32.partialorder %v3145, 0.0
    %vm3150 = vcmp.gt.f32.partialorder %v3146, 0.0
    %vm3151 = vcmp.gt.f32.partialorder %v3147, 0.0
    %v3152 = vmul.f32 %v3144, 0.01
    %v3153 = vmul.f32 %v3145, 0.01
    %v3154 = vmul.f32 %v3146, 0.01
    %v3155 = vmul.f32 %v3147, 0.01
    %v3156 = vsel %vm3148, %v3144, %v3152
    %v3157 = vsel %vm3149, %v3145, %v3153
    %v3158 = vsel %vm3150, %v3146, %v3154
    %v3159 = vsel %vm3151, %v3147, %v3155
    %v3160 = vld [vmem:[#allocation2 + $0x228] ss:$0 sm:$0xff]
    %v3161 = vld [vmem:[%s2 + $0xb8] sm:$0x1]
    %3163 = vset.pattern.permute.xlu0 2
    %3164 = vperm.xlu0 %3163, %v3161
    %v3165 = vpop.permute.xlu0 %3164
    %v3168 = vsel %vm562, %v3160, 0
    %3170 = vmatprep.subr.mxu0 0.0
    %3171 = vmatpush1.msra.mxu0 %v3156
    %3172 = vmatprep.subr.mxu0 0.0
    %3173 = vmatpush1.msra.mxu0 %v3157
    %3174 = vmatprep.subr.mxu0 0.0
    %3175 = vmatpush1.msra.mxu0 %v3158
    %3176 = vmatprep.subr.mxu0 0.0
    %3177 = vmatpush1.msra.mxu0 %v3159
    %3178 = vmatprep.subr.mxu0 0.0
    %3179 = vmatpush1.msra.mxu0 0.0
    %3180 = vmatprep.subr.mxu0 0.0
    %3181 = vmatpush1.msra.mxu0 0.0
    %3182 = vmatprep.subr.mxu0 0.0
    %3183 = vmatpush1.msra.mxu0 0.0
    %3184 = vmatprep.subr.mxu0 0.0
    %3185 = vmatpush1.msra.mxu0 0.0
    %3186 = vmatprep.subr.mxu0 0.0
    %3187 = vmatpush1.msra.mxu0 0.0
    %3188 = vmatprep.subr.mxu0 0.0
    %3189 = vmatpush1.msra.mxu0 0.0
    %3190 = vmatprep.subr.mxu0 0.0
    %3191 = vmatpush1.msra.mxu0 0.0
    %3192 = vmatprep.subr.mxu0 0.0
    %3193 = vmatpush1.msra.mxu0 0.0
    %3194 = vmatprep.subr.mxu0 0.0
    %3195 = vmatpush1.msra.mxu0 0.0
    %3196 = vmatprep.subr.mxu0 0.0
    %3197 = vmatpush1.msra.mxu0 0.0
    %3198 = vmatprep.subr.mxu0 0.0
    %3199 = vmatpush1.msra.mxu0 0.0
    %3200 = vmatprep.subr.mxu0 0.0
    %3201 = vmatpush1.msra.mxu0 0.0
    %3202 = vmatprep.subr.mxu0 0.0
    %3203 = vmatpush1.msra.mxu0 0.0
    %3204 = vmatprep.subr.mxu0 0.0
    %3205 = vmatpush1.msra.mxu0 0.0
    %3206 = vmatprep.subr.mxu0 0.0
    %3207 = vmatpush1.msra.mxu0 0.0
    %3208 = vmatprep.subr.mxu0 0.0
    %3209 = vmatpush1.msra.mxu0 0.0
    %3210 = vmatprep.subr.mxu0 0.0
    %3211 = vmatpush1.msra.mxu0 0.0
    %3212 = vmatprep.subr.mxu0 0.0
    %3213 = vmatpush1.msra.mxu0 0.0
    %3214 = vmatprep.subr.mxu0 0.0
    %3215 = vmatpush1.msra.mxu0 0.0
    %3216 = vmatprep.subr.mxu0 0.0
    %3217 = vmatpush1.msra.mxu0 0.0
    %3218 = vmatprep.subr.mxu0 0.0
    %3219 = vmatpush1.msra.mxu0 0.0
    %3220 = vmatprep.subr.mxu0 0.0
    %3221 = vmatpush1.msra.mxu0 0.0
    %3222 = vmatprep.subr.mxu0 0.0
    %3223 = vmatpush1.msra.mxu0 0.0
    %3224 = vmatprep.subr.mxu0 0.0
    %3225 = vmatpush1.msra.mxu0 0.0
    %3226 = vmatprep.subr.mxu0 0.0
    %3227 = vmatpush1.msra.mxu0 0.0
    %3228 = vmatprep.subr.mxu0 0.0
    %3229 = vmatpush1.msra.mxu0 0.0
    %3230 = vmatprep.subr.mxu0 0.0
    %3231 = vmatpush1.msra.mxu0 0.0
    %3232 = vmatprep.subr.mxu0 0.0
    %3233 = vmatpush1.msra.mxu0 0.0
    %3234 = vmatprep.mubr.f32.mxu0 0.0
    %3235 = vmatmul.mubr.f32.gmra.mrb[0].mxu0 %v3168
    %v3236 = vpop.f32.mrb[0].mxu0
    %v3237 = vadd.f32 %v3165, %v3236
    %v3238 = vpop.f32.mrb[0].mxu0
    %3239 = vdwg.mxu0
    %vm3240 = vcmp.gt.f32.partialorder %v3237, 0.0
    %v3241 = vmul.f32 %v3237, 0.01
    %v3242 = vsel %vm3240, %v3237, %v3241
    %v3244 = vrot.slane %v3242, 7
    %3245 = vrot.lane.b32.xlu0 %v3244, 64
    %v3246 = vpop.permute.xlu0 %3245
    %vm3248 = vcmask 1040384
    %v3249 = vsel %vm3248, %v3242, %v3246
    %v3250 = vld [vmem:[%s3] sm:$0xff]
    %v3251 = vld [vmem:[%s3 + $0x8] sm:$0xff]
    %v3252 = vld [vmem:[%s3 + $0x10] sm:$0xff]
    %v3253 = vld [vmem:[%s3 + $0x18] sm:$0xff]
    %v3254 = vld [vmem:[%s3 + $0x20] sm:$0xff]
    %v3255 = vld [vmem:[%s3 + $0x28] sm:$0xff]
    %v3256 = vld [vmem:[%s3 + $0x30] sm:$0xff]
    %v3257 = vld [vmem:[%s3 + $0x38] sm:$0xff]
    %v3258 = vld [vmem:[%s3 + $0x40] sm:$0x1]
    %v3259 = vlaneseq
    %v3260 = vshrl.u32 %v3259, 7
    %v3261 = vsub.s32 0, %v3260
    %v3262 = vrot.slane %v3258, %v3261
    %v3264 = vsel %vm2319, %v3249, 0
    %3266 = vmatprep.subr.mxu0 0.0
    %3267 = vmatpush1.msra.mxu0 %v3250
    %3268 = vmatprep.subr.mxu0 0.0
    %3269 = vmatpush1.msra.mxu0 %v3251
    %3270 = vmatprep.subr.mxu0 0.0
    %3271 = vmatpush1.msra.mxu0 %v3252
    %3272 = vmatprep.subr.mxu0 0.0
    %3273 = vmatpush1.msra.mxu0 %v3253
    %3274 = vmatprep.subr.mxu0 0.0
    %3275 = vmatpush1.msra.mxu0 %v3254
    %3276 = vmatprep.subr.mxu0 0.0
    %3277 = vmatpush1.msra.mxu0 %v3255
    %3278 = vmatprep.subr.mxu0 0.0
    %3279 = vmatpush1.msra.mxu0 %v3256
    %3280 = vmatprep.subr.mxu0 0.0
    %3281 = vmatpush1.msra.mxu0 %v3257
    %3282 = vmatprep.subr.mxu0 0.0
    %3283 = vmatpush1.msra.mxu0 0.0
    %3284 = vmatprep.subr.mxu0 0.0
    %3285 = vmatpush1.msra.mxu0 0.0
    %3286 = vmatprep.subr.mxu0 0.0
    %3287 = vmatpush1.msra.mxu0 0.0
    %3288 = vmatprep.subr.mxu0 0.0
    %3289 = vmatpush1.msra.mxu0 0.0
    %3290 = vmatprep.subr.mxu0 0.0
    %3291 = vmatpush1.msra.mxu0 0.0
    %3292 = vmatprep.subr.mxu0 0.0
    %3293 = vmatpush1.msra.mxu0 0.0
    %3294 = vmatprep.subr.mxu0 0.0
    %3295 = vmatpush1.msra.mxu0 0.0
    %3296 = vmatprep.subr.mxu0 0.0
    %3297 = vmatpush1.msra.mxu0 0.0
    %3298 = vmatprep.subr.mxu0 0.0
    %3299 = vmatpush1.msra.mxu0 0.0
    %3300 = vmatprep.subr.mxu0 0.0
    %3301 = vmatpush1.msra.mxu0 0.0
    %3302 = vmatprep.subr.mxu0 0.0
    %3303 = vmatpush1.msra.mxu0 0.0
    %3304 = vmatprep.subr.mxu0 0.0
    %3305 = vmatpush1.msra.mxu0 0.0
    %3306 = vmatprep.subr.mxu0 0.0
    %3307 = vmatpush1.msra.mxu0 0.0
    %3308 = vmatprep.subr.mxu0 0.0
    %3309 = vmatpush1.msra.mxu0 0.0
    %3310 = vmatprep.subr.mxu0 0.0
    %3311 = vmatpush1.msra.mxu0 0.0
    %3312 = vmatprep.subr.mxu0 0.0
    %3313 = vmatpush1.msra.mxu0 0.0
    %3314 = vmatprep.subr.mxu0 0.0
    %3315 = vmatpush1.msra.mxu0 0.0
    %3316 = vmatprep.subr.mxu0 0.0
    %3317 = vmatpush1.msra.mxu0 0.0
    %3318 = vmatprep.subr.mxu0 0.0
    %3319 = vmatpush1.msra.mxu0 0.0
    %3320 = vmatprep.subr.mxu0 0.0
    %3321 = vmatpush1.msra.mxu0 0.0
    %3322 = vmatprep.subr.mxu0 0.0
    %3323 = vmatpush1.msra.mxu0 0.0
    %3324 = vmatprep.subr.mxu0 0.0
    %3325 = vmatpush1.msra.mxu0 0.0
    %3326 = vmatprep.subr.mxu0 0.0
    %3327 = vmatpush1.msra.mxu0 0.0
    %3328 = vmatprep.subr.mxu0 0.0
    %3329 = vmatpush1.msra.mxu0 0.0
    %3330 = vmatprep.mubr.f32.mxu0 0.0
    %3331 = vmatmul.mubr.f32.gmra.mrb[0].mxu0 %v3264
    %v3332 = vpop.f32.mrb[0].mxu0
    %v3333 = vadd.f32 %v3262, %v3332
    %v3334 = vpop.f32.mrb[0].mxu0
    %3335 = vdwg.mxu0
    %v3336 = vlaneseq
    %v3337 = vand.u32 %v3336, 127
    %v3338 = vmax.f32 %v3333, 0.0
    %v3339 = vand.u32 2147483647, %v3333
    %v3340 = vsub.f32 0.0, %v3339
    %v3341 = vmul.f32 %v3340, 1.442695
    %v3342 = vpow.pop %v3341
    %v3343 = vadd.f32 %v3342, 1.0
    %v3344 = vlog2.pop %v3343
    %v3345 = vmul.f32 %v3344, 0.6931472
    %v3346 = vadd.f32 %v3338, %v3345
    %vm3347 = vcmp.lt.s32.totalorder %v3337, 8
    %v3348 = vsel %vm3347, %v3333, %v3346
    %vm3349 = vcmask 123904
    %3350 = vst.msk [vmem:[#allocation5] sm:$0x3] %vm3349, %v3348
    // Predicated region
    $region22: #{tpu_custom_call.1} parent=1 // pred_check
      _
    $region23: #{tpu_custom_call.1} parent=1 // pred_check_branch
      %3352 = sbr.rel (0) target = $region25
    $region24: #{tpu_custom_call.1} parent=1 // pred_region
      %s3354 = ssub.s32 32, 32
      %3355 = vsyncadd [#allocation4], %s3354
      %s3357 = sshll.u32 [#allocation5], 4
      %s3358 = int_to_ptr.vmem [resolvable:$true] %s3357
      %3360 = dma.vmem_to_hbm [thread:$0]  %s3358, 32, %s4, [#allocation4]
    $region25: #{tpu_custom_call.1} parent=1 // pred_fallthru
      _
    // Predicated region
    $region26: #{tpu_custom_call.1} parent=1 // pred_check
      _
    $region27: #{tpu_custom_call.1} parent=1 // pred_check_branch
      %3362 = sbr.rel (0) target = $region29
    $region28: #{tpu_custom_call.1} parent=1 // pred_region
      %3363 = dma.done [#allocation4], 32
    $region29: #{tpu_custom_call.1} parent=1 // pred_fallthru
      _
    %3364 = vsyncpa [#allocation3], 1
    %3365 = vsyncpa [#allocation4], 1

</llo_original>
